<compile_context>
chip_gen: v5e
topology: v5e:2x2
jax: 0.10.0
libtpu: 0.0.40
codegen_flags: <defaults>
</compile_context>

<pallas_src>
import functools

import jax
import jax.numpy as jnp
from jax.experimental import pallas as pl
from jax.experimental.pallas import tpu as pltpu


def _round_up(x, m):
    return ((x + m - 1) // m) * m


@functools.lru_cache(maxsize=1)
def _num_tensorcores():
    """Dual-TensorCore chips (v4 megacore, v7x) benefit from >=2 grid tiles."""
    try:
        kind = jax.devices()[0].device_kind.lower()
    except Exception:
        return 1
    return 2 if any(t in kind for t in ("v4", "v7", "7x")) else 1


# ----------------------------------------------------------------------------
# Pallas kernel 1: (im2col patches) @ W + b, optional LeakyReLU  -> conv layers
# ----------------------------------------------------------------------------
def _matmul_bias_act_kernel(x_ref, w_ref, b_ref, o_ref, *, negative_slope):
    acc = jnp.dot(x_ref[...], w_ref[...],                    # bf16 x bf16 on MXU
                  preferred_element_type=jnp.float32)        # f32 accumulation
    acc = acc + b_ref[...]                                   # (1, Npad) broadcast
    if negative_slope is not None:
        acc = jnp.where(acc >= 0.0, acc, negative_slope * acc)
    o_ref[...] = acc.astype(o_ref.dtype)                     # bf16 lane-dense store


def _choose_tm(M, K, Npad, num_tc):
    """Pick an M-tile from a VMEM budget (double-buffered x/out, resident w)."""
    budget = 24 * 1024 * 1024                     # stay under 32 MiB scoped VMEM
    def fits(tm):
        x_bytes = 2 * tm * K * 2                  # bf16 input, double-buffered
        w_bytes = 2 * K * Npad * 2                # bf16 weight (pipeline keeps 2)
        o_bytes = 2 * tm * Npad * 2               # bf16 output, double-buffered
        b_bytes = 2 * Npad * 4
        return x_bytes + w_bytes + o_bytes + b_bytes <= budget
    if M <= 256:                                  # tiny problem
        tm = _round_up(M, 16)
        if num_tc >= 2 and M >= 128 and M % 32 == 0:
            tm = M // 2                           # one tile per TensorCore
        return tm if fits(tm) else 128
    # Force >=2 tiles only when there are 2 TensorCores to feed; single-TC chips
    # (v5e/v6e) take one largest tile to amortize per-grid-step overhead.
    cap = (M + 1) // 2 if num_tc >= 2 else M
    tm = 4096
    while tm >= 16:
        if tm <= cap and fits(tm):
            return tm
        tm //= 2
    return 16                                     # keep a multiple of 16 (bf16)


def matmul_bias_act(x, w, b, negative_slope=None):
    """x: (M, K) bf16, w: (K, N) bf16, b: (N,) f32  ->  (M, N) bf16 (f32 accum)."""
    M, K = x.shape
    N = w.shape[1]
    Npad = _round_up(N, 128)                      # lane-dense output stores
    if Npad != N:
        w = jnp.pad(w, ((0, 0), (0, Npad - N)))
        b = jnp.pad(b, (0, Npad - N))
    TM = _choose_tm(M, K, Npad, _num_tensorcores())
    Mpad = _round_up(M, TM)                       # remainder handling (no assert)
    if Mpad != M:
        x = jnp.pad(x, ((0, Mpad - M), (0, 0)))

    kernel = functools.partial(_matmul_bias_act_kernel,
                               negative_slope=negative_slope)
    # TODO(synk): single-buffer the grid-invariant weight/bias blocks
    # (pipeline_mode=pl.Buffered(1)) if the model is scaled up and VMEM gets tight.
    out = pl.pallas_call(
        kernel,
        out_shape=jax.ShapeDtypeStruct((Mpad, Npad), jnp.bfloat16),
        grid_spec=pltpu.PrefetchScalarGridSpec(
            num_scalar_prefetch=0,
            grid=(Mpad // TM,),
            in_specs=[
                pl.BlockSpec((TM, K), lambda i: (i, 0)),
                pl.BlockSpec((K, Npad), lambda i: (0, 0)),
                pl.BlockSpec((1, Npad), lambda i: (0, 0)),
            ],
            out_specs=pl.BlockSpec((TM, Npad), lambda i: (i, 0)),
        ),
        compiler_params=pltpu.CompilerParams(
            dimension_semantics=("parallel",),
            vmem_limit_bytes=32 * 1024 * 1024),
    )(x.astype(jnp.bfloat16), w.astype(jnp.bfloat16),
      b.reshape(1, Npad).astype(jnp.float32))

    if Mpad != M or Npad != N:
        out = out[:M, :N]
    return out


# ----------------------------------------------------------------------------
# Pallas kernel 2: fused SelfAttention (fused QKV 1x1 conv + softmax + bmm)
# ----------------------------------------------------------------------------
def _self_attention_kernel(x_ref, w_ref, b_ref, gamma_ref, out_ref, att_ref, *, c8):
    xb = x_ref[0]                                 # (N, C) tokens, bf16
    c = xb.shape[-1]
    # One fused, lane-dense projection pass: [q | k | v | zero-pad] = x @ Wqkv + b
    qkv = jnp.dot(xb, w_ref[...], preferred_element_type=jnp.float32) + b_ref[...]
    q = qkv[:, :c8]                               # (N, C/8)
    k = qkv[:, c8:2 * c8]                         # (N, C/8)
    v = qkv[:, 2 * c8:2 * c8 + c]                 # (N, C)
    # s_T[j, i] = <k_j, q_i> = S[i, j]  (scores computed already transposed)
    s_t = jax.lax.dot_general(k.astype(jnp.bfloat16), q.astype(jnp.bfloat16),
                              dimension_numbers=(((1,), (1,)), ((), ())),
                              preferred_element_type=jnp.float32)   # (N, N)
    # Reference softmax(dim=-2) over i  ==  softmax over the last (lane) axis here.
    m = jnp.max(s_t, axis=-1, keepdims=True)
    e = jnp.exp(s_t - m)
    a = e / jnp.sum(e, axis=-1, keepdims=True)    # a[j, i] == attention_map[j, i]
    # o[j, c] = sum_i a[j, i] * v[i, c]  (plain row-major contraction)
    o = jnp.dot(a.astype(jnp.bfloat16), v.astype(jnp.bfloat16),
                preferred_element_type=jnp.float32)                 # (N, C)
    gamma = gamma_ref[0]                          # scalar from SMEM
    out_ref[0] = (xb.astype(jnp.float32) + gamma * o).astype(out_ref.dtype)
    att_ref[0] = a                                # attention_map, no transpose


def self_attention(x_tokens, w_qkv, b_qkv, gamma, c8):
    """x_tokens: (B, N, C) bf16.  Returns (out (B,N,C) bf16, attention_map (B,N,N) f32)."""
    B, N, C = x_tokens.shape
    Dpad = w_qkv.shape[1]
    kernel = functools.partial(_self_attention_kernel, c8=c8)
    return pl.pallas_call(
        kernel,
        out_shape=(jax.ShapeDtypeStruct((B, N, C), jnp.bfloat16),
                   jax.ShapeDtypeStruct((B, N, N), jnp.float32)),
        grid_spec=pltpu.PrefetchScalarGridSpec(
            num_scalar_prefetch=0,
            grid=(B,),                            # B=2 keeps both v7x TCs busy
            in_specs=[
                pl.BlockSpec((1, N, C), lambda b: (b, 0, 0)),
                pl.BlockSpec((C, Dpad), lambda b: (0, 0)),
                pl.BlockSpec((1, Dpad), lambda b: (0, 0)),
                pl.BlockSpec(memory_space=pltpu.MemorySpace.SMEM),
            ],
            out_specs=[
                pl.BlockSpec((1, N, C), lambda b: (b, 0, 0)),
                pl.BlockSpec((1, N, N), lambda b: (b, 0, 0)),
            ],
        ),
        compiler_params=pltpu.CompilerParams(
            dimension_semantics=("parallel",)),
    )(x_tokens.astype(jnp.bfloat16), w_qkv, b_qkv.reshape(1, Dpad), gamma)


# ----------------------------------------------------------------------------
# Plain-JAX glue: im2col patch extraction, last conv, spectral norm, params
# ----------------------------------------------------------------------------
def extract_patches(x_nhwc, k, stride, pad):
    """x: (B,H,W,C) -> (B,Ho,Wo,C*k*k); feature order (c, dy, dx) (channel slowest)."""
    # TODO(synk): extract patches inside the Pallas kernel (halo-reading BlockSpec)
    # to avoid materializing the im2col tensor in HBM entirely.
    return jax.lax.conv_general_dilated_patches(
        x_nhwc,
        filter_shape=(k, k),
        window_strides=(stride, stride),
        padding=((pad, pad), (pad, pad)),
        dimension_numbers=("NHWC", "HWIO", "NHWC"),
    )


def conv_layer(x_nhwc, w_mat, b, k, stride, pad, negative_slope):
    """w_mat: (Cin*k*k, Cout) bf16 matmul-layout weight (patch order c,dy,dx)."""
    patches = extract_patches(x_nhwc.astype(jnp.bfloat16), k, stride, pad)
    B, Ho, Wo, K = patches.shape
    Cout = w_mat.shape[1]
    out = matmul_bias_act(patches.reshape(B * Ho * Wo, K), w_mat, b,
                          negative_slope=negative_slope)
    return out.reshape(B, Ho, Wo, Cout)


def last_conv(x_nhwc, w_pt, b):
    """4x4 valid conv, stride 1, Cout=1: plain JAX (a 1-lane MXU output in a
    pallas_call launch would be pure overhead)."""
    k = w_pt.shape[2]
    patches = extract_patches(x_nhwc.astype(jnp.float32), k, stride=1, pad=0)
    B, Ho, Wo, K = patches.shape
    wm = jnp.transpose(w_pt, (1, 2, 3, 0)).reshape(K, w_pt.shape[0])
    out = patches.reshape(B * Ho * Wo, K) @ wm + b
    return out.reshape(B, Ho, Wo, w_pt.shape[0])


def spectral_normalize(w, key, n_iter=30):
    """Approximate nn.utils.spectral_norm: divide by largest singular value."""
    # TODO(synk): PyTorch keeps a persistent `u` and does 1 power iteration per
    # forward; this converged eval-time estimate is equivalent, not bit-exact.
    w_mat = w.reshape(w.shape[0], -1)
    u0 = jax.random.normal(key, (w_mat.shape[0],), jnp.float32)
    u0 = u0 / (jnp.linalg.norm(u0) + 1e-12)

    def body(_, u):
        v = w_mat.T @ u
        v = v / (jnp.linalg.norm(v) + 1e-12)
        u = w_mat @ v
        return u / (jnp.linalg.norm(u) + 1e-12)

    u = jax.lax.fori_loop(0, n_iter, body, u0)
    v = w_mat.T @ u
    v = v / (jnp.linalg.norm(v) + 1e-12)
    sigma = u @ (w_mat @ v)
    return w / sigma


def init_params(key, image_size, image_channels):
    c1, c2, c3, c4 = image_size, image_size * 2, image_size * 4, image_size * 8
    keys = jax.random.split(key, 32)
    ki = iter(keys)

    def conv_w(shape):
        fan_in = shape[1] * shape[2] * shape[3]
        return (jax.random.normal(next(ki), shape, jnp.float32)
                * jnp.sqrt(2.0 / fan_in))

    def bias(n):
        return jax.random.normal(next(ki), (n,), jnp.float32) * 0.01

    def sn(w):
        return spectral_normalize(w, next(ki))

    def to_matmul_bf16(w_pt):          # (Cout,Cin,k,k) -> (Cin*k*k, Cout), (c,dy,dx)
        k = w_pt.shape[2]
        cout, cin = w_pt.shape[0], w_pt.shape[1]
        return (jnp.transpose(w_pt, (1, 2, 3, 0))
                .reshape(cin * k * k, cout).astype(jnp.bfloat16))

    p = {}
    p["w1m"] = to_matmul_bf16(sn(conv_w((c1, image_channels, 4, 4)))); p["b1"] = bias(c1)
    p["w2m"] = to_matmul_bf16(sn(conv_w((c2, c1, 4, 4))));             p["b2"] = bias(c2)
    p["w3m"] = to_matmul_bf16(sn(conv_w((c3, c2, 4, 4))));             p["b3"] = bias(c3)
    p["w4m"] = to_matmul_bf16(sn(conv_w((c4, c3, 4, 4))));             p["b4"] = bias(c4)
    p["wlast"] = conv_w((1, c4, 4, 4));                                p["blast"] = bias(1)

    def sa(in_dim, prefix):            # fused 1x1-conv QKV -> (C, Dpad) bf16
        c8 = in_dim // 8
        wq = conv_w((c8, in_dim, 1, 1))[:, :, 0, 0].T        # (in_dim, c8)
        bq = bias(c8)
        wk = conv_w((c8, in_dim, 1, 1))[:, :, 0, 0].T
        bk = bias(c8)
        wv = conv_w((in_dim, in_dim, 1, 1))[:, :, 0, 0].T    # (in_dim, in_dim)
        bv = bias(in_dim)
        d = 2 * c8 + in_dim
        dpad = _round_up(d, 128)                             # lane-dense projection
        w = jnp.concatenate([wq, wk, wv], axis=1)
        bb = jnp.concatenate([bq, bk, bv])
        if dpad != d:
            w = jnp.pad(w, ((0, 0), (0, dpad - d)))
            bb = jnp.pad(bb, (0, dpad - d))
        p[prefix + "_wqkv"] = w.astype(jnp.bfloat16)
        p[prefix + "_bqkv"] = bb.astype(jnp.float32)
        p[prefix + "_gamma"] = jnp.zeros((1,), jnp.float32)  # torch.zeros(1)

    sa(c3, "sa1")
    sa(c4, "sa2")
    return p


# ----------------------------------------------------------------------------
# Discriminator forward (matches the PyTorch module's forward)
# ----------------------------------------------------------------------------
def discriminator_forward(params, x_nchw):
    x = jnp.transpose(x_nchw, (0, 2, 3, 1))                       # -> NHWC

    out = conv_layer(x, params["w1m"], params["b1"], 4, 2, 1, 0.1)
    out = conv_layer(out, params["w2m"], params["b2"], 4, 2, 1, 0.1)
    out = conv_layer(out, params["w3m"], params["b3"], 4, 2, 1, 0.1)

    B, H, W, C = out.shape
    tok, att1 = self_attention(out.reshape(B, H * W, C),
                               params["sa1_wqkv"], params["sa1_bqkv"],
                               params["sa1_gamma"], C // 8)
    out = tok.reshape(B, H, W, C)

    out = conv_layer(out, params["w4m"], params["b4"], 4, 2, 1, 0.1)

    B, H, W, C = out.shape
    tok, att2 = self_attention(out.reshape(B, H * W, C),
                               params["sa2_wqkv"], params["sa2_bqkv"],
                               params["sa2_gamma"], C // 8)
    out = tok.reshape(B, H, W, C)

    out = last_conv(out, params["wlast"], params["blast"])        # (B, 1, 1, 1)
    out = jnp.transpose(out, (0, 3, 1, 2))                        # NCHW
    return out, att1, att2


if __name__ == "__main__":
    # Small config: channel base 8 (channels 8/16/32/64); spatial must be 64x64
    # so the final 4x4 valid conv sees a 4x4 map (structural requirement).
    IMAGE_SIZE_CH = 8
    IMAGE_CHANNELS = 1
    B, SPATIAL = 2, 64

    key = jax.random.PRNGKey(0)
    pkey, xkey = jax.random.split(key)
    params = init_params(pkey, IMAGE_SIZE_CH, IMAGE_CHANNELS)
    x = jax.random.normal(xkey, (B, IMAGE_CHANNELS, SPATIAL, SPATIAL), jnp.float32)

    fwd = jax.jit(discriminator_forward)
    out, att1, att2 = fwd(params, x)
    jax.block_until_ready((out, att1, att2))

    assert out.shape == (B, 1, 1, 1), out.shape
    assert att1.shape == (B, 64, 64), att1.shape      # 8x8 tokens after layer3
    assert att2.shape == (B, 16, 16), att2.shape      # 4x4 tokens after layer4
    assert bool(jnp.all(jnp.isfinite(out)))
    assert bool(jnp.all(jnp.isfinite(att1))) and bool(jnp.all(jnp.isfinite(att2)))
    print("KERNEL_OK")
</pallas_src>

<mosaic_0001>
module attributes {stable_mosaic.version = 11 : i64} {
  func.func @_matmul_bias_act_kernel(%arg0: i32, %arg1: memref<2048x16xbf16, #tpu.memory_space<vmem>>, %arg2: memref<16x128xbf16, #tpu.memory_space<vmem>>, %arg3: memref<1x128xf32, #tpu.memory_space<vmem>>, %arg4: memref<2048x128xbf16, #tpu.memory_space<vmem>>) attributes {dimension_semantics = [#tpu.dimension_semantics<parallel>], iteration_bounds = array<i64: 1>, scalar_prefetch = 0 : i64, scratch_operands = 0 : i64, tpu.core_type = #tpu.core_type<tc>, window_params = [{transform_indices = @transform_0, window_bounds = array<i64: 2048, 16>}, {pipeline_mode = #tpu.pipeline_mode<synchronous>, transform_indices = @transform_1, window_bounds = array<i64: 16, 128>}, {pipeline_mode = #tpu.pipeline_mode<synchronous>, transform_indices = @transform_2, window_bounds = array<i64: 1, 128>}, {transform_indices = @transform_3, window_bounds = array<i64: 2048, 128>}]} {
    %c0 = arith.constant 0 : index
    %c0_0 = arith.constant 0 : index
    %0 = vector.load %arg1[%c0, %c0_0] : memref<2048x16xbf16, #tpu.memory_space<vmem>>, vector<2048x16xbf16>
    %c0_1 = arith.constant 0 : index
    %c0_2 = arith.constant 0 : index
    %1 = vector.load %arg2[%c0_1, %c0_2] : memref<16x128xbf16, #tpu.memory_space<vmem>>, vector<16x128xbf16>
    %cst = arith.constant dense<0.000000e+00> : vector<2048x128xf32>
    %2 = tpu.matmul %0, %1, %cst {dimension_numbers = #tpu.dot_dimension_numbers<[1], [0], [0], [1], [0, 0, 1, 1], [], []>} : vector<2048x16xbf16>, vector<16x128xbf16>, vector<2048x128xf32> -> vector<2048x128xf32>
    %c0_3 = arith.constant 0 : index
    %c0_4 = arith.constant 0 : index
    %3 = vector.load %arg3[%c0_3, %c0_4] : memref<1x128xf32, #tpu.memory_space<vmem>>, vector<1x128xf32>
    %4 = vector.broadcast %3 : vector<1x128xf32> to vector<2048x128xf32>
    %5 = arith.addf %2, %4 : vector<2048x128xf32>
    %cst_5 = arith.constant 0.000000e+00 : f32
    %6 = vector.broadcast %cst_5 : f32 to vector<2048x128xf32>
    %7 = arith.cmpf oge, %5, %6 : vector<2048x128xf32>
    %cst_6 = arith.constant 1.000000e-01 : f32
    %8 = vector.broadcast %cst_6 : f32 to vector<2048x128xf32>
    %9 = arith.mulf %8, %5 : vector<2048x128xf32>
    %10 = arith.select %7, %5, %9 : vector<2048x128xi1>, vector<2048x128xf32>
    %11 = arith.truncf %10 : vector<2048x128xf32> to vector<2048x128xbf16>
    %c0_7 = arith.constant 0 : index
    %c0_8 = arith.constant 0 : index
    %12 = vector.load %arg4[%c0_7, %c0_8] : memref<2048x128xbf16, #tpu.memory_space<vmem>>, vector<2048x128xbf16>
    tpu.vector_store %arg4[%c0_7, %c0_8], %11 {strides = array<i32>} : memref<2048x128xbf16, #tpu.memory_space<vmem>>, vector<2048x128xbf16>,
    return
  }
  func.func @transform_0(%arg0: i32) -> (i32, i32) {
    %c0_i32 = arith.constant 0 : i32
    %c0_i32_0 = arith.constant 0 : i32
    return %arg0, %c0_i32 : i32, i32
  }
  func.func @transform_1(%arg0: i32) -> (i32, i32) {
    %c0_i32 = arith.constant 0 : i32
    %c0_i32_0 = arith.constant 0 : i32
    %c0_i32_1 = arith.constant 0 : i32
    return %c0_i32, %c0_i32_0 : i32, i32
  }
  func.func @transform_2(%arg0: i32) -> (i32, i32) {
    %c0_i32 = arith.constant 0 : i32
    %c0_i32_0 = arith.constant 0 : i32
    %c0_i32_1 = arith.constant 0 : i32
    return %c0_i32, %c0_i32_0 : i32, i32
  }
  func.func @transform_3(%arg0: i32) -> (i32, i32) {
    %c0_i32 = arith.constant 0 : i32
    %c0_i32_0 = arith.constant 0 : i32
    return %arg0, %c0_i32 : i32, i32
  }
}

module attributes {stable_mosaic.version = 11 : i64} {
  func.func @_matmul_bias_act_kernel(%arg0: i32, %arg1: memref<512x128xbf16, #tpu.memory_space<vmem>>, %arg2: memref<128x128xbf16, #tpu.memory_space<vmem>>, %arg3: memref<1x128xf32, #tpu.memory_space<vmem>>, %arg4: memref<512x128xbf16, #tpu.memory_space<vmem>>) attributes {dimension_semantics = [#tpu.dimension_semantics<parallel>], iteration_bounds = array<i64: 1>, scalar_prefetch = 0 : i64, scratch_operands = 0 : i64, tpu.core_type = #tpu.core_type<tc>, window_params = [{transform_indices = @transform_0, window_bounds = array<i64: 512, 128>}, {pipeline_mode = #tpu.pipeline_mode<synchronous>, transform_indices = @transform_1, window_bounds = array<i64: 128, 128>}, {pipeline_mode = #tpu.pipeline_mode<synchronous>, transform_indices = @transform_2, window_bounds = array<i64: 1, 128>}, {transform_indices = @transform_3, window_bounds = array<i64: 512, 128>}]} {
    %c0 = arith.constant 0 : index
    %c0_0 = arith.constant 0 : index
    %0 = vector.load %arg1[%c0, %c0_0] : memref<512x128xbf16, #tpu.memory_space<vmem>>, vector<512x128xbf16>
    %c0_1 = arith.constant 0 : index
    %c0_2 = arith.constant 0 : index
    %1 = vector.load %arg2[%c0_1, %c0_2] : memref<128x128xbf16, #tpu.memory_space<vmem>>, vector<128x128xbf16>
    %cst = arith.constant dense<0.000000e+00> : vector<512x128xf32>
    %2 = tpu.matmul %0, %1, %cst {dimension_numbers = #tpu.dot_dimension_numbers<[1], [0], [0], [1], [0, 0, 1, 1], [], []>} : vector<512x128xbf16>, vector<128x128xbf16>, vector<512x128xf32> -> vector<512x128xf32>
    %c0_3 = arith.constant 0 : index
    %c0_4 = arith.constant 0 : index
    %3 = vector.load %arg3[%c0_3, %c0_4] : memref<1x128xf32, #tpu.memory_space<vmem>>, vector<1x128xf32>
    %4 = vector.broadcast %3 : vector<1x128xf32> to vector<512x128xf32>
    %5 = arith.addf %2, %4 : vector<512x128xf32>
    %cst_5 = arith.constant 0.000000e+00 : f32
    %6 = vector.broadcast %cst_5 : f32 to vector<512x128xf32>
    %7 = arith.cmpf oge, %5, %6 : vector<512x128xf32>
    %cst_6 = arith.constant 1.000000e-01 : f32
    %8 = vector.broadcast %cst_6 : f32 to vector<512x128xf32>
    %9 = arith.mulf %8, %5 : vector<512x128xf32>
    %10 = arith.select %7, %5, %9 : vector<512x128xi1>, vector<512x128xf32>
    %11 = arith.truncf %10 : vector<512x128xf32> to vector<512x128xbf16>
    %c0_7 = arith.constant 0 : index
    %c0_8 = arith.constant 0 : index
    %12 = vector.load %arg4[%c0_7, %c0_8] : memref<512x128xbf16, #tpu.memory_space<vmem>>, vector<512x128xbf16>
    tpu.vector_store %arg4[%c0_7, %c0_8], %11 {strides = array<i32>} : memref<512x128xbf16, #tpu.memory_space<vmem>>, vector<512x128xbf16>,
    return
  }
  func.func @transform_0(%arg0: i32) -> (i32, i32) {
    %c0_i32 = arith.constant 0 : i32
    %c0_i32_0 = arith.constant 0 : i32
    return %arg0, %c0_i32 : i32, i32
  }
  func.func @transform_1(%arg0: i32) -> (i32, i32) {
    %c0_i32 = arith.constant 0 : i32
    %c0_i32_0 = arith.constant 0 : i32
    %c0_i32_1 = arith.constant 0 : i32
    return %c0_i32, %c0_i32_0 : i32, i32
  }
  func.func @transform_2(%arg0: i32) -> (i32, i32) {
    %c0_i32 = arith.constant 0 : i32
    %c0_i32_0 = arith.constant 0 : i32
    %c0_i32_1 = arith.constant 0 : i32
    return %c0_i32, %c0_i32_0 : i32, i32
  }
  func.func @transform_3(%arg0: i32) -> (i32, i32) {
    %c0_i32 = arith.constant 0 : i32
    %c0_i32_0 = arith.constant 0 : i32
    return %arg0, %c0_i32 : i32, i32
  }
}

module attributes {stable_mosaic.version = 11 : i64} {
  func.func @_matmul_bias_act_kernel(%arg0: i32, %arg1: memref<128x256xbf16, #tpu.memory_space<vmem>>, %arg2: memref<256x128xbf16, #tpu.memory_space<vmem>>, %arg3: memref<1x128xf32, #tpu.memory_space<vmem>>, %arg4: memref<128x128xbf16, #tpu.memory_space<vmem>>) attributes {dimension_semantics = [#tpu.dimension_semantics<parallel>], iteration_bounds = array<i64: 1>, scalar_prefetch = 0 : i64, scratch_operands = 0 : i64, tpu.core_type = #tpu.core_type<tc>, window_params = [{transform_indices = @transform_0, window_bounds = array<i64: 128, 256>}, {pipeline_mode = #tpu.pipeline_mode<synchronous>, transform_indices = @transform_1, window_bounds = array<i64: 256, 128>}, {pipeline_mode = #tpu.pipeline_mode<synchronous>, transform_indices = @transform_2, window_bounds = array<i64: 1, 128>}, {transform_indices = @transform_3, window_bounds = array<i64: 128, 128>}]} {
    %c0 = arith.constant 0 : index
    %c0_0 = arith.constant 0 : index
    %0 = vector.load %arg1[%c0, %c0_0] : memref<128x256xbf16, #tpu.memory_space<vmem>>, vector<128x256xbf16>
    %c0_1 = arith.constant 0 : index
    %c0_2 = arith.constant 0 : index
    %1 = vector.load %arg2[%c0_1, %c0_2] : memref<256x128xbf16, #tpu.memory_space<vmem>>, vector<256x128xbf16>
    %cst = arith.constant dense<0.000000e+00> : vector<128x128xf32>
    %2 = tpu.matmul %0, %1, %cst {dimension_numbers = #tpu.dot_dimension_numbers<[1], [0], [0], [1], [0, 0, 1, 1], [], []>} : vector<128x256xbf16>, vector<256x128xbf16>, vector<128x128xf32> -> vector<128x128xf32>
    %c0_3 = arith.constant 0 : index
    %c0_4 = arith.constant 0 : index
    %3 = vector.load %arg3[%c0_3, %c0_4] : memref<1x128xf32, #tpu.memory_space<vmem>>, vector<1x128xf32>
    %4 = vector.broadcast %3 : vector<1x128xf32> to vector<128x128xf32>
    %5 = arith.addf %2, %4 : vector<128x128xf32>
    %cst_5 = arith.constant 0.000000e+00 : f32
    %6 = vector.broadcast %cst_5 : f32 to vector<128x128xf32>
    %7 = arith.cmpf oge, %5, %6 : vector<128x128xf32>
    %cst_6 = arith.constant 1.000000e-01 : f32
    %8 = vector.broadcast %cst_6 : f32 to vector<128x128xf32>
    %9 = arith.mulf %8, %5 : vector<128x128xf32>
    %10 = arith.select %7, %5, %9 : vector<128x128xi1>, vector<128x128xf32>
    %11 = arith.truncf %10 : vector<128x128xf32> to vector<128x128xbf16>
    %c0_7 = arith.constant 0 : index
    %c0_8 = arith.constant 0 : index
    %12 = vector.load %arg4[%c0_7, %c0_8] : memref<128x128xbf16, #tpu.memory_space<vmem>>, vector<128x128xbf16>
    tpu.vector_store %arg4[%c0_7, %c0_8], %11 {strides = array<i32>} : memref<128x128xbf16, #tpu.memory_space<vmem>>, vector<128x128xbf16>,
    return
  }
  func.func @transform_0(%arg0: i32) -> (i32, i32) {
    %c0_i32 = arith.constant 0 : i32
    %c0_i32_0 = arith.constant 0 : i32
    return %arg0, %c0_i32 : i32, i32
  }
  func.func @transform_1(%arg0: i32) -> (i32, i32) {
    %c0_i32 = arith.constant 0 : i32
    %c0_i32_0 = arith.constant 0 : i32
    %c0_i32_1 = arith.constant 0 : i32
    return %c0_i32, %c0_i32_0 : i32, i32
  }
  func.func @transform_2(%arg0: i32) -> (i32, i32) {
    %c0_i32 = arith.constant 0 : i32
    %c0_i32_0 = arith.constant 0 : i32
    %c0_i32_1 = arith.constant 0 : i32
    return %c0_i32, %c0_i32_0 : i32, i32
  }
  func.func @transform_3(%arg0: i32) -> (i32, i32) {
    %c0_i32 = arith.constant 0 : i32
    %c0_i32_0 = arith.constant 0 : i32
    return %arg0, %c0_i32 : i32, i32
  }
}

module attributes {stable_mosaic.version = 11 : i64} {
  func.func @_self_attention_kernel(%arg0: i32, %arg1: memref<1x64x32xbf16, #tpu.memory_space<vmem>>, %arg2: memref<32x128xbf16, #tpu.memory_space<vmem>>, %arg3: memref<1x128xf32, #tpu.memory_space<vmem>>, %arg4: memref<1xf32, #tpu.memory_space<smem>>, %arg5: memref<1x64x32xbf16, #tpu.memory_space<vmem>>, %arg6: memref<1x64x64xf32, #tpu.memory_space<vmem>>) attributes {dimension_semantics = [#tpu.dimension_semantics<parallel>], iteration_bounds = array<i64: 2>, scalar_prefetch = 0 : i64, scratch_operands = 0 : i64, tpu.core_type = #tpu.core_type<tc>, window_params = [{transform_indices = @transform_0, window_bounds = array<i64: 1, 64, 32>}, {pipeline_mode = #tpu.pipeline_mode<synchronous>, transform_indices = @transform_1, window_bounds = array<i64: 32, 128>}, {pipeline_mode = #tpu.pipeline_mode<synchronous>, transform_indices = @transform_2, window_bounds = array<i64: 1, 128>}, {transform_indices = @transform_3, window_bounds = array<i64: 1>}, {transform_indices = @transform_4, window_bounds = array<i64: 1, 64, 32>}, {transform_indices = @transform_5, window_bounds = array<i64: 1, 64, 64>}]} {
    %c0 = arith.constant 0 : index
    %c0_0 = arith.constant 0 : index
    %c0_1 = arith.constant 0 : index
    %0 = vector.load %arg1[%c0, %c0_0, %c0_1] : memref<1x64x32xbf16, #tpu.memory_space<vmem>>, vector<1x64x32xbf16>
    %1 = vector.shape_cast %0 : vector<1x64x32xbf16> to vector<64x32xbf16>
    %c0_2 = arith.constant 0 : index
    %c0_3 = arith.constant 0 : index
    %2 = vector.load %arg2[%c0_2, %c0_3] : memref<32x128xbf16, #tpu.memory_space<vmem>>, vector<32x128xbf16>
    %cst = arith.constant dense<0.000000e+00> : vector<64x128xf32>
    %3 = tpu.matmul %1, %2, %cst {dimension_numbers = #tpu.dot_dimension_numbers<[1], [0], [0], [1], [0, 0, 1, 1], [], []>} : vector<64x32xbf16>, vector<32x128xbf16>, vector<64x128xf32> -> vector<64x128xf32>
    %c0_4 = arith.constant 0 : index
    %c0_5 = arith.constant 0 : index
    %4 = vector.load %arg3[%c0_4, %c0_5] : memref<1x128xf32, #tpu.memory_space<vmem>>, vector<1x128xf32>
    %5 = vector.broadcast %4 : vector<1x128xf32> to vector<64x128xf32>
    %6 = arith.addf %3, %5 : vector<64x128xf32>
    %7 = vector.extract_strided_slice %6 {offsets = [0, 0], sizes = [64, 4], strides = [1, 1]} : vector<64x128xf32> to vector<64x4xf32>
    %8 = vector.extract_strided_slice %6 {offsets = [0, 4], sizes = [64, 4], strides = [1, 1]} : vector<64x128xf32> to vector<64x4xf32>
    %9 = vector.extract_strided_slice %6 {offsets = [0, 8], sizes = [64, 32], strides = [1, 1]} : vector<64x128xf32> to vector<64x32xf32>
    %10 = arith.truncf %8 : vector<64x4xf32> to vector<64x4xbf16>
    %11 = arith.truncf %7 : vector<64x4xf32> to vector<64x4xbf16>
    %cst_6 = arith.constant dense<0.000000e+00> : vector<64x64xf32>
    %12 = tpu.matmul %10, %11, %cst_6 {dimension_numbers = #tpu.dot_dimension_numbers<[1], [1], [0], [0], [0, 0, 1, 0], [], []>} : vector<64x4xbf16>, vector<64x4xbf16>, vector<64x64xf32> -> vector<64x64xf32>
    %cst_7 = arith.constant dense<0xFF800000> : vector<64xf32>
    %13 = vector.multi_reduction <maximumf>, %12, %cst_7 [1] : vector<64x64xf32> to vector<64xf32>
    %14 = vector.shape_cast %13 : vector<64xf32> to vector<64x1xf32>
    %15 = vector.broadcast %14 : vector<64x1xf32> to vector<64x64xf32>
    %16 = arith.subf %12, %15 : vector<64x64xf32>
    %17 = math.exp %16 : vector<64x64xf32>
    %cst_8 = arith.constant dense<0.000000e+00> : vector<64xf32>
    %18 = vector.multi_reduction <add>, %17, %cst_8 [1] : vector<64x64xf32> to vector<64xf32>
    %19 = vector.shape_cast %18 : vector<64xf32> to vector<64x1xf32>
    %20 = vector.broadcast %19 : vector<64x1xf32> to vector<64x64xf32>
    %21 = arith.divf %17, %20 : vector<64x64xf32>
    %22 = arith.truncf %21 : vector<64x64xf32> to vector<64x64xbf16>
    %23 = arith.truncf %9 : vector<64x32xf32> to vector<64x32xbf16>
    %cst_9 = arith.constant dense<0.000000e+00> : vector<64x32xf32>
    %24 = tpu.matmul %22, %23, %cst_9 {dimension_numbers = #tpu.dot_dimension_numbers<[1], [0], [0], [1], [0, 0, 1, 1], [], []>} : vector<64x64xbf16>, vector<64x32xbf16>, vector<64x32xf32> -> vector<64x32xf32>
    %c0_10 = arith.constant 0 : index
    %25 = memref.load %arg4[%c0_10] : memref<1xf32, #tpu.memory_space<smem>>
    %26 = arith.extf %1 : vector<64x32xbf16> to vector<64x32xf32>
    %27 = vector.broadcast %25 : f32 to vector<64x32xf32>
    %28 = arith.mulf %27, %24 : vector<64x32xf32>
    %29 = arith.addf %26, %28 : vector<64x32xf32>
    %30 = arith.truncf %29 : vector<64x32xf32> to vector<64x32xbf16>
    %c0_11 = arith.constant 0 : index
    %c0_12 = arith.constant 0 : index
    %c0_13 = arith.constant 0 : index
    %31 = vector.load %arg5[%c0_11, %c0_12, %c0_13] : memref<1x64x32xbf16, #tpu.memory_space<vmem>>, vector<1x64x32xbf16>
    %32 = vector.shape_cast %31 : vector<1x64x32xbf16> to vector<64x32xbf16>
    %33 = vector.shape_cast %30 : vector<64x32xbf16> to vector<1x64x32xbf16>
    tpu.vector_store %arg5[%c0_11, %c0_12, %c0_13], %33 {strides = array<i32>} : memref<1x64x32xbf16, #tpu.memory_space<vmem>>, vector<1x64x32xbf16>,
    %c0_14 = arith.constant 0 : index
    %c0_15 = arith.constant 0 : index
    %c0_16 = arith.constant 0 : index
    %34 = vector.load %arg6[%c0_14, %c0_15, %c0_16] : memref<1x64x64xf32, #tpu.memory_space<vmem>>, vector<1x64x64xf32>
    %35 = vector.shape_cast %34 : vector<1x64x64xf32> to vector<64x64xf32>
    %36 = vector.shape_cast %21 : vector<64x64xf32> to vector<1x64x64xf32>
    tpu.vector_store %arg6[%c0_14, %c0_15, %c0_16], %36 {strides = array<i32>} : memref<1x64x64xf32, #tpu.memory_space<vmem>>, vector<1x64x64xf32>,
    return
  }
  func.func @transform_0(%arg0: i32) -> (i32, i32, i32) {
    %c0_i32 = arith.constant 0 : i32
    %c0_i32_0 = arith.constant 0 : i32
    %c0_i32_1 = arith.constant 0 : i32
    return %arg0, %c0_i32, %c0_i32_0 : i32, i32, i32
  }
  func.func @transform_1(%arg0: i32) -> (i32, i32) {
    %c0_i32 = arith.constant 0 : i32
    %c0_i32_0 = arith.constant 0 : i32
    %c0_i32_1 = arith.constant 0 : i32
    return %c0_i32, %c0_i32_0 : i32, i32
  }
  func.func @transform_2(%arg0: i32) -> (i32, i32) {
    %c0_i32 = arith.constant 0 : i32
    %c0_i32_0 = arith.constant 0 : i32
    %c0_i32_1 = arith.constant 0 : i32
    return %c0_i32, %c0_i32_0 : i32, i32
  }
  func.func @transform_3(%arg0: i32) -> i32 {
    %c0_i32 = arith.constant 0 : i32
    %c0_i32_0 = arith.constant 0 : i32
    return %c0_i32 : i32
  }
  func.func @transform_4(%arg0: i32) -> (i32, i32, i32) {
    %c0_i32 = arith.constant 0 : i32
    %c0_i32_0 = arith.constant 0 : i32
    %c0_i32_1 = arith.constant 0 : i32
    return %arg0, %c0_i32, %c0_i32_0 : i32, i32, i32
  }
  func.func @transform_5(%arg0: i32) -> (i32, i32, i32) {
    %c0_i32 = arith.constant 0 : i32
    %c0_i32_0 = arith.constant 0 : i32
    %c0_i32_1 = arith.constant 0 : i32
    return %arg0, %c0_i32, %c0_i32_0 : i32, i32, i32
  }
}

module attributes {stable_mosaic.version = 11 : i64} {
  func.func @_matmul_bias_act_kernel(%arg0: i32, %arg1: memref<32x512xbf16, #tpu.memory_space<vmem>>, %arg2: memref<512x128xbf16, #tpu.memory_space<vmem>>, %arg3: memref<1x128xf32, #tpu.memory_space<vmem>>, %arg4: memref<32x128xbf16, #tpu.memory_space<vmem>>) attributes {dimension_semantics = [#tpu.dimension_semantics<parallel>], iteration_bounds = array<i64: 1>, scalar_prefetch = 0 : i64, scratch_operands = 0 : i64, tpu.core_type = #tpu.core_type<tc>, window_params = [{transform_indices = @transform_0, window_bounds = array<i64: 32, 512>}, {pipeline_mode = #tpu.pipeline_mode<synchronous>, transform_indices = @transform_1, window_bounds = array<i64: 512, 128>}, {pipeline_mode = #tpu.pipeline_mode<synchronous>, transform_indices = @transform_2, window_bounds = array<i64: 1, 128>}, {transform_indices = @transform_3, window_bounds = array<i64: 32, 128>}]} {
    %c0 = arith.constant 0 : index
    %c0_0 = arith.constant 0 : index
    %0 = vector.load %arg1[%c0, %c0_0] : memref<32x512xbf16, #tpu.memory_space<vmem>>, vector<32x512xbf16>
    %c0_1 = arith.constant 0 : index
    %c0_2 = arith.constant 0 : index
    %1 = vector.load %arg2[%c0_1, %c0_2] : memref<512x128xbf16, #tpu.memory_space<vmem>>, vector<512x128xbf16>
    %cst = arith.constant dense<0.000000e+00> : vector<32x128xf32>
    %2 = tpu.matmul %0, %1, %cst {dimension_numbers = #tpu.dot_dimension_numbers<[1], [0], [0], [1], [0, 0, 1, 1], [], []>} : vector<32x512xbf16>, vector<512x128xbf16>, vector<32x128xf32> -> vector<32x128xf32>
    %c0_3 = arith.constant 0 : index
    %c0_4 = arith.constant 0 : index
    %3 = vector.load %arg3[%c0_3, %c0_4] : memref<1x128xf32, #tpu.memory_space<vmem>>, vector<1x128xf32>
    %4 = vector.broadcast %3 : vector<1x128xf32> to vector<32x128xf32>
    %5 = arith.addf %2, %4 : vector<32x128xf32>
    %cst_5 = arith.constant 0.000000e+00 : f32
    %6 = vector.broadcast %cst_5 : f32 to vector<32x128xf32>
    %7 = arith.cmpf oge, %5, %6 : vector<32x128xf32>
    %cst_6 = arith.constant 1.000000e-01 : f32
    %8 = vector.broadcast %cst_6 : f32 to vector<32x128xf32>
    %9 = arith.mulf %8, %5 : vector<32x128xf32>
    %10 = arith.select %7, %5, %9 : vector<32x128xi1>, vector<32x128xf32>
    %11 = arith.truncf %10 : vector<32x128xf32> to vector<32x128xbf16>
    %c0_7 = arith.constant 0 : index
    %c0_8 = arith.constant 0 : index
    %12 = vector.load %arg4[%c0_7, %c0_8] : memref<32x128xbf16, #tpu.memory_space<vmem>>, vector<32x128xbf16>
    tpu.vector_store %arg4[%c0_7, %c0_8], %11 {strides = array<i32>} : memref<32x128xbf16, #tpu.memory_space<vmem>>, vector<32x128xbf16>,
    return
  }
  func.func @transform_0(%arg0: i32) -> (i32, i32) {
    %c0_i32 = arith.constant 0 : i32
    %c0_i32_0 = arith.constant 0 : i32
    return %arg0, %c0_i32 : i32, i32
  }
  func.func @transform_1(%arg0: i32) -> (i32, i32) {
    %c0_i32 = arith.constant 0 : i32
    %c0_i32_0 = arith.constant 0 : i32
    %c0_i32_1 = arith.constant 0 : i32
    return %c0_i32, %c0_i32_0 : i32, i32
  }
  func.func @transform_2(%arg0: i32) -> (i32, i32) {
    %c0_i32 = arith.constant 0 : i32
    %c0_i32_0 = arith.constant 0 : i32
    %c0_i32_1 = arith.constant 0 : i32
    return %c0_i32, %c0_i32_0 : i32, i32
  }
  func.func @transform_3(%arg0: i32) -> (i32, i32) {
    %c0_i32 = arith.constant 0 : i32
    %c0_i32_0 = arith.constant 0 : i32
    return %arg0, %c0_i32 : i32, i32
  }
}

module attributes {stable_mosaic.version = 11 : i64} {
  func.func @_self_attention_kernel(%arg0: i32, %arg1: memref<1x16x64xbf16, #tpu.memory_space<vmem>>, %arg2: memref<64x128xbf16, #tpu.memory_space<vmem>>, %arg3: memref<1x128xf32, #tpu.memory_space<vmem>>, %arg4: memref<1xf32, #tpu.memory_space<smem>>, %arg5: memref<1x16x64xbf16, #tpu.memory_space<vmem>>, %arg6: memref<1x16x16xf32, #tpu.memory_space<vmem>>) attributes {dimension_semantics = [#tpu.dimension_semantics<parallel>], iteration_bounds = array<i64: 2>, scalar_prefetch = 0 : i64, scratch_operands = 0 : i64, tpu.core_type = #tpu.core_type<tc>, window_params = [{transform_indices = @transform_0, window_bounds = array<i64: 1, 16, 64>}, {pipeline_mode = #tpu.pipeline_mode<synchronous>, transform_indices = @transform_1, window_bounds = array<i64: 64, 128>}, {pipeline_mode = #tpu.pipeline_mode<synchronous>, transform_indices = @transform_2, window_bounds = array<i64: 1, 128>}, {transform_indices = @transform_3, window_bounds = array<i64: 1>}, {transform_indices = @transform_4, window_bounds = array<i64: 1, 16, 64>}, {transform_indices = @transform_5, window_bounds = array<i64: 1, 16, 16>}]} {
    %c0 = arith.constant 0 : index
    %c0_0 = arith.constant 0 : index
    %c0_1 = arith.constant 0 : index
    %0 = vector.load %arg1[%c0, %c0_0, %c0_1] : memref<1x16x64xbf16, #tpu.memory_space<vmem>>, vector<1x16x64xbf16>
    %1 = vector.shape_cast %0 : vector<1x16x64xbf16> to vector<16x64xbf16>
    %c0_2 = arith.constant 0 : index
    %c0_3 = arith.constant 0 : index
    %2 = vector.load %arg2[%c0_2, %c0_3] : memref<64x128xbf16, #tpu.memory_space<vmem>>, vector<64x128xbf16>
    %cst = arith.constant dense<0.000000e+00> : vector<16x128xf32>
    %3 = tpu.matmul %1, %2, %cst {dimension_numbers = #tpu.dot_dimension_numbers<[1], [0], [0], [1], [0, 0, 1, 1], [], []>} : vector<16x64xbf16>, vector<64x128xbf16>, vector<16x128xf32> -> vector<16x128xf32>
    %c0_4 = arith.constant 0 : index
    %c0_5 = arith.constant 0 : index
    %4 = vector.load %arg3[%c0_4, %c0_5] : memref<1x128xf32, #tpu.memory_space<vmem>>, vector<1x128xf32>
    %5 = vector.broadcast %4 : vector<1x128xf32> to vector<16x128xf32>
    %6 = arith.addf %3, %5 : vector<16x128xf32>
    %7 = vector.extract_strided_slice %6 {offsets = [0, 0], sizes = [16, 8], strides = [1, 1]} : vector<16x128xf32> to vector<16x8xf32>
    %8 = vector.extract_strided_slice %6 {offsets = [0, 8], sizes = [16, 8], strides = [1, 1]} : vector<16x128xf32> to vector<16x8xf32>
    %9 = vector.extract_strided_slice %6 {offsets = [0, 16], sizes = [16, 64], strides = [1, 1]} : vector<16x128xf32> to vector<16x64xf32>
    %10 = arith.truncf %8 : vector<16x8xf32> to vector<16x8xbf16>
    %11 = arith.truncf %7 : vector<16x8xf32> to vector<16x8xbf16>
    %cst_6 = arith.constant dense<0.000000e+00> : vector<16x16xf32>
    %12 = tpu.matmul %10, %11, %cst_6 {dimension_numbers = #tpu.dot_dimension_numbers<[1], [1], [0], [0], [0, 0, 1, 0], [], []>} : vector<16x8xbf16>, vector<16x8xbf16>, vector<16x16xf32> -> vector<16x16xf32>
    %cst_7 = arith.constant dense<0xFF800000> : vector<16xf32>
    %13 = vector.multi_reduction <maximumf>, %12, %cst_7 [1] : vector<16x16xf32> to vector<16xf32>
    %14 = vector.shape_cast %13 : vector<16xf32> to vector<16x1xf32>
    %15 = vector.broadcast %14 : vector<16x1xf32> to vector<16x16xf32>
    %16 = arith.subf %12, %15 : vector<16x16xf32>
    %17 = math.exp %16 : vector<16x16xf32>
    %cst_8 = arith.constant dense<0.000000e+00> : vector<16xf32>
    %18 = vector.multi_reduction <add>, %17, %cst_8 [1] : vector<16x16xf32> to vector<16xf32>
    %19 = vector.shape_cast %18 : vector<16xf32> to vector<16x1xf32>
    %20 = vector.broadcast %19 : vector<16x1xf32> to vector<16x16xf32>
    %21 = arith.divf %17, %20 : vector<16x16xf32>
    %22 = arith.truncf %21 : vector<16x16xf32> to vector<16x16xbf16>
    %23 = arith.truncf %9 : vector<16x64xf32> to vector<16x64xbf16>
    %cst_9 = arith.constant dense<0.000000e+00> : vector<16x64xf32>
    %24 = tpu.matmul %22, %23, %cst_9 {dimension_numbers = #tpu.dot_dimension_numbers<[1], [0], [0], [1], [0, 0, 1, 1], [], []>} : vector<16x16xbf16>, vector<16x64xbf16>, vector<16x64xf32> -> vector<16x64xf32>
    %c0_10 = arith.constant 0 : index
    %25 = memref.load %arg4[%c0_10] : memref<1xf32, #tpu.memory_space<smem>>
    %26 = arith.extf %1 : vector<16x64xbf16> to vector<16x64xf32>
    %27 = vector.broadcast %25 : f32 to vector<16x64xf32>
    %28 = arith.mulf %27, %24 : vector<16x64xf32>
    %29 = arith.addf %26, %28 : vector<16x64xf32>
    %30 = arith.truncf %29 : vector<16x64xf32> to vector<16x64xbf16>
    %c0_11 = arith.constant 0 : index
    %c0_12 = arith.constant 0 : index
    %c0_13 = arith.constant 0 : index
    %31 = vector.load %arg5[%c0_11, %c0_12, %c0_13] : memref<1x16x64xbf16, #tpu.memory_space<vmem>>, vector<1x16x64xbf16>
    %32 = vector.shape_cast %31 : vector<1x16x64xbf16> to vector<16x64xbf16>
    %33 = vector.shape_cast %30 : vector<16x64xbf16> to vector<1x16x64xbf16>
    tpu.vector_store %arg5[%c0_11, %c0_12, %c0_13], %33 {strides = array<i32>} : memref<1x16x64xbf16, #tpu.memory_space<vmem>>, vector<1x16x64xbf16>,
    %c0_14 = arith.constant 0 : index
    %c0_15 = arith.constant 0 : index
    %c0_16 = arith.constant 0 : index
    %34 = vector.load %arg6[%c0_14, %c0_15, %c0_16] : memref<1x16x16xf32, #tpu.memory_space<vmem>>, vector<1x16x16xf32>
    %35 = vector.shape_cast %34 : vector<1x16x16xf32> to vector<16x16xf32>
    %36 = vector.shape_cast %21 : vector<16x16xf32> to vector<1x16x16xf32>
    tpu.vector_store %arg6[%c0_14, %c0_15, %c0_16], %36 {strides = array<i32>} : memref<1x16x16xf32, #tpu.memory_space<vmem>>, vector<1x16x16xf32>,
    return
  }
  func.func @transform_0(%arg0: i32) -> (i32, i32, i32) {
    %c0_i32 = arith.constant 0 : i32
    %c0_i32_0 = arith.constant 0 : i32
    %c0_i32_1 = arith.constant 0 : i32
    return %arg0, %c0_i32, %c0_i32_0 : i32, i32, i32
  }
  func.func @transform_1(%arg0: i32) -> (i32, i32) {
    %c0_i32 = arith.constant 0 : i32
    %c0_i32_0 = arith.constant 0 : i32
    %c0_i32_1 = arith.constant 0 : i32
    return %c0_i32, %c0_i32_0 : i32, i32
  }
  func.func @transform_2(%arg0: i32) -> (i32, i32) {
    %c0_i32 = arith.constant 0 : i32
    %c0_i32_0 = arith.constant 0 : i32
    %c0_i32_1 = arith.constant 0 : i32
    return %c0_i32, %c0_i32_0 : i32, i32
  }
  func.func @transform_3(%arg0: i32) -> i32 {
    %c0_i32 = arith.constant 0 : i32
    %c0_i32_0 = arith.constant 0 : i32
    return %c0_i32 : i32
  }
  func.func @transform_4(%arg0: i32) -> (i32, i32, i32) {
    %c0_i32 = arith.constant 0 : i32
    %c0_i32_0 = arith.constant 0 : i32
    %c0_i32_1 = arith.constant 0 : i32
    return %arg0, %c0_i32, %c0_i32_0 : i32, i32, i32
  }
  func.func @transform_5(%arg0: i32) -> (i32, i32, i32) {
    %c0_i32 = arith.constant 0 : i32
    %c0_i32_0 = arith.constant 0 : i32
    %c0_i32_1 = arith.constant 0 : i32
    return %arg0, %c0_i32, %c0_i32_0 : i32, i32, i32
  }
}

</mosaic_0001>

<llo_original>
// kernel: discriminator_forward.7
$region0: #{discriminator_forward.7}
  #allocation0 [shape = 'u32[]', space=smem, size = 0x4, offset = 0x4, fixed_abs, tag = 'smem constant byte address 0x4 - core index']
  #allocation1 [shape = 'u32[72,128]{1,0:T(1,128)}', space=vmem, size = 0x9000, scoped, tag = 'internal scratch']
  %s0 = inlined_call_operand.vmem [shape: bf16[512,128], index: 0, kind: input, shape index: {}]
  %s1 = inlined_call_operand.vmem [shape: bf16[128,128], index: 1, kind: input, shape index: {}]
  %s2 = inlined_call_operand.vmem [shape: f32[1,128], index: 2, kind: input, shape index: {}]
  %s3 = inlined_call_operand.vmem [shape: bf16[512,128], index: 3, kind: output, shape index: {}]
  %s4 = sld [smem:[#allocation0]]
  $region22: #{discriminator_forward.7} parent=0
    _
  %s6 = ssub.s32 1, %s4
  %s7 = scalar_select 0, %s6, %s4
  // Predicated region
  $region2: #{discriminator_forward.7} parent=0 // pred_check
    _
  $region3: #{discriminator_forward.7} parent=0 // pred_check_branch
    %9 = sbr.rel (0) target = $region5
  $region4: #{discriminator_forward.7} parent=0 // pred_region
    _
  $region5: #{discriminator_forward.7} parent=0 // pred_fallthru
    _
  // Predicated region
  $region6: #{discriminator_forward.7} parent=0 // pred_check
    _
  $region7: #{discriminator_forward.7} parent=0 // pred_check_branch
    %11 = sbr.rel (0) target = $region9
  $region8: #{discriminator_forward.7} parent=0 // pred_region
    _
  $region9: #{discriminator_forward.7} parent=0 // pred_fallthru
    _
  // Predicated region
  $region10: #{discriminator_forward.7} parent=0 // pred_check
    _
  $region11: #{discriminator_forward.7} parent=0 // pred_check_branch
    %13 = sbr.rel (0) target = $region13
  $region12: #{discriminator_forward.7} parent=0 // pred_region
    _
  $region13: #{discriminator_forward.7} parent=0 // pred_fallthru
    _
  %v14 = vld [vmem:[%s0] sm:$0xf]
  %v15 = vld [vmem:[%s0 + $0x4] sm:$0xf]
  %v16 = vld [vmem:[%s0 + $0x8] sm:$0xf]
  %v17 = vld [vmem:[%s0 + $0xc] sm:$0xf]
  %v18 = vld [vmem:[%s0 + $0x10] sm:$0xf]
  %v19 = vld [vmem:[%s0 + $0x14] sm:$0xf]
  %v20 = vld [vmem:[%s0 + $0x18] sm:$0xf]
  %v21 = vld [vmem:[%s0 + $0x1c] sm:$0xf]
  %v22 = vld [vmem:[%s0 + $0x20] sm:$0xf]
  %v23 = vld [vmem:[%s0 + $0x24] sm:$0xf]
  %v24 = vld [vmem:[%s0 + $0x28] sm:$0xf]
  %v25 = vld [vmem:[%s0 + $0x2c] sm:$0xf]
  %v26 = vld [vmem:[%s0 + $0x30] sm:$0xf]
  %v27 = vld [vmem:[%s0 + $0x34] sm:$0xf]
  %v28 = vld [vmem:[%s0 + $0x38] sm:$0xf]
  %v29 = vld [vmem:[%s0 + $0x3c] sm:$0xf]
  %v30 = vld [vmem:[%s0 + $0x40] sm:$0xf]
  %v31 = vld [vmem:[%s0 + $0x44] sm:$0xf]
  %v32 = vld [vmem:[%s0 + $0x48] sm:$0xf]
  %v33 = vld [vmem:[%s0 + $0x4c] sm:$0xf]
  %v34 = vld [vmem:[%s0 + $0x50] sm:$0xf]
  %v35 = vld [vmem:[%s0 + $0x54] sm:$0xf]
  %v36 = vld [vmem:[%s0 + $0x58] sm:$0xf]
  %v37 = vld [vmem:[%s0 + $0x5c] sm:$0xf]
  %v38 = vld [vmem:[%s0 + $0x60] sm:$0xf]
  %v39 = vld [vmem:[%s0 + $0x64] sm:$0xf]
  %v40 = vld [vmem:[%s0 + $0x68] sm:$0xf]
  %v41 = vld [vmem:[%s0 + $0x6c] sm:$0xf]
  %v42 = vld [vmem:[%s0 + $0x70] sm:$0xf]
  %v43 = vld [vmem:[%s0 + $0x74] sm:$0xf]
  %v44 = vld [vmem:[%s0 + $0x78] sm:$0xf]
  %v45 = vld [vmem:[%s0 + $0x7c] sm:$0xf]
  %v46 = vld [vmem:[%s0 + $0x80] sm:$0xf]
  %v47 = vld [vmem:[%s0 + $0x84] sm:$0xf]
  %v48 = vld [vmem:[%s0 + $0x88] sm:$0xf]
  %v49 = vld [vmem:[%s0 + $0x8c] sm:$0xf]
  %v50 = vld [vmem:[%s0 + $0x90] sm:$0xf]
  %v51 = vld [vmem:[%s0 + $0x94] sm:$0xf]
  %v52 = vld [vmem:[%s0 + $0x98] sm:$0xf]
  %v53 = vld [vmem:[%s0 + $0x9c] sm:$0xf]
  %v54 = vld [vmem:[%s0 + $0xa0] sm:$0xf]
  %v55 = vld [vmem:[%s0 + $0xa4] sm:$0xf]
  %v56 = vld [vmem:[%s0 + $0xa8] sm:$0xf]
  %v57 = vld [vmem:[%s0 + $0xac] sm:$0xf]
  %v58 = vld [vmem:[%s0 + $0xb0] sm:$0xf]
  %v59 = vld [vmem:[%s0 + $0xb4] sm:$0xf]
  %v60 = vld [vmem:[%s0 + $0xb8] sm:$0xf]
  %v61 = vld [vmem:[%s0 + $0xbc] sm:$0xf]
  %v62 = vld [vmem:[%s0 + $0xc0] sm:$0xf]
  %v63 = vld [vmem:[%s0 + $0xc4] sm:$0xf]
  %v64 = vld [vmem:[%s0 + $0xc8] sm:$0xf]
  %v65 = vld [vmem:[%s0 + $0xcc] sm:$0xf]
  %v66 = vld [vmem:[%s0 + $0xd0] sm:$0xf]
  %v67 = vld [vmem:[%s0 + $0xd4] sm:$0xf]
  %v68 = vld [vmem:[%s0 + $0xd8] sm:$0xf]
  %v69 = vld [vmem:[%s0 + $0xdc] sm:$0xf]
  %v70 = vld [vmem:[%s0 + $0xe0] sm:$0xf]
  %v71 = vld [vmem:[%s0 + $0xe4] sm:$0xf]
  %v72 = vld [vmem:[%s0 + $0xe8] sm:$0xf]
  %v73 = vld [vmem:[%s0 + $0xec] sm:$0xf]
  %v74 = vld [vmem:[%s0 + $0xf0] sm:$0xf]
  %v75 = vld [vmem:[%s0 + $0xf4] sm:$0xf]
  %v76 = vld [vmem:[%s0 + $0xf8] sm:$0xf]
  %v77 = vld [vmem:[%s0 + $0xfc] sm:$0xf]
  %v78 = vld [vmem:[%s1] sm:$0xf]
  %v79 = vld [vmem:[%s1 + $0x4] sm:$0xf]
  %v80 = vld [vmem:[%s1 + $0x8] sm:$0xf]
  %v81 = vld [vmem:[%s1 + $0xc] sm:$0xf]
  %v82 = vld [vmem:[%s1 + $0x10] sm:$0xf]
  %v83 = vld [vmem:[%s1 + $0x14] sm:$0xf]
  %v84 = vld [vmem:[%s1 + $0x18] sm:$0xf]
  %v85 = vld [vmem:[%s1 + $0x1c] sm:$0xf]
  %v86 = vld [vmem:[%s1 + $0x20] sm:$0xf]
  %v87 = vld [vmem:[%s1 + $0x24] sm:$0xf]
  %v88 = vld [vmem:[%s1 + $0x28] sm:$0xf]
  %v89 = vld [vmem:[%s1 + $0x2c] sm:$0xf]
  %v90 = vld [vmem:[%s1 + $0x30] sm:$0xf]
  %v91 = vld [vmem:[%s1 + $0x34] sm:$0xf]
  %v92 = vld [vmem:[%s1 + $0x38] sm:$0xf]
  %v93 = vld [vmem:[%s1 + $0x3c] sm:$0xf]
  %v94 = vld [vmem:[%s2] sm:$0x1]
  %v96 = vperm.slane %v94, 0
  %v162 = vunpack.c.l.b16 %v14
  %v163 = vunpack.c.l.b16 %v15
  %v164 = vunpack.c.l.b16 %v16
  %v165 = vunpack.c.l.b16 %v17
  %v166 = vunpack.c.l.b16 %v18
  %v167 = vunpack.c.l.b16 %v19
  %v168 = vunpack.c.l.b16 %v20
  %v169 = vunpack.c.l.b16 %v21
  %v170 = vunpack.c.l.b16 %v22
  %v171 = vunpack.c.l.b16 %v23
  %v172 = vunpack.c.l.b16 %v24
  %v173 = vunpack.c.l.b16 %v25
  %v174 = vunpack.c.l.b16 %v26
  %v175 = vunpack.c.l.b16 %v27
  %v176 = vunpack.c.l.b16 %v28
  %v177 = vunpack.c.l.b16 %v29
  %v178 = vunpack.c.l.b16 %v30
  %v179 = vunpack.c.l.b16 %v31
  %v180 = vunpack.c.l.b16 %v32
  %v181 = vunpack.c.l.b16 %v33
  %v182 = vunpack.c.l.b16 %v34
  %v183 = vunpack.c.l.b16 %v35
  %v184 = vunpack.c.l.b16 %v36
  %v185 = vunpack.c.l.b16 %v37
  %v186 = vunpack.c.l.b16 %v38
  %v187 = vunpack.c.l.b16 %v39
  %v188 = vunpack.c.l.b16 %v40
  %v189 = vunpack.c.l.b16 %v41
  %v190 = vunpack.c.l.b16 %v42
  %v191 = vunpack.c.l.b16 %v43
  %v192 = vunpack.c.l.b16 %v44
  %v193 = vunpack.c.l.b16 %v45
  %v194 = vunpack.c.l.b16 %v46
  %v195 = vunpack.c.l.b16 %v47
  %v196 = vunpack.c.l.b16 %v48
  %v197 = vunpack.c.l.b16 %v49
  %v198 = vunpack.c.l.b16 %v50
  %v199 = vunpack.c.l.b16 %v51
  %v200 = vunpack.c.l.b16 %v52
  %v201 = vunpack.c.l.b16 %v53
  %v202 = vunpack.c.l.b16 %v54
  %v203 = vunpack.c.l.b16 %v55
  %v204 = vunpack.c.l.b16 %v56
  %v205 = vunpack.c.l.b16 %v57
  %v206 = vunpack.c.l.b16 %v58
  %v207 = vunpack.c.l.b16 %v59
  %v208 = vunpack.c.l.b16 %v60
  %v209 = vunpack.c.l.b16 %v61
  %v210 = vunpack.c.l.b16 %v62
  %v211 = vunpack.c.l.b16 %v63
  %v212 = vunpack.c.l.b16 %v64
  %v213 = vunpack.c.l.b16 %v65
  %v214 = vunpack.c.l.b16 %v66
  %v215 = vunpack.c.l.b16 %v67
  %v216 = vunpack.c.l.b16 %v68
  %v217 = vunpack.c.l.b16 %v69
  %v218 = vunpack.c.l.b16 %v70
  %v219 = vunpack.c.l.b16 %v71
  %v220 = vunpack.c.l.b16 %v72
  %v221 = vunpack.c.l.b16 %v73
  %v222 = vunpack.c.l.b16 %v74
  %v223 = vunpack.c.l.b16 %v75
  %v224 = vunpack.c.l.b16 %v76
  %v225 = vunpack.c.l.b16 %v77
  %v226 = vpack.c.b16 %v163, %v162
  %v227 = vpack.c.b16 %v165, %v164
  %v228 = vpack.c.b16 %v167, %v166
  %v229 = vpack.c.b16 %v169, %v168
  %v230 = vpack.c.b16 %v171, %v170
  %v231 = vpack.c.b16 %v173, %v172
  %v232 = vpack.c.b16 %v175, %v174
  %v233 = vpack.c.b16 %v177, %v176
  %v234 = vpack.c.b16 %v179, %v178
  %v235 = vpack.c.b16 %v181, %v180
  %v236 = vpack.c.b16 %v183, %v182
  %v237 = vpack.c.b16 %v185, %v184
  %v238 = vpack.c.b16 %v187, %v186
  %v239 = vpack.c.b16 %v189, %v188
  %v240 = vpack.c.b16 %v191, %v190
  %v241 = vpack.c.b16 %v193, %v192
  %v242 = vpack.c.b16 %v195, %v194
  %v243 = vpack.c.b16 %v197, %v196
  %v244 = vpack.c.b16 %v199, %v198
  %v245 = vpack.c.b16 %v201, %v200
  %v246 = vpack.c.b16 %v203, %v202
  %v247 = vpack.c.b16 %v205, %v204
  %v248 = vpack.c.b16 %v207, %v206
  %v249 = vpack.c.b16 %v209, %v208
  %v250 = vpack.c.b16 %v211, %v210
  %v251 = vpack.c.b16 %v213, %v212
  %v252 = vpack.c.b16 %v215, %v214
  %v253 = vpack.c.b16 %v217, %v216
  %v254 = vpack.c.b16 %v219, %v218
  %v255 = vpack.c.b16 %v221, %v220
  %v256 = vpack.c.b16 %v223, %v222
  %v257 = vpack.c.b16 %v225, %v224
  %v306 = vunpack.c.l.b16 %v78
  %v307 = vunpack.c.l.b16 %v79
  %v308 = vunpack.c.l.b16 %v80
  %v309 = vunpack.c.l.b16 %v81
  %v310 = vunpack.c.l.b16 %v82
  %v311 = vunpack.c.l.b16 %v83
  %v312 = vunpack.c.l.b16 %v84
  %v313 = vunpack.c.l.b16 %v85
  %v314 = vunpack.c.l.b16 %v86
  %v315 = vunpack.c.l.b16 %v87
  %v316 = vunpack.c.l.b16 %v88
  %v317 = vunpack.c.l.b16 %v89
  %v318 = vunpack.c.l.b16 %v90
  %v319 = vunpack.c.l.b16 %v91
  %v320 = vunpack.c.l.b16 %v92
  %v321 = vunpack.c.l.b16 %v93
  %v322 = vpack.c.b16 %v307, %v306
  %v323 = vpack.c.b16 %v309, %v308
  %v324 = vpack.c.b16 %v311, %v310
  %v325 = vpack.c.b16 %v313, %v312
  %v326 = vpack.c.b16 %v315, %v314
  %v327 = vpack.c.b16 %v317, %v316
  %v328 = vpack.c.b16 %v319, %v318
  %v329 = vpack.c.b16 %v321, %v320
  %338 = vmatpush.bf16.msra.mxu0 %v329
  %339 = vmatpush.bf16.msra.mxu0 %v328
  %340 = vmatpush.bf16.msra.mxu0 %v327
  %341 = vmatpush.bf16.msra.mxu0 %v326
  %342 = vmatpush.bf16.msra.mxu0 %v325
  %343 = vmatpush.bf16.msra.mxu0 %v324
  %344 = vmatpush.bf16.msra.mxu0 %v323
  %345 = vmatpush.bf16.msra.mxu0 %v322
  %346 = vmatmul.bf16.gmra.mxu0 %v226
  %v347 = vpop.f32.mrf.mxu0
  %v348 = vadd.f32 %v96, %v347
  %v349 = vpop.f32.mrf.mxu0
  %v350 = vadd.f32 %v96, %v349
  %351 = vmatmul.bf16.gmra.mxu0 %v227
  %v352 = vpop.f32.mrf.mxu0
  %v353 = vadd.f32 %v96, %v352
  %v354 = vpop.f32.mrf.mxu0
  %v355 = vadd.f32 %v96, %v354
  %356 = vmatmul.bf16.gmra.mxu0 %v228
  %v357 = vpop.f32.mrf.mxu0
  %v358 = vadd.f32 %v96, %v357
  %v359 = vpop.f32.mrf.mxu0
  %v360 = vadd.f32 %v96, %v359
  %361 = vmatmul.bf16.gmra.mxu0 %v229
  %v362 = vpop.f32.mrf.mxu0
  %v363 = vadd.f32 %v96, %v362
  %v364 = vpop.f32.mrf.mxu0
  %v365 = vadd.f32 %v96, %v364
  %366 = vmatmul.bf16.gmra.mxu0 %v230
  %v367 = vpop.f32.mrf.mxu0
  %v368 = vadd.f32 %v96, %v367
  %v369 = vpop.f32.mrf.mxu0
  %v370 = vadd.f32 %v96, %v369
  %371 = vmatmul.bf16.gmra.mxu0 %v231
  %v372 = vpop.f32.mrf.mxu0
  %v373 = vadd.f32 %v96, %v372
  %v374 = vpop.f32.mrf.mxu0
  %v375 = vadd.f32 %v96, %v374
  %376 = vmatmul.bf16.gmra.mxu0 %v232
  %v377 = vpop.f32.mrf.mxu0
  %v378 = vadd.f32 %v96, %v377
  %v379 = vpop.f32.mrf.mxu0
  %v380 = vadd.f32 %v96, %v379
  %381 = vmatmul.bf16.gmra.mxu0 %v233
  %v382 = vpop.f32.mrf.mxu0
  %v383 = vadd.f32 %v96, %v382
  %v384 = vpop.f32.mrf.mxu0
  %v385 = vadd.f32 %v96, %v384
  %386 = vmatmul.bf16.gmra.mxu0 %v234
  %v387 = vpop.f32.mrf.mxu0
  %v388 = vadd.f32 %v96, %v387
  %v389 = vpop.f32.mrf.mxu0
  %v390 = vadd.f32 %v96, %v389
  %391 = vmatmul.bf16.gmra.mxu0 %v235
  %v392 = vpop.f32.mrf.mxu0
  %v393 = vadd.f32 %v96, %v392
  %v394 = vpop.f32.mrf.mxu0
  %v395 = vadd.f32 %v96, %v394
  %396 = vmatmul.bf16.gmra.mxu0 %v236
  %v397 = vpop.f32.mrf.mxu0
  %v398 = vadd.f32 %v96, %v397
  %v399 = vpop.f32.mrf.mxu0
  %v400 = vadd.f32 %v96, %v399
  %401 = vmatmul.bf16.gmra.mxu0 %v237
  %v402 = vpop.f32.mrf.mxu0
  %v403 = vadd.f32 %v96, %v402
  %v404 = vpop.f32.mrf.mxu0
  %v405 = vadd.f32 %v96, %v404
  %406 = vmatmul.bf16.gmra.mxu0 %v238
  %v407 = vpop.f32.mrf.mxu0
  %v408 = vadd.f32 %v96, %v407
  %v409 = vpop.f32.mrf.mxu0
  %v410 = vadd.f32 %v96, %v409
  %411 = vmatmul.bf16.gmra.mxu0 %v239
  %v412 = vpop.f32.mrf.mxu0
  %v413 = vadd.f32 %v96, %v412
  %v414 = vpop.f32.mrf.mxu0
  %v415 = vadd.f32 %v96, %v414
  %416 = vmatmul.bf16.gmra.mxu0 %v240
  %v417 = vpop.f32.mrf.mxu0
  %v418 = vadd.f32 %v96, %v417
  %v419 = vpop.f32.mrf.mxu0
  %v420 = vadd.f32 %v96, %v419
  %421 = vmatmul.bf16.gmra.mxu0 %v241
  %v422 = vpop.f32.mrf.mxu0
  %v423 = vadd.f32 %v96, %v422
  %v424 = vpop.f32.mrf.mxu0
  %v425 = vadd.f32 %v96, %v424
  %426 = vmatmul.bf16.gmra.mxu0 %v242
  %v427 = vpop.f32.mrf.mxu0
  %v428 = vadd.f32 %v96, %v427
  %v429 = vpop.f32.mrf.mxu0
  %v430 = vadd.f32 %v96, %v429
  %431 = vmatmul.bf16.gmra.mxu0 %v243
  %v432 = vpop.f32.mrf.mxu0
  %v433 = vadd.f32 %v96, %v432
  %v434 = vpop.f32.mrf.mxu0
  %v435 = vadd.f32 %v96, %v434
  %436 = vmatmul.bf16.gmra.mxu0 %v244
  %v437 = vpop.f32.mrf.mxu0
  %v438 = vadd.f32 %v96, %v437
  %v439 = vpop.f32.mrf.mxu0
  %v440 = vadd.f32 %v96, %v439
  %441 = vmatmul.bf16.gmra.mxu0 %v245
  %v442 = vpop.f32.mrf.mxu0
  %v443 = vadd.f32 %v96, %v442
  %v444 = vpop.f32.mrf.mxu0
  %v445 = vadd.f32 %v96, %v444
  %446 = vmatmul.bf16.gmra.mxu0 %v246
  %v447 = vpop.f32.mrf.mxu0
  %v448 = vadd.f32 %v96, %v447
  %v449 = vpop.f32.mrf.mxu0
  %v450 = vadd.f32 %v96, %v449
  %451 = vmatmul.bf16.gmra.mxu0 %v247
  %v452 = vpop.f32.mrf.mxu0
  %v453 = vadd.f32 %v96, %v452
  %v454 = vpop.f32.mrf.mxu0
  %v455 = vadd.f32 %v96, %v454
  %456 = vmatmul.bf16.gmra.mxu0 %v248
  %v457 = vpop.f32.mrf.mxu0
  %v458 = vadd.f32 %v96, %v457
  %v459 = vpop.f32.mrf.mxu0
  %v460 = vadd.f32 %v96, %v459
  %461 = vmatmul.bf16.gmra.mxu0 %v249
  %v462 = vpop.f32.mrf.mxu0
  %v463 = vadd.f32 %v96, %v462
  %v464 = vpop.f32.mrf.mxu0
  %v465 = vadd.f32 %v96, %v464
  %466 = vmatmul.bf16.gmra.mxu0 %v250
  %v467 = vpop.f32.mrf.mxu0
  %v468 = vadd.f32 %v96, %v467
  %v469 = vpop.f32.mrf.mxu0
  %v470 = vadd.f32 %v96, %v469
  %471 = vmatmul.bf16.gmra.mxu0 %v251
  %v472 = vpop.f32.mrf.mxu0
  %v473 = vadd.f32 %v96, %v472
  %v474 = vpop.f32.mrf.mxu0
  %v475 = vadd.f32 %v96, %v474
  %476 = vmatmul.bf16.gmra.mxu0 %v252
  %v477 = vpop.f32.mrf.mxu0
  %v478 = vadd.f32 %v96, %v477
  %v479 = vpop.f32.mrf.mxu0
  %v480 = vadd.f32 %v96, %v479
  %481 = vmatmul.bf16.gmra.mxu0 %v253
  %v482 = vpop.f32.mrf.mxu0
  %v483 = vadd.f32 %v96, %v482
  %v484 = vpop.f32.mrf.mxu0
  %v485 = vadd.f32 %v96, %v484
  %486 = vmatmul.bf16.gmra.mxu0 %v254
  %v487 = vpop.f32.mrf.mxu0
  %v488 = vadd.f32 %v96, %v487
  %v489 = vpop.f32.mrf.mxu0
  %v490 = vadd.f32 %v96, %v489
  %491 = vmatmul.bf16.gmra.mxu0 %v255
  %v492 = vpop.f32.mrf.mxu0
  %v493 = vadd.f32 %v96, %v492
  %v494 = vpop.f32.mrf.mxu0
  %v495 = vadd.f32 %v96, %v494
  %496 = vmatmul.bf16.gmra.mxu0 %v256
  %v497 = vpop.f32.mrf.mxu0
  %v498 = vadd.f32 %v96, %v497
  %v499 = vpop.f32.mrf.mxu0
  %v500 = vadd.f32 %v96, %v499
  %501 = vmatmul.bf16.gmra.mxu0 %v257
  %v502 = vpop.f32.mrf.mxu0
  %v503 = vadd.f32 %v96, %v502
  %v504 = vpop.f32.mrf.mxu0
  %v505 = vadd.f32 %v96, %v504
  %506 = vdwg.mxu0
  %vm507 = vcmp.ge.f32.partialorder %v348, 0.0
  %vm508 = vcmp.ge.f32.partialorder %v350, 0.0
  %vm509 = vcmp.ge.f32.partialorder %v353, 0.0
  %vm510 = vcmp.ge.f32.partialorder %v355, 0.0
  %vm511 = vcmp.ge.f32.partialorder %v358, 0.0
  %vm512 = vcmp.ge.f32.partialorder %v360, 0.0
  %vm513 = vcmp.ge.f32.partialorder %v363, 0.0
  %vm514 = vcmp.ge.f32.partialorder %v365, 0.0
  %vm515 = vcmp.ge.f32.partialorder %v368, 0.0
  %vm516 = vcmp.ge.f32.partialorder %v370, 0.0
  %vm517 = vcmp.ge.f32.partialorder %v373, 0.0
  %vm518 = vcmp.ge.f32.partialorder %v375, 0.0
  %vm519 = vcmp.ge.f32.partialorder %v378, 0.0
  %vm520 = vcmp.ge.f32.partialorder %v380, 0.0
  %vm521 = vcmp.ge.f32.partialorder %v383, 0.0
  %vm522 = vcmp.ge.f32.partialorder %v385, 0.0
  %vm523 = vcmp.ge.f32.partialorder %v388, 0.0
  %vm524 = vcmp.ge.f32.partialorder %v390, 0.0
  %vm525 = vcmp.ge.f32.partialorder %v393, 0.0
  %vm526 = vcmp.ge.f32.partialorder %v395, 0.0
  %vm527 = vcmp.ge.f32.partialorder %v398, 0.0
  %vm528 = vcmp.ge.f32.partialorder %v400, 0.0
  %vm529 = vcmp.ge.f32.partialorder %v403, 0.0
  %vm530 = vcmp.ge.f32.partialorder %v405, 0.0
  %vm531 = vcmp.ge.f32.partialorder %v408, 0.0
  %vm532 = vcmp.ge.f32.partialorder %v410, 0.0
  %vm533 = vcmp.ge.f32.partialorder %v413, 0.0
  %vm534 = vcmp.ge.f32.partialorder %v415, 0.0
  %vm535 = vcmp.ge.f32.partialorder %v418, 0.0
  %vm536 = vcmp.ge.f32.partialorder %v420, 0.0
  %vm537 = vcmp.ge.f32.partialorder %v423, 0.0
  %vm538 = vcmp.ge.f32.partialorder %v425, 0.0
  %vm539 = vcmp.ge.f32.partialorder %v428, 0.0
  %vm540 = vcmp.ge.f32.partialorder %v430, 0.0
  %vm541 = vcmp.ge.f32.partialorder %v433, 0.0
  %vm542 = vcmp.ge.f32.partialorder %v435, 0.0
  %vm543 = vcmp.ge.f32.partialorder %v438, 0.0
  %vm544 = vcmp.ge.f32.partialorder %v440, 0.0
  %vm545 = vcmp.ge.f32.partialorder %v443, 0.0
  %vm546 = vcmp.ge.f32.partialorder %v445, 0.0
  %vm547 = vcmp.ge.f32.partialorder %v448, 0.0
  %vm548 = vcmp.ge.f32.partialorder %v450, 0.0
  %vm549 = vcmp.ge.f32.partialorder %v453, 0.0
  %vm550 = vcmp.ge.f32.partialorder %v455, 0.0
  %vm551 = vcmp.ge.f32.partialorder %v458, 0.0
  %vm552 = vcmp.ge.f32.partialorder %v460, 0.0
  %vm553 = vcmp.ge.f32.partialorder %v463, 0.0
  %vm554 = vcmp.ge.f32.partialorder %v465, 0.0
  %vm555 = vcmp.ge.f32.partialorder %v468, 0.0
  %vm556 = vcmp.ge.f32.partialorder %v470, 0.0
  %vm557 = vcmp.ge.f32.partialorder %v473, 0.0
  %vm558 = vcmp.ge.f32.partialorder %v475, 0.0
  %vm559 = vcmp.ge.f32.partialorder %v478, 0.0
  %vm560 = vcmp.ge.f32.partialorder %v480, 0.0
  %vm561 = vcmp.ge.f32.partialorder %v483, 0.0
  %vm562 = vcmp.ge.f32.partialorder %v485, 0.0
  %vm563 = vcmp.ge.f32.partialorder %v488, 0.0
  %vm564 = vcmp.ge.f32.partialorder %v490, 0.0
  %vm565 = vcmp.ge.f32.partialorder %v493, 0.0
  %vm566 = vcmp.ge.f32.partialorder %v495, 0.0
  %vm567 = vcmp.ge.f32.partialorder %v498, 0.0
  %vm568 = vcmp.ge.f32.partialorder %v500, 0.0
  %vm569 = vcmp.ge.f32.partialorder %v503, 0.0
  %vm570 = vcmp.ge.f32.partialorder %v505, 0.0
  %v571 = vmul.f32 %v348, 0.1
  %v572 = vmul.f32 %v350, 0.1
  %v573 = vmul.f32 %v353, 0.1
  %v574 = vmul.f32 %v355, 0.1
  %v575 = vmul.f32 %v358, 0.1
  %v576 = vmul.f32 %v360, 0.1
  %v577 = vmul.f32 %v363, 0.1
  %v578 = vmul.f32 %v365, 0.1
  %v579 = vmul.f32 %v368, 0.1
  %v580 = vmul.f32 %v370, 0.1
  %v581 = vmul.f32 %v373, 0.1
  %v582 = vmul.f32 %v375, 0.1
  %v583 = vmul.f32 %v378, 0.1
  %v584 = vmul.f32 %v380, 0.1
  %v585 = vmul.f32 %v383, 0.1
  %v586 = vmul.f32 %v385, 0.1
  %v587 = vmul.f32 %v388, 0.1
  %v588 = vmul.f32 %v390, 0.1
  %v589 = vmul.f32 %v393, 0.1
  %v590 = vmul.f32 %v395, 0.1
  %v591 = vmul.f32 %v398, 0.1
  %v592 = vmul.f32 %v400, 0.1
  %v593 = vmul.f32 %v403, 0.1
  %v594 = vmul.f32 %v405, 0.1
  %v595 = vmul.f32 %v408, 0.1
  %v596 = vmul.f32 %v410, 0.1
  %v597 = vmul.f32 %v413, 0.1
  %v598 = vmul.f32 %v415, 0.1
  %v599 = vmul.f32 %v418, 0.1
  %v600 = vmul.f32 %v420, 0.1
  %v601 = vmul.f32 %v423, 0.1
  %v602 = vmul.f32 %v425, 0.1
  %v603 = vmul.f32 %v428, 0.1
  %v604 = vmul.f32 %v430, 0.1
  %v605 = vmul.f32 %v433, 0.1
  %v606 = vmul.f32 %v435, 0.1
  %v607 = vmul.f32 %v438, 0.1
  %v608 = vmul.f32 %v440, 0.1
  %v609 = vmul.f32 %v443, 0.1
  %v610 = vmul.f32 %v445, 0.1
  %v611 = vmul.f32 %v448, 0.1
  %v612 = vmul.f32 %v450, 0.1
  %v613 = vmul.f32 %v453, 0.1
  %v614 = vmul.f32 %v455, 0.1
  %v615 = vmul.f32 %v458, 0.1
  %v616 = vmul.f32 %v460, 0.1
  %v617 = vmul.f32 %v463, 0.1
  %v618 = vmul.f32 %v465, 0.1
  %v619 = vmul.f32 %v468, 0.1
  %v620 = vmul.f32 %v470, 0.1
  %v621 = vmul.f32 %v473, 0.1
  %v622 = vmul.f32 %v475, 0.1
  %v623 = vmul.f32 %v478, 0.1
  %v624 = vmul.f32 %v480, 0.1
  %v625 = vmul.f32 %v483, 0.1
  %v626 = vmul.f32 %v485, 0.1
  %v627 = vmul.f32 %v488, 0.1
  %v628 = vmul.f32 %v490, 0.1
  %v629 = vmul.f32 %v493, 0.1
  %v630 = vmul.f32 %v495, 0.1
  %v631 = vmul.f32 %v498, 0.1
  %v632 = vmul.f32 %v500, 0.1
  %v633 = vmul.f32 %v503, 0.1
  %v634 = vmul.f32 %v505, 0.1
  %v635 = vsel %vm507, %v348, %v571
  %v636 = vsel %vm508, %v350, %v572
  %v637 = vsel %vm509, %v353, %v573
  %v638 = vsel %vm510, %v355, %v574
  %v639 = vsel %vm511, %v358, %v575
  %v640 = vsel %vm512, %v360, %v576
  %v641 = vsel %vm513, %v363, %v577
  %v642 = vsel %vm514, %v365, %v578
  %v643 = vsel %vm515, %v368, %v579
  %v644 = vsel %vm516, %v370, %v580
  %v645 = vsel %vm517, %v373, %v581
  %v646 = vsel %vm518, %v375, %v582
  %v647 = vsel %vm519, %v378, %v583
  %v648 = vsel %vm520, %v380, %v584
  %v649 = vsel %vm521, %v383, %v585
  %v650 = vsel %vm522, %v385, %v586
  %v651 = vsel %vm523, %v388, %v587
  %v652 = vsel %vm524, %v390, %v588
  %v653 = vsel %vm525, %v393, %v589
  %v654 = vsel %vm526, %v395, %v590
  %v655 = vsel %vm527, %v398, %v591
  %v656 = vsel %vm528, %v400, %v592
  %v657 = vsel %vm529, %v403, %v593
  %v658 = vsel %vm530, %v405, %v594
  %v659 = vsel %vm531, %v408, %v595
  %v660 = vsel %vm532, %v410, %v596
  %v661 = vsel %vm533, %v413, %v597
  %v662 = vsel %vm534, %v415, %v598
  %v663 = vsel %vm535, %v418, %v599
  %v664 = vsel %vm536, %v420, %v600
  %v665 = vsel %vm537, %v423, %v601
  %v666 = vsel %vm538, %v425, %v602
  %v667 = vsel %vm539, %v428, %v603
  %v668 = vsel %vm540, %v430, %v604
  %v669 = vsel %vm541, %v433, %v605
  %v670 = vsel %vm542, %v435, %v606
  %v671 = vsel %vm543, %v438, %v607
  %v672 = vsel %vm544, %v440, %v608
  %v673 = vsel %vm545, %v443, %v609
  %v674 = vsel %vm546, %v445, %v610
  %v675 = vsel %vm547, %v448, %v611
  %v676 = vsel %vm548, %v450, %v612
  %v677 = vsel %vm549, %v453, %v613
  %v678 = vsel %vm550, %v455, %v614
  %v679 = vsel %vm551, %v458, %v615
  %v680 = vsel %vm552, %v460, %v616
  %v681 = vsel %vm553, %v463, %v617
  %v682 = vsel %vm554, %v465, %v618
  %v683 = vsel %vm555, %v468, %v619
  %v684 = vsel %vm556, %v470, %v620
  %v685 = vsel %vm557, %v473, %v621
  %v686 = vsel %vm558, %v475, %v622
  %v687 = vsel %vm559, %v478, %v623
  %v688 = vsel %vm560, %v480, %v624
  %v689 = vsel %vm561, %v483, %v625
  %v690 = vsel %vm562, %v485, %v626
  %v691 = vsel %vm563, %v488, %v627
  %v692 = vsel %vm564, %v490, %v628
  %v693 = vsel %vm565, %v493, %v629
  %v694 = vsel %vm566, %v495, %v630
  %v695 = vsel %vm567, %v498, %v631
  %v696 = vsel %vm568, %v500, %v632
  %v697 = vsel %vm569, %v503, %v633
  %v698 = vsel %vm570, %v505, %v634
  %v699 = vpack.c.bf16 %v635, %v635
  %v700 = vpack.c.bf16 %v636, %v636
  %v701 = vpack.c.bf16 %v637, %v637
  %v702 = vpack.c.bf16 %v638, %v638
  %v703 = vpack.c.bf16 %v639, %v639
  %v704 = vpack.c.bf16 %v640, %v640
  %v705 = vpack.c.bf16 %v641, %v641
  %v706 = vpack.c.bf16 %v642, %v642
  %v707 = vpack.c.bf16 %v643, %v643
  %v708 = vpack.c.bf16 %v644, %v644
  %v709 = vpack.c.bf16 %v645, %v645
  %v710 = vpack.c.bf16 %v646, %v646
  %v711 = vpack.c.bf16 %v647, %v647
  %v712 = vpack.c.bf16 %v648, %v648
  %v713 = vpack.c.bf16 %v649, %v649
  %v714 = vpack.c.bf16 %v650, %v650
  %v715 = vpack.c.bf16 %v651, %v651
  %v716 = vpack.c.bf16 %v652, %v652
  %v717 = vpack.c.bf16 %v653, %v653
  %v718 = vpack.c.bf16 %v654, %v654
  %v719 = vpack.c.bf16 %v655, %v655
  %v720 = vpack.c.bf16 %v656, %v656
  %v721 = vpack.c.bf16 %v657, %v657
  %v722 = vpack.c.bf16 %v658, %v658
  %v723 = vpack.c.bf16 %v659, %v659
  %v724 = vpack.c.bf16 %v660, %v660
  %v725 = vpack.c.bf16 %v661, %v661
  %v726 = vpack.c.bf16 %v662, %v662
  %v727 = vpack.c.bf16 %v663, %v663
  %v728 = vpack.c.bf16 %v664, %v664
  %v729 = vpack.c.bf16 %v665, %v665
  %v730 = vpack.c.bf16 %v666, %v666
  %v731 = vpack.c.bf16 %v667, %v667
  %v732 = vpack.c.bf16 %v668, %v668
  %v733 = vpack.c.bf16 %v669, %v669
  %v734 = vpack.c.bf16 %v670, %v670
  %v735 = vpack.c.bf16 %v671, %v671
  %v736 = vpack.c.bf16 %v672, %v672
  %v737 = vpack.c.bf16 %v673, %v673
  %v738 = vpack.c.bf16 %v674, %v674
  %v739 = vpack.c.bf16 %v675, %v675
  %v740 = vpack.c.bf16 %v676, %v676
  %v741 = vpack.c.bf16 %v677, %v677
  %v742 = vpack.c.bf16 %v678, %v678
  %v743 = vpack.c.bf16 %v679, %v679
  %v744 = vpack.c.bf16 %v680, %v680
  %v745 = vpack.c.bf16 %v681, %v681
  %v746 = vpack.c.bf16 %v682, %v682
  %v747 = vpack.c.bf16 %v683, %v683
  %v748 = vpack.c.bf16 %v684, %v684
  %v749 = vpack.c.bf16 %v685, %v685
  %v750 = vpack.c.bf16 %v686, %v686
  %v751 = vpack.c.bf16 %v687, %v687
  %v752 = vpack.c.bf16 %v688, %v688
  %v753 = vpack.c.bf16 %v689, %v689
  %v754 = vpack.c.bf16 %v690, %v690
  %v755 = vpack.c.bf16 %v691, %v691
  %v756 = vpack.c.bf16 %v692, %v692
  %v757 = vpack.c.bf16 %v693, %v693
  %v758 = vpack.c.bf16 %v694, %v694
  %v759 = vpack.c.bf16 %v695, %v695
  %v760 = vpack.c.bf16 %v696, %v696
  %v761 = vpack.c.bf16 %v697, %v697
  %v762 = vpack.c.bf16 %v698, %v698
  %763 = vst [vmem:[%s3] sm:$0xf] %v699
  %764 = vst [vmem:[%s3 + $0x4] sm:$0xf] %v700
  %765 = vst [vmem:[%s3 + $0x8] sm:$0xf] %v701
  %766 = vst [vmem:[%s3 + $0xc] sm:$0xf] %v702
  %767 = vst [vmem:[%s3 + $0x10] sm:$0xf] %v703
  %768 = vst [vmem:[%s3 + $0x14] sm:$0xf] %v704
  %769 = vst [vmem:[%s3 + $0x18] sm:$0xf] %v705
  %770 = vst [vmem:[%s3 + $0x1c] sm:$0xf] %v706
  %771 = vst [vmem:[%s3 + $0x20] sm:$0xf] %v707
  %772 = vst [vmem:[%s3 + $0x24] sm:$0xf] %v708
  %773 = vst [vmem:[%s3 + $0x28] sm:$0xf] %v709
  %774 = vst [vmem:[%s3 + $0x2c] sm:$0xf] %v710
  %775 = vst [vmem:[%s3 + $0x30] sm:$0xf] %v711
  %776 = vst [vmem:[%s3 + $0x34] sm:$0xf] %v712
  %777 = vst [vmem:[%s3 + $0x38] sm:$0xf] %v713
  %778 = vst [vmem:[%s3 + $0x3c] sm:$0xf] %v714
  %779 = vst [vmem:[%s3 + $0x40] sm:$0xf] %v715
  %780 = vst [vmem:[%s3 + $0x44] sm:$0xf] %v716
  %781 = vst [vmem:[%s3 + $0x48] sm:$0xf] %v717
  %782 = vst [vmem:[%s3 + $0x4c] sm:$0xf] %v718
  %783 = vst [vmem:[%s3 + $0x50] sm:$0xf] %v719
  %784 = vst [vmem:[%s3 + $0x54] sm:$0xf] %v720
  %785 = vst [vmem:[%s3 + $0x58] sm:$0xf] %v721
  %786 = vst [vmem:[%s3 + $0x5c] sm:$0xf] %v722
  %787 = vst [vmem:[%s3 + $0x60] sm:$0xf] %v723
  %788 = vst [vmem:[%s3 + $0x64] sm:$0xf] %v724
  %789 = vst [vmem:[%s3 + $0x68] sm:$0xf] %v725
  %790 = vst [vmem:[%s3 + $0x6c] sm:$0xf] %v726
  %791 = vst [vmem:[%s3 + $0x70] sm:$0xf] %v727
  %792 = vst [vmem:[%s3 + $0x74] sm:$0xf] %v728
  %793 = vst [vmem:[%s3 + $0x78] sm:$0xf] %v729
  %794 = vst [vmem:[%s3 + $0x7c] sm:$0xf] %v730
  %795 = vst [vmem:[%s3 + $0x80] sm:$0xf] %v731
  %796 = vst [vmem:[%s3 + $0x84] sm:$0xf] %v732
  %797 = vst [vmem:[%s3 + $0x88] sm:$0xf] %v733
  %798 = vst [vmem:[%s3 + $0x8c] sm:$0xf] %v734
  %799 = vst [vmem:[%s3 + $0x90] sm:$0xf] %v735
  %800 = vst [vmem:[%s3 + $0x94] sm:$0xf] %v736
  %801 = vst [vmem:[%s3 + $0x98] sm:$0xf] %v737
  %802 = vst [vmem:[%s3 + $0x9c] sm:$0xf] %v738
  %803 = vst [vmem:[%s3 + $0xa0] sm:$0xf] %v739
  %804 = vst [vmem:[%s3 + $0xa4] sm:$0xf] %v740
  %805 = vst [vmem:[%s3 + $0xa8] sm:$0xf] %v741
  %806 = vst [vmem:[%s3 + $0xac] sm:$0xf] %v742
  %807 = vst [vmem:[%s3 + $0xb0] sm:$0xf] %v743
  %808 = vst [vmem:[%s3 + $0xb4] sm:$0xf] %v744
  %809 = vst [vmem:[%s3 + $0xb8] sm:$0xf] %v745
  %810 = vst [vmem:[%s3 + $0xbc] sm:$0xf] %v746
  %811 = vst [vmem:[%s3 + $0xc0] sm:$0xf] %v747
  %812 = vst [vmem:[%s3 + $0xc4] sm:$0xf] %v748
  %813 = vst [vmem:[%s3 + $0xc8] sm:$0xf] %v749
  %814 = vst [vmem:[%s3 + $0xcc] sm:$0xf] %v750
  %815 = vst [vmem:[%s3 + $0xd0] sm:$0xf] %v751
  %816 = vst [vmem:[%s3 + $0xd4] sm:$0xf] %v752
  %817 = vst [vmem:[%s3 + $0xd8] sm:$0xf] %v753
  %818 = vst [vmem:[%s3 + $0xdc] sm:$0xf] %v754
  %819 = vst [vmem:[%s3 + $0xe0] sm:$0xf] %v755
  %820 = vst [vmem:[%s3 + $0xe4] sm:$0xf] %v756
  %821 = vst [vmem:[%s3 + $0xe8] sm:$0xf] %v757
  %822 = vst [vmem:[%s3 + $0xec] sm:$0xf] %v758
  %823 = vst [vmem:[%s3 + $0xf0] sm:$0xf] %v759
  %824 = vst [vmem:[%s3 + $0xf4] sm:$0xf] %v760
  %825 = vst [vmem:[%s3 + $0xf8] sm:$0xf] %v761
  %826 = vst [vmem:[%s3 + $0xfc] sm:$0xf] %v762
  // Predicated region
  $region14: #{discriminator_forward.7} parent=0 // pred_check
    _
  $region15: #{discriminator_forward.7} parent=0 // pred_check_branch
    %828 = sbr.rel (0) target = $region17
  $region16: #{discriminator_forward.7} parent=0 // pred_region
    _
  $region17: #{discriminator_forward.7} parent=0 // pred_fallthru
    _
  // Predicated region
  $region18: #{discriminator_forward.7} parent=0 // pred_check
    _
  $region19: #{discriminator_forward.7} parent=0 // pred_check_branch
    %830 = sbr.rel (0) target = $region21
  $region20: #{discriminator_forward.7} parent=0 // pred_region
    _
  $region21: #{discriminator_forward.7} parent=0 // pred_fallthru
    _

// kernel: discriminator_forward.6
$region0: #{discriminator_forward.6}
  #allocation0 [shape = 'u32[]', space=smem, size = 0x4, offset = 0x4, fixed_abs, tag = 'smem constant byte address 0x4 - core index']
  #allocation1 [shape = 'u32[72,128]{1,0:T(1,128)}', space=vmem, size = 0x9000, scoped, tag = 'internal scratch']
  %s0 = inlined_call_operand.vmem [shape: bf16[2048,16], index: 0, kind: input, shape index: {}]
  %s1 = inlined_call_operand.vmem [shape: bf16[16,128], index: 1, kind: input, shape index: {}]
  %s2 = inlined_call_operand.vmem [shape: f32[1,128], index: 2, kind: input, shape index: {}]
  %s3 = inlined_call_operand.vmem [shape: bf16[2048,128], index: 3, kind: output, shape index: {}]
  %s4 = sld [smem:[#allocation0]]
  $region22: #{discriminator_forward.6} parent=0
    _
  %s6 = ssub.s32 1, %s4
  %s7 = scalar_select 0, %s6, %s4
  // Predicated region
  $region2: #{discriminator_forward.6} parent=0 // pred_check
    _
  $region3: #{discriminator_forward.6} parent=0 // pred_check_branch
    %9 = sbr.rel (0) target = $region5
  $region4: #{discriminator_forward.6} parent=0 // pred_region
    _
  $region5: #{discriminator_forward.6} parent=0 // pred_fallthru
    _
  // Predicated region
  $region6: #{discriminator_forward.6} parent=0 // pred_check
    _
  $region7: #{discriminator_forward.6} parent=0 // pred_check_branch
    %11 = sbr.rel (0) target = $region9
  $region8: #{discriminator_forward.6} parent=0 // pred_region
    _
  $region9: #{discriminator_forward.6} parent=0 // pred_fallthru
    _
  // Predicated region
  $region10: #{discriminator_forward.6} parent=0 // pred_check
    _
  $region11: #{discriminator_forward.6} parent=0 // pred_check_branch
    %13 = sbr.rel (0) target = $region13
  $region12: #{discriminator_forward.6} parent=0 // pred_region
    _
  $region13: #{discriminator_forward.6} parent=0 // pred_fallthru
    _
  %v15 = vld [vmem:[%s0] sm:$0xf]
  %v16 = vld [vmem:[%s0 + $0x4] sm:$0xf]
  %v17 = vld [vmem:[%s0 + $0x8] sm:$0xf]
  %v18 = vld [vmem:[%s0 + $0xc] sm:$0xf]
  %v19 = vld [vmem:[%s0 + $0x10] sm:$0xf]
  %v20 = vld [vmem:[%s0 + $0x14] sm:$0xf]
  %v21 = vld [vmem:[%s0 + $0x18] sm:$0xf]
  %v22 = vld [vmem:[%s0 + $0x1c] sm:$0xf]
  %v23 = vld [vmem:[%s0 + $0x20] sm:$0xf]
  %v24 = vld [vmem:[%s0 + $0x24] sm:$0xf]
  %v25 = vld [vmem:[%s0 + $0x28] sm:$0xf]
  %v26 = vld [vmem:[%s0 + $0x2c] sm:$0xf]
  %v27 = vld [vmem:[%s0 + $0x30] sm:$0xf]
  %v28 = vld [vmem:[%s0 + $0x34] sm:$0xf]
  %v29 = vld [vmem:[%s0 + $0x38] sm:$0xf]
  %v30 = vld [vmem:[%s0 + $0x3c] sm:$0xf]
  %v31 = vld [vmem:[%s0 + $0x40] sm:$0xf]
  %v32 = vld [vmem:[%s0 + $0x44] sm:$0xf]
  %v33 = vld [vmem:[%s0 + $0x48] sm:$0xf]
  %v34 = vld [vmem:[%s0 + $0x4c] sm:$0xf]
  %v35 = vld [vmem:[%s0 + $0x50] sm:$0xf]
  %v36 = vld [vmem:[%s0 + $0x54] sm:$0xf]
  %v37 = vld [vmem:[%s0 + $0x58] sm:$0xf]
  %v38 = vld [vmem:[%s0 + $0x5c] sm:$0xf]
  %v39 = vld [vmem:[%s0 + $0x60] sm:$0xf]
  %v40 = vld [vmem:[%s0 + $0x64] sm:$0xf]
  %v41 = vld [vmem:[%s0 + $0x68] sm:$0xf]
  %v42 = vld [vmem:[%s0 + $0x6c] sm:$0xf]
  %v43 = vld [vmem:[%s0 + $0x70] sm:$0xf]
  %v44 = vld [vmem:[%s0 + $0x74] sm:$0xf]
  %v45 = vld [vmem:[%s0 + $0x78] sm:$0xf]
  %v46 = vld [vmem:[%s0 + $0x7c] sm:$0xf]
  %v47 = vld [vmem:[%s0 + $0x80] sm:$0xf]
  %v48 = vld [vmem:[%s0 + $0x84] sm:$0xf]
  %v49 = vld [vmem:[%s0 + $0x88] sm:$0xf]
  %v50 = vld [vmem:[%s0 + $0x8c] sm:$0xf]
  %v51 = vld [vmem:[%s0 + $0x90] sm:$0xf]
  %v52 = vld [vmem:[%s0 + $0x94] sm:$0xf]
  %v53 = vld [vmem:[%s0 + $0x98] sm:$0xf]
  %v54 = vld [vmem:[%s0 + $0x9c] sm:$0xf]
  %v55 = vld [vmem:[%s0 + $0xa0] sm:$0xf]
  %v56 = vld [vmem:[%s0 + $0xa4] sm:$0xf]
  %v57 = vld [vmem:[%s0 + $0xa8] sm:$0xf]
  %v58 = vld [vmem:[%s0 + $0xac] sm:$0xf]
  %v59 = vld [vmem:[%s0 + $0xb0] sm:$0xf]
  %v60 = vld [vmem:[%s0 + $0xb4] sm:$0xf]
  %v61 = vld [vmem:[%s0 + $0xb8] sm:$0xf]
  %v62 = vld [vmem:[%s0 + $0xbc] sm:$0xf]
  %v63 = vld [vmem:[%s0 + $0xc0] sm:$0xf]
  %v64 = vld [vmem:[%s0 + $0xc4] sm:$0xf]
  %v65 = vld [vmem:[%s0 + $0xc8] sm:$0xf]
  %v66 = vld [vmem:[%s0 + $0xcc] sm:$0xf]
  %v67 = vld [vmem:[%s0 + $0xd0] sm:$0xf]
  %v68 = vld [vmem:[%s0 + $0xd4] sm:$0xf]
  %v69 = vld [vmem:[%s0 + $0xd8] sm:$0xf]
  %v70 = vld [vmem:[%s0 + $0xdc] sm:$0xf]
  %v71 = vld [vmem:[%s0 + $0xe0] sm:$0xf]
  %v72 = vld [vmem:[%s0 + $0xe4] sm:$0xf]
  %v73 = vld [vmem:[%s0 + $0xe8] sm:$0xf]
  %v74 = vld [vmem:[%s0 + $0xec] sm:$0xf]
  %v75 = vld [vmem:[%s0 + $0xf0] sm:$0xf]
  %v76 = vld [vmem:[%s0 + $0xf4] sm:$0xf]
  %v77 = vld [vmem:[%s0 + $0xf8] sm:$0xf]
  %v78 = vld [vmem:[%s0 + $0xfc] sm:$0xf]
  %v79 = vld [vmem:[%s0 + $0x100] sm:$0xf]
  %v80 = vld [vmem:[%s0 + $0x104] sm:$0xf]
  %v81 = vld [vmem:[%s0 + $0x108] sm:$0xf]
  %v82 = vld [vmem:[%s0 + $0x10c] sm:$0xf]
  %v83 = vld [vmem:[%s0 + $0x110] sm:$0xf]
  %v84 = vld [vmem:[%s0 + $0x114] sm:$0xf]
  %v85 = vld [vmem:[%s0 + $0x118] sm:$0xf]
  %v86 = vld [vmem:[%s0 + $0x11c] sm:$0xf]
  %v87 = vld [vmem:[%s0 + $0x120] sm:$0xf]
  %v88 = vld [vmem:[%s0 + $0x124] sm:$0xf]
  %v89 = vld [vmem:[%s0 + $0x128] sm:$0xf]
  %v90 = vld [vmem:[%s0 + $0x12c] sm:$0xf]
  %v91 = vld [vmem:[%s0 + $0x130] sm:$0xf]
  %v92 = vld [vmem:[%s0 + $0x134] sm:$0xf]
  %v93 = vld [vmem:[%s0 + $0x138] sm:$0xf]
  %v94 = vld [vmem:[%s0 + $0x13c] sm:$0xf]
  %v95 = vld [vmem:[%s0 + $0x140] sm:$0xf]
  %v96 = vld [vmem:[%s0 + $0x144] sm:$0xf]
  %v97 = vld [vmem:[%s0 + $0x148] sm:$0xf]
  %v98 = vld [vmem:[%s0 + $0x14c] sm:$0xf]
  %v99 = vld [vmem:[%s0 + $0x150] sm:$0xf]
  %v100 = vld [vmem:[%s0 + $0x154] sm:$0xf]
  %v101 = vld [vmem:[%s0 + $0x158] sm:$0xf]
  %v102 = vld [vmem:[%s0 + $0x15c] sm:$0xf]
  %v103 = vld [vmem:[%s0 + $0x160] sm:$0xf]
  %v104 = vld [vmem:[%s0 + $0x164] sm:$0xf]
  %v105 = vld [vmem:[%s0 + $0x168] sm:$0xf]
  %v106 = vld [vmem:[%s0 + $0x16c] sm:$0xf]
  %v107 = vld [vmem:[%s0 + $0x170] sm:$0xf]
  %v108 = vld [vmem:[%s0 + $0x174] sm:$0xf]
  %v109 = vld [vmem:[%s0 + $0x178] sm:$0xf]
  %v110 = vld [vmem:[%s0 + $0x17c] sm:$0xf]
  %v111 = vld [vmem:[%s0 + $0x180] sm:$0xf]
  %v112 = vld [vmem:[%s0 + $0x184] sm:$0xf]
  %v113 = vld [vmem:[%s0 + $0x188] sm:$0xf]
  %v114 = vld [vmem:[%s0 + $0x18c] sm:$0xf]
  %v115 = vld [vmem:[%s0 + $0x190] sm:$0xf]
  %v116 = vld [vmem:[%s0 + $0x194] sm:$0xf]
  %v117 = vld [vmem:[%s0 + $0x198] sm:$0xf]
  %v118 = vld [vmem:[%s0 + $0x19c] sm:$0xf]
  %v119 = vld [vmem:[%s0 + $0x1a0] sm:$0xf]
  %v120 = vld [vmem:[%s0 + $0x1a4] sm:$0xf]
  %v121 = vld [vmem:[%s0 + $0x1a8] sm:$0xf]
  %v122 = vld [vmem:[%s0 + $0x1ac] sm:$0xf]
  %v123 = vld [vmem:[%s0 + $0x1b0] sm:$0xf]
  %v124 = vld [vmem:[%s0 + $0x1b4] sm:$0xf]
  %v125 = vld [vmem:[%s0 + $0x1b8] sm:$0xf]
  %v126 = vld [vmem:[%s0 + $0x1bc] sm:$0xf]
  %v127 = vld [vmem:[%s0 + $0x1c0] sm:$0xf]
  %v128 = vld [vmem:[%s0 + $0x1c4] sm:$0xf]
  %v129 = vld [vmem:[%s0 + $0x1c8] sm:$0xf]
  %v130 = vld [vmem:[%s0 + $0x1cc] sm:$0xf]
  %v131 = vld [vmem:[%s0 + $0x1d0] sm:$0xf]
  %v132 = vld [vmem:[%s0 + $0x1d4] sm:$0xf]
  %v133 = vld [vmem:[%s0 + $0x1d8] sm:$0xf]
  %v134 = vld [vmem:[%s0 + $0x1dc] sm:$0xf]
  %v135 = vld [vmem:[%s0 + $0x1e0] sm:$0xf]
  %v136 = vld [vmem:[%s0 + $0x1e4] sm:$0xf]
  %v137 = vld [vmem:[%s0 + $0x1e8] sm:$0xf]
  %v138 = vld [vmem:[%s0 + $0x1ec] sm:$0xf]
  %v139 = vld [vmem:[%s0 + $0x1f0] sm:$0xf]
  %v140 = vld [vmem:[%s0 + $0x1f4] sm:$0xf]
  %v141 = vld [vmem:[%s0 + $0x1f8] sm:$0xf]
  %v142 = vld [vmem:[%s0 + $0x1fc] sm:$0xf]
  %v143 = vld [vmem:[%s0 + $0x200] sm:$0xf]
  %v144 = vld [vmem:[%s0 + $0x204] sm:$0xf]
  %v145 = vld [vmem:[%s0 + $0x208] sm:$0xf]
  %v146 = vld [vmem:[%s0 + $0x20c] sm:$0xf]
  %v147 = vld [vmem:[%s0 + $0x210] sm:$0xf]
  %v148 = vld [vmem:[%s0 + $0x214] sm:$0xf]
  %v149 = vld [vmem:[%s0 + $0x218] sm:$0xf]
  %v150 = vld [vmem:[%s0 + $0x21c] sm:$0xf]
  %v151 = vld [vmem:[%s0 + $0x220] sm:$0xf]
  %v152 = vld [vmem:[%s0 + $0x224] sm:$0xf]
  %v153 = vld [vmem:[%s0 + $0x228] sm:$0xf]
  %v154 = vld [vmem:[%s0 + $0x22c] sm:$0xf]
  %v155 = vld [vmem:[%s0 + $0x230] sm:$0xf]
  %v156 = vld [vmem:[%s0 + $0x234] sm:$0xf]
  %v157 = vld [vmem:[%s0 + $0x238] sm:$0xf]
  %v158 = vld [vmem:[%s0 + $0x23c] sm:$0xf]
  %v159 = vld [vmem:[%s0 + $0x240] sm:$0xf]
  %v160 = vld [vmem:[%s0 + $0x244] sm:$0xf]
  %v161 = vld [vmem:[%s0 + $0x248] sm:$0xf]
  %v162 = vld [vmem:[%s0 + $0x24c] sm:$0xf]
  %v163 = vld [vmem:[%s0 + $0x250] sm:$0xf]
  %v164 = vld [vmem:[%s0 + $0x254] sm:$0xf]
  %v165 = vld [vmem:[%s0 + $0x258] sm:$0xf]
  %v166 = vld [vmem:[%s0 + $0x25c] sm:$0xf]
  %v167 = vld [vmem:[%s0 + $0x260] sm:$0xf]
  %v168 = vld [vmem:[%s0 + $0x264] sm:$0xf]
  %v169 = vld [vmem:[%s0 + $0x268] sm:$0xf]
  %v170 = vld [vmem:[%s0 + $0x26c] sm:$0xf]
  %v171 = vld [vmem:[%s0 + $0x270] sm:$0xf]
  %v172 = vld [vmem:[%s0 + $0x274] sm:$0xf]
  %v173 = vld [vmem:[%s0 + $0x278] sm:$0xf]
  %v174 = vld [vmem:[%s0 + $0x27c] sm:$0xf]
  %v175 = vld [vmem:[%s0 + $0x280] sm:$0xf]
  %v176 = vld [vmem:[%s0 + $0x284] sm:$0xf]
  %v177 = vld [vmem:[%s0 + $0x288] sm:$0xf]
  %v178 = vld [vmem:[%s0 + $0x28c] sm:$0xf]
  %v179 = vld [vmem:[%s0 + $0x290] sm:$0xf]
  %v180 = vld [vmem:[%s0 + $0x294] sm:$0xf]
  %v181 = vld [vmem:[%s0 + $0x298] sm:$0xf]
  %v182 = vld [vmem:[%s0 + $0x29c] sm:$0xf]
  %v183 = vld [vmem:[%s0 + $0x2a0] sm:$0xf]
  %v184 = vld [vmem:[%s0 + $0x2a4] sm:$0xf]
  %v185 = vld [vmem:[%s0 + $0x2a8] sm:$0xf]
  %v186 = vld [vmem:[%s0 + $0x2ac] sm:$0xf]
  %v187 = vld [vmem:[%s0 + $0x2b0] sm:$0xf]
  %v188 = vld [vmem:[%s0 + $0x2b4] sm:$0xf]
  %v189 = vld [vmem:[%s0 + $0x2b8] sm:$0xf]
  %v190 = vld [vmem:[%s0 + $0x2bc] sm:$0xf]
  %v191 = vld [vmem:[%s0 + $0x2c0] sm:$0xf]
  %v192 = vld [vmem:[%s0 + $0x2c4] sm:$0xf]
  %v193 = vld [vmem:[%s0 + $0x2c8] sm:$0xf]
  %v194 = vld [vmem:[%s0 + $0x2cc] sm:$0xf]
  %v195 = vld [vmem:[%s0 + $0x2d0] sm:$0xf]
  %v196 = vld [vmem:[%s0 + $0x2d4] sm:$0xf]
  %v197 = vld [vmem:[%s0 + $0x2d8] sm:$0xf]
  %v198 = vld [vmem:[%s0 + $0x2dc] sm:$0xf]
  %v199 = vld [vmem:[%s0 + $0x2e0] sm:$0xf]
  %v200 = vld [vmem:[%s0 + $0x2e4] sm:$0xf]
  %v201 = vld [vmem:[%s0 + $0x2e8] sm:$0xf]
  %v202 = vld [vmem:[%s0 + $0x2ec] sm:$0xf]
  %v203 = vld [vmem:[%s0 + $0x2f0] sm:$0xf]
  %v204 = vld [vmem:[%s0 + $0x2f4] sm:$0xf]
  %v205 = vld [vmem:[%s0 + $0x2f8] sm:$0xf]
  %v206 = vld [vmem:[%s0 + $0x2fc] sm:$0xf]
  %v207 = vld [vmem:[%s0 + $0x300] sm:$0xf]
  %v208 = vld [vmem:[%s0 + $0x304] sm:$0xf]
  %v209 = vld [vmem:[%s0 + $0x308] sm:$0xf]
  %v210 = vld [vmem:[%s0 + $0x30c] sm:$0xf]
  %v211 = vld [vmem:[%s0 + $0x310] sm:$0xf]
  %v212 = vld [vmem:[%s0 + $0x314] sm:$0xf]
  %v213 = vld [vmem:[%s0 + $0x318] sm:$0xf]
  %v214 = vld [vmem:[%s0 + $0x31c] sm:$0xf]
  %v215 = vld [vmem:[%s0 + $0x320] sm:$0xf]
  %v216 = vld [vmem:[%s0 + $0x324] sm:$0xf]
  %v217 = vld [vmem:[%s0 + $0x328] sm:$0xf]
  %v218 = vld [vmem:[%s0 + $0x32c] sm:$0xf]
  %v219 = vld [vmem:[%s0 + $0x330] sm:$0xf]
  %v220 = vld [vmem:[%s0 + $0x334] sm:$0xf]
  %v221 = vld [vmem:[%s0 + $0x338] sm:$0xf]
  %v222 = vld [vmem:[%s0 + $0x33c] sm:$0xf]
  %v223 = vld [vmem:[%s0 + $0x340] sm:$0xf]
  %v224 = vld [vmem:[%s0 + $0x344] sm:$0xf]
  %v225 = vld [vmem:[%s0 + $0x348] sm:$0xf]
  %v226 = vld [vmem:[%s0 + $0x34c] sm:$0xf]
  %v227 = vld [vmem:[%s0 + $0x350] sm:$0xf]
  %v228 = vld [vmem:[%s0 + $0x354] sm:$0xf]
  %v229 = vld [vmem:[%s0 + $0x358] sm:$0xf]
  %v230 = vld [vmem:[%s0 + $0x35c] sm:$0xf]
  %v231 = vld [vmem:[%s0 + $0x360] sm:$0xf]
  %v232 = vld [vmem:[%s0 + $0x364] sm:$0xf]
  %v233 = vld [vmem:[%s0 + $0x368] sm:$0xf]
  %v234 = vld [vmem:[%s0 + $0x36c] sm:$0xf]
  %v235 = vld [vmem:[%s0 + $0x370] sm:$0xf]
  %v236 = vld [vmem:[%s0 + $0x374] sm:$0xf]
  %v237 = vld [vmem:[%s0 + $0x378] sm:$0xf]
  %v238 = vld [vmem:[%s0 + $0x37c] sm:$0xf]
  %v239 = vld [vmem:[%s0 + $0x380] sm:$0xf]
  %v240 = vld [vmem:[%s0 + $0x384] sm:$0xf]
  %v241 = vld [vmem:[%s0 + $0x388] sm:$0xf]
  %v242 = vld [vmem:[%s0 + $0x38c] sm:$0xf]
  %v243 = vld [vmem:[%s0 + $0x390] sm:$0xf]
  %v244 = vld [vmem:[%s0 + $0x394] sm:$0xf]
  %v245 = vld [vmem:[%s0 + $0x398] sm:$0xf]
  %v246 = vld [vmem:[%s0 + $0x39c] sm:$0xf]
  %v247 = vld [vmem:[%s0 + $0x3a0] sm:$0xf]
  %v248 = vld [vmem:[%s0 + $0x3a4] sm:$0xf]
  %v249 = vld [vmem:[%s0 + $0x3a8] sm:$0xf]
  %v250 = vld [vmem:[%s0 + $0x3ac] sm:$0xf]
  %v251 = vld [vmem:[%s0 + $0x3b0] sm:$0xf]
  %v252 = vld [vmem:[%s0 + $0x3b4] sm:$0xf]
  %v253 = vld [vmem:[%s0 + $0x3b8] sm:$0xf]
  %v254 = vld [vmem:[%s0 + $0x3bc] sm:$0xf]
  %v255 = vld [vmem:[%s0 + $0x3c0] sm:$0xf]
  %v256 = vld [vmem:[%s0 + $0x3c4] sm:$0xf]
  %v257 = vld [vmem:[%s0 + $0x3c8] sm:$0xf]
  %v258 = vld [vmem:[%s0 + $0x3cc] sm:$0xf]
  %v259 = vld [vmem:[%s0 + $0x3d0] sm:$0xf]
  %v260 = vld [vmem:[%s0 + $0x3d4] sm:$0xf]
  %v261 = vld [vmem:[%s0 + $0x3d8] sm:$0xf]
  %v262 = vld [vmem:[%s0 + $0x3dc] sm:$0xf]
  %v263 = vld [vmem:[%s0 + $0x3e0] sm:$0xf]
  %v264 = vld [vmem:[%s0 + $0x3e4] sm:$0xf]
  %v265 = vld [vmem:[%s0 + $0x3e8] sm:$0xf]
  %v266 = vld [vmem:[%s0 + $0x3ec] sm:$0xf]
  %v267 = vld [vmem:[%s0 + $0x3f0] sm:$0xf]
  %v268 = vld [vmem:[%s0 + $0x3f4] sm:$0xf]
  %v269 = vld [vmem:[%s0 + $0x3f8] sm:$0xf]
  %v270 = vld [vmem:[%s0 + $0x3fc] sm:$0xf]
  %v271 = vld [vmem:[%s1] sm:$0xf]
  %v272 = vld [vmem:[%s1 + $0x4] sm:$0xf]
  %v273 = vld [vmem:[%s2] sm:$0x1]
  %v275 = vperm.slane %v273, 0
  %v533 = vunpack.c.l.b16 %v15
  %v534 = vunpack.c.l.b16 %v16
  %v535 = vunpack.c.l.b16 %v17
  %v536 = vunpack.c.l.b16 %v18
  %v537 = vunpack.c.l.b16 %v19
  %v538 = vunpack.c.l.b16 %v20
  %v539 = vunpack.c.l.b16 %v21
  %v540 = vunpack.c.l.b16 %v22
  %v541 = vunpack.c.l.b16 %v23
  %v542 = vunpack.c.l.b16 %v24
  %v543 = vunpack.c.l.b16 %v25
  %v544 = vunpack.c.l.b16 %v26
  %v545 = vunpack.c.l.b16 %v27
  %v546 = vunpack.c.l.b16 %v28
  %v547 = vunpack.c.l.b16 %v29
  %v548 = vunpack.c.l.b16 %v30
  %v549 = vunpack.c.l.b16 %v31
  %v550 = vunpack.c.l.b16 %v32
  %v551 = vunpack.c.l.b16 %v33
  %v552 = vunpack.c.l.b16 %v34
  %v553 = vunpack.c.l.b16 %v35
  %v554 = vunpack.c.l.b16 %v36
  %v555 = vunpack.c.l.b16 %v37
  %v556 = vunpack.c.l.b16 %v38
  %v557 = vunpack.c.l.b16 %v39
  %v558 = vunpack.c.l.b16 %v40
  %v559 = vunpack.c.l.b16 %v41
  %v560 = vunpack.c.l.b16 %v42
  %v561 = vunpack.c.l.b16 %v43
  %v562 = vunpack.c.l.b16 %v44
  %v563 = vunpack.c.l.b16 %v45
  %v564 = vunpack.c.l.b16 %v46
  %v565 = vunpack.c.l.b16 %v47
  %v566 = vunpack.c.l.b16 %v48
  %v567 = vunpack.c.l.b16 %v49
  %v568 = vunpack.c.l.b16 %v50
  %v569 = vunpack.c.l.b16 %v51
  %v570 = vunpack.c.l.b16 %v52
  %v571 = vunpack.c.l.b16 %v53
  %v572 = vunpack.c.l.b16 %v54
  %v573 = vunpack.c.l.b16 %v55
  %v574 = vunpack.c.l.b16 %v56
  %v575 = vunpack.c.l.b16 %v57
  %v576 = vunpack.c.l.b16 %v58
  %v577 = vunpack.c.l.b16 %v59
  %v578 = vunpack.c.l.b16 %v60
  %v579 = vunpack.c.l.b16 %v61
  %v580 = vunpack.c.l.b16 %v62
  %v581 = vunpack.c.l.b16 %v63
  %v582 = vunpack.c.l.b16 %v64
  %v583 = vunpack.c.l.b16 %v65
  %v584 = vunpack.c.l.b16 %v66
  %v585 = vunpack.c.l.b16 %v67
  %v586 = vunpack.c.l.b16 %v68
  %v587 = vunpack.c.l.b16 %v69
  %v588 = vunpack.c.l.b16 %v70
  %v589 = vunpack.c.l.b16 %v71
  %v590 = vunpack.c.l.b16 %v72
  %v591 = vunpack.c.l.b16 %v73
  %v592 = vunpack.c.l.b16 %v74
  %v593 = vunpack.c.l.b16 %v75
  %v594 = vunpack.c.l.b16 %v76
  %v595 = vunpack.c.l.b16 %v77
  %v596 = vunpack.c.l.b16 %v78
  %v597 = vunpack.c.l.b16 %v79
  %v598 = vunpack.c.l.b16 %v80
  %v599 = vunpack.c.l.b16 %v81
  %v600 = vunpack.c.l.b16 %v82
  %v601 = vunpack.c.l.b16 %v83
  %v602 = vunpack.c.l.b16 %v84
  %v603 = vunpack.c.l.b16 %v85
  %v604 = vunpack.c.l.b16 %v86
  %v605 = vunpack.c.l.b16 %v87
  %v606 = vunpack.c.l.b16 %v88
  %v607 = vunpack.c.l.b16 %v89
  %v608 = vunpack.c.l.b16 %v90
  %v609 = vunpack.c.l.b16 %v91
  %v610 = vunpack.c.l.b16 %v92
  %v611 = vunpack.c.l.b16 %v93
  %v612 = vunpack.c.l.b16 %v94
  %v613 = vunpack.c.l.b16 %v95
  %v614 = vunpack.c.l.b16 %v96
  %v615 = vunpack.c.l.b16 %v97
  %v616 = vunpack.c.l.b16 %v98
  %v617 = vunpack.c.l.b16 %v99
  %v618 = vunpack.c.l.b16 %v100
  %v619 = vunpack.c.l.b16 %v101
  %v620 = vunpack.c.l.b16 %v102
  %v621 = vunpack.c.l.b16 %v103
  %v622 = vunpack.c.l.b16 %v104
  %v623 = vunpack.c.l.b16 %v105
  %v624 = vunpack.c.l.b16 %v106
  %v625 = vunpack.c.l.b16 %v107
  %v626 = vunpack.c.l.b16 %v108
  %v627 = vunpack.c.l.b16 %v109
  %v628 = vunpack.c.l.b16 %v110
  %v629 = vunpack.c.l.b16 %v111
  %v630 = vunpack.c.l.b16 %v112
  %v631 = vunpack.c.l.b16 %v113
  %v632 = vunpack.c.l.b16 %v114
  %v633 = vunpack.c.l.b16 %v115
  %v634 = vunpack.c.l.b16 %v116
  %v635 = vunpack.c.l.b16 %v117
  %v636 = vunpack.c.l.b16 %v118
  %v637 = vunpack.c.l.b16 %v119
  %v638 = vunpack.c.l.b16 %v120
  %v639 = vunpack.c.l.b16 %v121
  %v640 = vunpack.c.l.b16 %v122
  %v641 = vunpack.c.l.b16 %v123
  %v642 = vunpack.c.l.b16 %v124
  %v643 = vunpack.c.l.b16 %v125
  %v644 = vunpack.c.l.b16 %v126
  %v645 = vunpack.c.l.b16 %v127
  %v646 = vunpack.c.l.b16 %v128
  %v647 = vunpack.c.l.b16 %v129
  %v648 = vunpack.c.l.b16 %v130
  %v649 = vunpack.c.l.b16 %v131
  %v650 = vunpack.c.l.b16 %v132
  %v651 = vunpack.c.l.b16 %v133
  %v652 = vunpack.c.l.b16 %v134
  %v653 = vunpack.c.l.b16 %v135
  %v654 = vunpack.c.l.b16 %v136
  %v655 = vunpack.c.l.b16 %v137
  %v656 = vunpack.c.l.b16 %v138
  %v657 = vunpack.c.l.b16 %v139
  %v658 = vunpack.c.l.b16 %v140
  %v659 = vunpack.c.l.b16 %v141
  %v660 = vunpack.c.l.b16 %v142
  %v661 = vunpack.c.l.b16 %v143
  %v662 = vunpack.c.l.b16 %v144
  %v663 = vunpack.c.l.b16 %v145
  %v664 = vunpack.c.l.b16 %v146
  %v665 = vunpack.c.l.b16 %v147
  %v666 = vunpack.c.l.b16 %v148
  %v667 = vunpack.c.l.b16 %v149
  %v668 = vunpack.c.l.b16 %v150
  %v669 = vunpack.c.l.b16 %v151
  %v670 = vunpack.c.l.b16 %v152
  %v671 = vunpack.c.l.b16 %v153
  %v672 = vunpack.c.l.b16 %v154
  %v673 = vunpack.c.l.b16 %v155
  %v674 = vunpack.c.l.b16 %v156
  %v675 = vunpack.c.l.b16 %v157
  %v676 = vunpack.c.l.b16 %v158
  %v677 = vunpack.c.l.b16 %v159
  %v678 = vunpack.c.l.b16 %v160
  %v679 = vunpack.c.l.b16 %v161
  %v680 = vunpack.c.l.b16 %v162
  %v681 = vunpack.c.l.b16 %v163
  %v682 = vunpack.c.l.b16 %v164
  %v683 = vunpack.c.l.b16 %v165
  %v684 = vunpack.c.l.b16 %v166
  %v685 = vunpack.c.l.b16 %v167
  %v686 = vunpack.c.l.b16 %v168
  %v687 = vunpack.c.l.b16 %v169
  %v688 = vunpack.c.l.b16 %v170
  %v689 = vunpack.c.l.b16 %v171
  %v690 = vunpack.c.l.b16 %v172
  %v691 = vunpack.c.l.b16 %v173
  %v692 = vunpack.c.l.b16 %v174
  %v693 = vunpack.c.l.b16 %v175
  %v694 = vunpack.c.l.b16 %v176
  %v695 = vunpack.c.l.b16 %v177
  %v696 = vunpack.c.l.b16 %v178
  %v697 = vunpack.c.l.b16 %v179
  %v698 = vunpack.c.l.b16 %v180
  %v699 = vunpack.c.l.b16 %v181
  %v700 = vunpack.c.l.b16 %v182
  %v701 = vunpack.c.l.b16 %v183
  %v702 = vunpack.c.l.b16 %v184
  %v703 = vunpack.c.l.b16 %v185
  %v704 = vunpack.c.l.b16 %v186
  %v705 = vunpack.c.l.b16 %v187
  %v706 = vunpack.c.l.b16 %v188
  %v707 = vunpack.c.l.b16 %v189
  %v708 = vunpack.c.l.b16 %v190
  %v709 = vunpack.c.l.b16 %v191
  %v710 = vunpack.c.l.b16 %v192
  %v711 = vunpack.c.l.b16 %v193
  %v712 = vunpack.c.l.b16 %v194
  %v713 = vunpack.c.l.b16 %v195
  %v714 = vunpack.c.l.b16 %v196
  %v715 = vunpack.c.l.b16 %v197
  %v716 = vunpack.c.l.b16 %v198
  %v717 = vunpack.c.l.b16 %v199
  %v718 = vunpack.c.l.b16 %v200
  %v719 = vunpack.c.l.b16 %v201
  %v720 = vunpack.c.l.b16 %v202
  %v721 = vunpack.c.l.b16 %v203
  %v722 = vunpack.c.l.b16 %v204
  %v723 = vunpack.c.l.b16 %v205
  %v724 = vunpack.c.l.b16 %v206
  %v725 = vunpack.c.l.b16 %v207
  %v726 = vunpack.c.l.b16 %v208
  %v727 = vunpack.c.l.b16 %v209
  %v728 = vunpack.c.l.b16 %v210
  %v729 = vunpack.c.l.b16 %v211
  %v730 = vunpack.c.l.b16 %v212
  %v731 = vunpack.c.l.b16 %v213
  %v732 = vunpack.c.l.b16 %v214
  %v733 = vunpack.c.l.b16 %v215
  %v734 = vunpack.c.l.b16 %v216
  %v735 = vunpack.c.l.b16 %v217
  %v736 = vunpack.c.l.b16 %v218
  %v737 = vunpack.c.l.b16 %v219
  %v738 = vunpack.c.l.b16 %v220
  %v739 = vunpack.c.l.b16 %v221
  %v740 = vunpack.c.l.b16 %v222
  %v741 = vunpack.c.l.b16 %v223
  %v742 = vunpack.c.l.b16 %v224
  %v743 = vunpack.c.l.b16 %v225
  %v744 = vunpack.c.l.b16 %v226
  %v745 = vunpack.c.l.b16 %v227
  %v746 = vunpack.c.l.b16 %v228
  %v747 = vunpack.c.l.b16 %v229
  %v748 = vunpack.c.l.b16 %v230
  %v749 = vunpack.c.l.b16 %v231
  %v750 = vunpack.c.l.b16 %v232
  %v751 = vunpack.c.l.b16 %v233
  %v752 = vunpack.c.l.b16 %v234
  %v753 = vunpack.c.l.b16 %v235
  %v754 = vunpack.c.l.b16 %v236
  %v755 = vunpack.c.l.b16 %v237
  %v756 = vunpack.c.l.b16 %v238
  %v757 = vunpack.c.l.b16 %v239
  %v758 = vunpack.c.l.b16 %v240
  %v759 = vunpack.c.l.b16 %v241
  %v760 = vunpack.c.l.b16 %v242
  %v761 = vunpack.c.l.b16 %v243
  %v762 = vunpack.c.l.b16 %v244
  %v763 = vunpack.c.l.b16 %v245
  %v764 = vunpack.c.l.b16 %v246
  %v765 = vunpack.c.l.b16 %v247
  %v766 = vunpack.c.l.b16 %v248
  %v767 = vunpack.c.l.b16 %v249
  %v768 = vunpack.c.l.b16 %v250
  %v769 = vunpack.c.l.b16 %v251
  %v770 = vunpack.c.l.b16 %v252
  %v771 = vunpack.c.l.b16 %v253
  %v772 = vunpack.c.l.b16 %v254
  %v773 = vunpack.c.l.b16 %v255
  %v774 = vunpack.c.l.b16 %v256
  %v775 = vunpack.c.l.b16 %v257
  %v776 = vunpack.c.l.b16 %v258
  %v777 = vunpack.c.l.b16 %v259
  %v778 = vunpack.c.l.b16 %v260
  %v779 = vunpack.c.l.b16 %v261
  %v780 = vunpack.c.l.b16 %v262
  %v781 = vunpack.c.l.b16 %v263
  %v782 = vunpack.c.l.b16 %v264
  %v783 = vunpack.c.l.b16 %v265
  %v784 = vunpack.c.l.b16 %v266
  %v785 = vunpack.c.l.b16 %v267
  %v786 = vunpack.c.l.b16 %v268
  %v787 = vunpack.c.l.b16 %v269
  %v788 = vunpack.c.l.b16 %v270
  %v789 = vpack.c.b16 %v534, %v533
  %v790 = vpack.c.b16 %v536, %v535
  %v791 = vpack.c.b16 %v538, %v537
  %v792 = vpack.c.b16 %v540, %v539
  %v793 = vpack.c.b16 %v542, %v541
  %v794 = vpack.c.b16 %v544, %v543
  %v795 = vpack.c.b16 %v546, %v545
  %v796 = vpack.c.b16 %v548, %v547
  %v797 = vpack.c.b16 %v550, %v549
  %v798 = vpack.c.b16 %v552, %v551
  %v799 = vpack.c.b16 %v554, %v553
  %v800 = vpack.c.b16 %v556, %v555
  %v801 = vpack.c.b16 %v558, %v557
  %v802 = vpack.c.b16 %v560, %v559
  %v803 = vpack.c.b16 %v562, %v561
  %v804 = vpack.c.b16 %v564, %v563
  %v805 = vpack.c.b16 %v566, %v565
  %v806 = vpack.c.b16 %v568, %v567
  %v807 = vpack.c.b16 %v570, %v569
  %v808 = vpack.c.b16 %v572, %v571
  %v809 = vpack.c.b16 %v574, %v573
  %v810 = vpack.c.b16 %v576, %v575
  %v811 = vpack.c.b16 %v578, %v577
  %v812 = vpack.c.b16 %v580, %v579
  %v813 = vpack.c.b16 %v582, %v581
  %v814 = vpack.c.b16 %v584, %v583
  %v815 = vpack.c.b16 %v586, %v585
  %v816 = vpack.c.b16 %v588, %v587
  %v817 = vpack.c.b16 %v590, %v589
  %v818 = vpack.c.b16 %v592, %v591
  %v819 = vpack.c.b16 %v594, %v593
  %v820 = vpack.c.b16 %v596, %v595
  %v821 = vpack.c.b16 %v598, %v597
  %v822 = vpack.c.b16 %v600, %v599
  %v823 = vpack.c.b16 %v602, %v601
  %v824 = vpack.c.b16 %v604, %v603
  %v825 = vpack.c.b16 %v606, %v605
  %v826 = vpack.c.b16 %v608, %v607
  %v827 = vpack.c.b16 %v610, %v609
  %v828 = vpack.c.b16 %v612, %v611
  %v829 = vpack.c.b16 %v614, %v613
  %v830 = vpack.c.b16 %v616, %v615
  %v831 = vpack.c.b16 %v618, %v617
  %v832 = vpack.c.b16 %v620, %v619
  %v833 = vpack.c.b16 %v622, %v621
  %v834 = vpack.c.b16 %v624, %v623
  %v835 = vpack.c.b16 %v626, %v625
  %v836 = vpack.c.b16 %v628, %v627
  %v837 = vpack.c.b16 %v630, %v629
  %v838 = vpack.c.b16 %v632, %v631
  %v839 = vpack.c.b16 %v634, %v633
  %v840 = vpack.c.b16 %v636, %v635
  %v841 = vpack.c.b16 %v638, %v637
  %v842 = vpack.c.b16 %v640, %v639
  %v843 = vpack.c.b16 %v642, %v641
  %v844 = vpack.c.b16 %v644, %v643
  %v845 = vpack.c.b16 %v646, %v645
  %v846 = vpack.c.b16 %v648, %v647
  %v847 = vpack.c.b16 %v650, %v649
  %v848 = vpack.c.b16 %v652, %v651
  %v849 = vpack.c.b16 %v654, %v653
  %v850 = vpack.c.b16 %v656, %v655
  %v851 = vpack.c.b16 %v658, %v657
  %v852 = vpack.c.b16 %v660, %v659
  %v853 = vpack.c.b16 %v662, %v661
  %v854 = vpack.c.b16 %v664, %v663
  %v855 = vpack.c.b16 %v666, %v665
  %v856 = vpack.c.b16 %v668, %v667
  %v857 = vpack.c.b16 %v670, %v669
  %v858 = vpack.c.b16 %v672, %v671
  %v859 = vpack.c.b16 %v674, %v673
  %v860 = vpack.c.b16 %v676, %v675
  %v861 = vpack.c.b16 %v678, %v677
  %v862 = vpack.c.b16 %v680, %v679
  %v863 = vpack.c.b16 %v682, %v681
  %v864 = vpack.c.b16 %v684, %v683
  %v865 = vpack.c.b16 %v686, %v685
  %v866 = vpack.c.b16 %v688, %v687
  %v867 = vpack.c.b16 %v690, %v689
  %v868 = vpack.c.b16 %v692, %v691
  %v869 = vpack.c.b16 %v694, %v693
  %v870 = vpack.c.b16 %v696, %v695
  %v871 = vpack.c.b16 %v698, %v697
  %v872 = vpack.c.b16 %v700, %v699
  %v873 = vpack.c.b16 %v702, %v701
  %v874 = vpack.c.b16 %v704, %v703
  %v875 = vpack.c.b16 %v706, %v705
  %v876 = vpack.c.b16 %v708, %v707
  %v877 = vpack.c.b16 %v710, %v709
  %v878 = vpack.c.b16 %v712, %v711
  %v879 = vpack.c.b16 %v714, %v713
  %v880 = vpack.c.b16 %v716, %v715
  %v881 = vpack.c.b16 %v718, %v717
  %v882 = vpack.c.b16 %v720, %v719
  %v883 = vpack.c.b16 %v722, %v721
  %v884 = vpack.c.b16 %v724, %v723
  %v885 = vpack.c.b16 %v726, %v725
  %v886 = vpack.c.b16 %v728, %v727
  %v887 = vpack.c.b16 %v730, %v729
  %v888 = vpack.c.b16 %v732, %v731
  %v889 = vpack.c.b16 %v734, %v733
  %v890 = vpack.c.b16 %v736, %v735
  %v891 = vpack.c.b16 %v738, %v737
  %v892 = vpack.c.b16 %v740, %v739
  %v893 = vpack.c.b16 %v742, %v741
  %v894 = vpack.c.b16 %v744, %v743
  %v895 = vpack.c.b16 %v746, %v745
  %v896 = vpack.c.b16 %v748, %v747
  %v897 = vpack.c.b16 %v750, %v749
  %v898 = vpack.c.b16 %v752, %v751
  %v899 = vpack.c.b16 %v754, %v753
  %v900 = vpack.c.b16 %v756, %v755
  %v901 = vpack.c.b16 %v758, %v757
  %v902 = vpack.c.b16 %v760, %v759
  %v903 = vpack.c.b16 %v762, %v761
  %v904 = vpack.c.b16 %v764, %v763
  %v905 = vpack.c.b16 %v766, %v765
  %v906 = vpack.c.b16 %v768, %v767
  %v907 = vpack.c.b16 %v770, %v769
  %v908 = vpack.c.b16 %v772, %v771
  %v909 = vpack.c.b16 %v774, %v773
  %v910 = vpack.c.b16 %v776, %v775
  %v911 = vpack.c.b16 %v778, %v777
  %v912 = vpack.c.b16 %v780, %v779
  %v913 = vpack.c.b16 %v782, %v781
  %v914 = vpack.c.b16 %v784, %v783
  %v915 = vpack.c.b16 %v786, %v785
  %v916 = vpack.c.b16 %v788, %v787
  %v919 = vunpack.c.l.b16 %v271
  %v920 = vunpack.c.l.b16 %v272
  %v921 = vpack.c.b16 %v920, %v919
  %vm923 = vcmask 130048
  %v925 = vsel %vm923, %v789, 0
  %v928 = vsel %vm923, %v790, 0
  %v931 = vsel %vm923, %v791, 0
  %v934 = vsel %vm923, %v792, 0
  %v937 = vsel %vm923, %v793, 0
  %v940 = vsel %vm923, %v794, 0
  %v943 = vsel %vm923, %v795, 0
  %v946 = vsel %vm923, %v796, 0
  %v949 = vsel %vm923, %v797, 0
  %v952 = vsel %vm923, %v798, 0
  %v955 = vsel %vm923, %v799, 0
  %v958 = vsel %vm923, %v800, 0
  %v961 = vsel %vm923, %v801, 0
  %v964 = vsel %vm923, %v802, 0
  %v967 = vsel %vm923, %v803, 0
  %v970 = vsel %vm923, %v804, 0
  %v973 = vsel %vm923, %v805, 0
  %v976 = vsel %vm923, %v806, 0
  %v979 = vsel %vm923, %v807, 0
  %v982 = vsel %vm923, %v808, 0
  %v985 = vsel %vm923, %v809, 0
  %v988 = vsel %vm923, %v810, 0
  %v991 = vsel %vm923, %v811, 0
  %v994 = vsel %vm923, %v812, 0
  %v997 = vsel %vm923, %v813, 0
  %v1000 = vsel %vm923, %v814, 0
  %v1003 = vsel %vm923, %v815, 0
  %v1006 = vsel %vm923, %v816, 0
  %v1009 = vsel %vm923, %v817, 0
  %v1012 = vsel %vm923, %v818, 0
  %v1015 = vsel %vm923, %v819, 0
  %v1018 = vsel %vm923, %v820, 0
  %v1021 = vsel %vm923, %v821, 0
  %v1024 = vsel %vm923, %v822, 0
  %v1027 = vsel %vm923, %v823, 0
  %v1030 = vsel %vm923, %v824, 0
  %v1033 = vsel %vm923, %v825, 0
  %v1036 = vsel %vm923, %v826, 0
  %v1039 = vsel %vm923, %v827, 0
  %v1042 = vsel %vm923, %v828, 0
  %v1045 = vsel %vm923, %v829, 0
  %v1048 = vsel %vm923, %v830, 0
  %v1051 = vsel %vm923, %v831, 0
  %v1054 = vsel %vm923, %v832, 0
  %v1057 = vsel %vm923, %v833, 0
  %v1060 = vsel %vm923, %v834, 0
  %v1063 = vsel %vm923, %v835, 0
  %v1066 = vsel %vm923, %v836, 0
  %v1069 = vsel %vm923, %v837, 0
  %v1072 = vsel %vm923, %v838, 0
  %v1075 = vsel %vm923, %v839, 0
  %v1078 = vsel %vm923, %v840, 0
  %v1081 = vsel %vm923, %v841, 0
  %v1084 = vsel %vm923, %v842, 0
  %v1087 = vsel %vm923, %v843, 0
  %v1090 = vsel %vm923, %v844, 0
  %v1093 = vsel %vm923, %v845, 0
  %v1096 = vsel %vm923, %v846, 0
  %v1099 = vsel %vm923, %v847, 0
  %v1102 = vsel %vm923, %v848, 0
  %v1105 = vsel %vm923, %v849, 0
  %v1108 = vsel %vm923, %v850, 0
  %v1111 = vsel %vm923, %v851, 0
  %v1114 = vsel %vm923, %v852, 0
  %v1117 = vsel %vm923, %v853, 0
  %v1120 = vsel %vm923, %v854, 0
  %v1123 = vsel %vm923, %v855, 0
  %v1126 = vsel %vm923, %v856, 0
  %v1129 = vsel %vm923, %v857, 0
  %v1132 = vsel %vm923, %v858, 0
  %v1135 = vsel %vm923, %v859, 0
  %v1138 = vsel %vm923, %v860, 0
  %v1141 = vsel %vm923, %v861, 0
  %v1144 = vsel %vm923, %v862, 0
  %v1147 = vsel %vm923, %v863, 0
  %v1150 = vsel %vm923, %v864, 0
  %v1153 = vsel %vm923, %v865, 0
  %v1156 = vsel %vm923, %v866, 0
  %v1159 = vsel %vm923, %v867, 0
  %v1162 = vsel %vm923, %v868, 0
  %v1165 = vsel %vm923, %v869, 0
  %v1168 = vsel %vm923, %v870, 0
  %v1171 = vsel %vm923, %v871, 0
  %v1174 = vsel %vm923, %v872, 0
  %v1177 = vsel %vm923, %v873, 0
  %v1180 = vsel %vm923, %v874, 0
  %v1183 = vsel %vm923, %v875, 0
  %v1186 = vsel %vm923, %v876, 0
  %v1189 = vsel %vm923, %v877, 0
  %v1192 = vsel %vm923, %v878, 0
  %v1195 = vsel %vm923, %v879, 0
  %v1198 = vsel %vm923, %v880, 0
  %v1201 = vsel %vm923, %v881, 0
  %v1204 = vsel %vm923, %v882, 0
  %v1207 = vsel %vm923, %v883, 0
  %v1210 = vsel %vm923, %v884, 0
  %v1213 = vsel %vm923, %v885, 0
  %v1216 = vsel %vm923, %v886, 0
  %v1219 = vsel %vm923, %v887, 0
  %v1222 = vsel %vm923, %v888, 0
  %v1225 = vsel %vm923, %v889, 0
  %v1228 = vsel %vm923, %v890, 0
  %v1231 = vsel %vm923, %v891, 0
  %v1234 = vsel %vm923, %v892, 0
  %v1237 = vsel %vm923, %v893, 0
  %v1240 = vsel %vm923, %v894, 0
  %v1243 = vsel %vm923, %v895, 0
  %v1246 = vsel %vm923, %v896, 0
  %v1249 = vsel %vm923, %v897, 0
  %v1252 = vsel %vm923, %v898, 0
  %v1255 = vsel %vm923, %v899, 0
  %v1258 = vsel %vm923, %v900, 0
  %v1261 = vsel %vm923, %v901, 0
  %v1264 = vsel %vm923, %v902, 0
  %v1267 = vsel %vm923, %v903, 0
  %v1270 = vsel %vm923, %v904, 0
  %v1273 = vsel %vm923, %v905, 0
  %v1276 = vsel %vm923, %v906, 0
  %v1279 = vsel %vm923, %v907, 0
  %v1282 = vsel %vm923, %v908, 0
  %v1285 = vsel %vm923, %v909, 0
  %v1288 = vsel %vm923, %v910, 0
  %v1291 = vsel %vm923, %v911, 0
  %v1294 = vsel %vm923, %v912, 0
  %v1297 = vsel %vm923, %v913, 0
  %v1300 = vsel %vm923, %v914, 0
  %v1303 = vsel %vm923, %v915, 0
  %v1306 = vsel %vm923, %v916, 0
  %1308 = vmatpush.bf16.msra.mxu0 0
  %1309 = vmatpush.bf16.msra.mxu0 0
  %1310 = vmatpush.bf16.msra.mxu0 0
  %1311 = vmatpush.bf16.msra.mxu0 0
  %1312 = vmatpush.bf16.msra.mxu0 0
  %1313 = vmatpush.bf16.msra.mxu0 0
  %1314 = vmatpush.bf16.msra.mxu0 0
  %1315 = vmatpush.bf16.msra.mxu0 %v921
  %1316 = vmatmul.bf16.gmra.mxu0 %v925
  %v1317 = vpop.f32.mrf.mxu0
  %v1318 = vadd.f32 %v275, %v1317
  %v1319 = vpop.f32.mrf.mxu0
  %v1320 = vadd.f32 %v275, %v1319
  %1321 = vmatmul.bf16.gmra.mxu0 %v928
  %v1322 = vpop.f32.mrf.mxu0
  %v1323 = vadd.f32 %v275, %v1322
  %v1324 = vpop.f32.mrf.mxu0
  %v1325 = vadd.f32 %v275, %v1324
  %1326 = vmatmul.bf16.gmra.mxu0 %v931
  %v1327 = vpop.f32.mrf.mxu0
  %v1328 = vadd.f32 %v275, %v1327
  %v1329 = vpop.f32.mrf.mxu0
  %v1330 = vadd.f32 %v275, %v1329
  %1331 = vmatmul.bf16.gmra.mxu0 %v934
  %v1332 = vpop.f32.mrf.mxu0
  %v1333 = vadd.f32 %v275, %v1332
  %v1334 = vpop.f32.mrf.mxu0
  %v1335 = vadd.f32 %v275, %v1334
  %1336 = vmatmul.bf16.gmra.mxu0 %v937
  %v1337 = vpop.f32.mrf.mxu0
  %v1338 = vadd.f32 %v275, %v1337
  %v1339 = vpop.f32.mrf.mxu0
  %v1340 = vadd.f32 %v275, %v1339
  %1341 = vmatmul.bf16.gmra.mxu0 %v940
  %v1342 = vpop.f32.mrf.mxu0
  %v1343 = vadd.f32 %v275, %v1342
  %v1344 = vpop.f32.mrf.mxu0
  %v1345 = vadd.f32 %v275, %v1344
  %1346 = vmatmul.bf16.gmra.mxu0 %v943
  %v1347 = vpop.f32.mrf.mxu0
  %v1348 = vadd.f32 %v275, %v1347
  %v1349 = vpop.f32.mrf.mxu0
  %v1350 = vadd.f32 %v275, %v1349
  %1351 = vmatmul.bf16.gmra.mxu0 %v946
  %v1352 = vpop.f32.mrf.mxu0
  %v1353 = vadd.f32 %v275, %v1352
  %v1354 = vpop.f32.mrf.mxu0
  %v1355 = vadd.f32 %v275, %v1354
  %1356 = vmatmul.bf16.gmra.mxu0 %v949
  %v1357 = vpop.f32.mrf.mxu0
  %v1358 = vadd.f32 %v275, %v1357
  %v1359 = vpop.f32.mrf.mxu0
  %v1360 = vadd.f32 %v275, %v1359
  %1361 = vmatmul.bf16.gmra.mxu0 %v952
  %v1362 = vpop.f32.mrf.mxu0
  %v1363 = vadd.f32 %v275, %v1362
  %v1364 = vpop.f32.mrf.mxu0
  %v1365 = vadd.f32 %v275, %v1364
  %1366 = vmatmul.bf16.gmra.mxu0 %v955
  %v1367 = vpop.f32.mrf.mxu0
  %v1368 = vadd.f32 %v275, %v1367
  %v1369 = vpop.f32.mrf.mxu0
  %v1370 = vadd.f32 %v275, %v1369
  %1371 = vmatmul.bf16.gmra.mxu0 %v958
  %v1372 = vpop.f32.mrf.mxu0
  %v1373 = vadd.f32 %v275, %v1372
  %v1374 = vpop.f32.mrf.mxu0
  %v1375 = vadd.f32 %v275, %v1374
  %1376 = vmatmul.bf16.gmra.mxu0 %v961
  %v1377 = vpop.f32.mrf.mxu0
  %v1378 = vadd.f32 %v275, %v1377
  %v1379 = vpop.f32.mrf.mxu0
  %v1380 = vadd.f32 %v275, %v1379
  %1381 = vmatmul.bf16.gmra.mxu0 %v964
  %v1382 = vpop.f32.mrf.mxu0
  %v1383 = vadd.f32 %v275, %v1382
  %v1384 = vpop.f32.mrf.mxu0
  %v1385 = vadd.f32 %v275, %v1384
  %1386 = vmatmul.bf16.gmra.mxu0 %v967
  %v1387 = vpop.f32.mrf.mxu0
  %v1388 = vadd.f32 %v275, %v1387
  %v1389 = vpop.f32.mrf.mxu0
  %v1390 = vadd.f32 %v275, %v1389
  %1391 = vmatmul.bf16.gmra.mxu0 %v970
  %v1392 = vpop.f32.mrf.mxu0
  %v1393 = vadd.f32 %v275, %v1392
  %v1394 = vpop.f32.mrf.mxu0
  %v1395 = vadd.f32 %v275, %v1394
  %1396 = vmatmul.bf16.gmra.mxu0 %v973
  %v1397 = vpop.f32.mrf.mxu0
  %v1398 = vadd.f32 %v275, %v1397
  %v1399 = vpop.f32.mrf.mxu0
  %v1400 = vadd.f32 %v275, %v1399
  %1401 = vmatmul.bf16.gmra.mxu0 %v976
  %v1402 = vpop.f32.mrf.mxu0
  %v1403 = vadd.f32 %v275, %v1402
  %v1404 = vpop.f32.mrf.mxu0
  %v1405 = vadd.f32 %v275, %v1404
  %1406 = vmatmul.bf16.gmra.mxu0 %v979
  %v1407 = vpop.f32.mrf.mxu0
  %v1408 = vadd.f32 %v275, %v1407
  %v1409 = vpop.f32.mrf.mxu0
  %v1410 = vadd.f32 %v275, %v1409
  %1411 = vmatmul.bf16.gmra.mxu0 %v982
  %v1412 = vpop.f32.mrf.mxu0
  %v1413 = vadd.f32 %v275, %v1412
  %v1414 = vpop.f32.mrf.mxu0
  %v1415 = vadd.f32 %v275, %v1414
  %1416 = vmatmul.bf16.gmra.mxu0 %v985
  %v1417 = vpop.f32.mrf.mxu0
  %v1418 = vadd.f32 %v275, %v1417
  %v1419 = vpop.f32.mrf.mxu0
  %v1420 = vadd.f32 %v275, %v1419
  %1421 = vmatmul.bf16.gmra.mxu0 %v988
  %v1422 = vpop.f32.mrf.mxu0
  %v1423 = vadd.f32 %v275, %v1422
  %v1424 = vpop.f32.mrf.mxu0
  %v1425 = vadd.f32 %v275, %v1424
  %1426 = vmatmul.bf16.gmra.mxu0 %v991
  %v1427 = vpop.f32.mrf.mxu0
  %v1428 = vadd.f32 %v275, %v1427
  %v1429 = vpop.f32.mrf.mxu0
  %v1430 = vadd.f32 %v275, %v1429
  %1431 = vmatmul.bf16.gmra.mxu0 %v994
  %v1432 = vpop.f32.mrf.mxu0
  %v1433 = vadd.f32 %v275, %v1432
  %v1434 = vpop.f32.mrf.mxu0
  %v1435 = vadd.f32 %v275, %v1434
  %1436 = vmatmul.bf16.gmra.mxu0 %v997
  %v1437 = vpop.f32.mrf.mxu0
  %v1438 = vadd.f32 %v275, %v1437
  %v1439 = vpop.f32.mrf.mxu0
  %v1440 = vadd.f32 %v275, %v1439
  %1441 = vmatmul.bf16.gmra.mxu0 %v1000
  %v1442 = vpop.f32.mrf.mxu0
  %v1443 = vadd.f32 %v275, %v1442
  %v1444 = vpop.f32.mrf.mxu0
  %v1445 = vadd.f32 %v275, %v1444
  %1446 = vmatmul.bf16.gmra.mxu0 %v1003
  %v1447 = vpop.f32.mrf.mxu0
  %v1448 = vadd.f32 %v275, %v1447
  %v1449 = vpop.f32.mrf.mxu0
  %v1450 = vadd.f32 %v275, %v1449
  %1451 = vmatmul.bf16.gmra.mxu0 %v1006
  %v1452 = vpop.f32.mrf.mxu0
  %v1453 = vadd.f32 %v275, %v1452
  %v1454 = vpop.f32.mrf.mxu0
  %v1455 = vadd.f32 %v275, %v1454
  %1456 = vmatmul.bf16.gmra.mxu0 %v1009
  %v1457 = vpop.f32.mrf.mxu0
  %v1458 = vadd.f32 %v275, %v1457
  %v1459 = vpop.f32.mrf.mxu0
  %v1460 = vadd.f32 %v275, %v1459
  %1461 = vmatmul.bf16.gmra.mxu0 %v1012
  %v1462 = vpop.f32.mrf.mxu0
  %v1463 = vadd.f32 %v275, %v1462
  %v1464 = vpop.f32.mrf.mxu0
  %v1465 = vadd.f32 %v275, %v1464
  %1466 = vmatmul.bf16.gmra.mxu0 %v1015
  %v1467 = vpop.f32.mrf.mxu0
  %v1468 = vadd.f32 %v275, %v1467
  %v1469 = vpop.f32.mrf.mxu0
  %v1470 = vadd.f32 %v275, %v1469
  %1471 = vmatmul.bf16.gmra.mxu0 %v1018
  %v1472 = vpop.f32.mrf.mxu0
  %v1473 = vadd.f32 %v275, %v1472
  %v1474 = vpop.f32.mrf.mxu0
  %v1475 = vadd.f32 %v275, %v1474
  %1476 = vmatmul.bf16.gmra.mxu0 %v1021
  %v1477 = vpop.f32.mrf.mxu0
  %v1478 = vadd.f32 %v275, %v1477
  %v1479 = vpop.f32.mrf.mxu0
  %v1480 = vadd.f32 %v275, %v1479
  %1481 = vmatmul.bf16.gmra.mxu0 %v1024
  %v1482 = vpop.f32.mrf.mxu0
  %v1483 = vadd.f32 %v275, %v1482
  %v1484 = vpop.f32.mrf.mxu0
  %v1485 = vadd.f32 %v275, %v1484
  %1486 = vmatmul.bf16.gmra.mxu0 %v1027
  %v1487 = vpop.f32.mrf.mxu0
  %v1488 = vadd.f32 %v275, %v1487
  %v1489 = vpop.f32.mrf.mxu0
  %v1490 = vadd.f32 %v275, %v1489
  %1491 = vmatmul.bf16.gmra.mxu0 %v1030
  %v1492 = vpop.f32.mrf.mxu0
  %v1493 = vadd.f32 %v275, %v1492
  %v1494 = vpop.f32.mrf.mxu0
  %v1495 = vadd.f32 %v275, %v1494
  %1496 = vmatmul.bf16.gmra.mxu0 %v1033
  %v1497 = vpop.f32.mrf.mxu0
  %v1498 = vadd.f32 %v275, %v1497
  %v1499 = vpop.f32.mrf.mxu0
  %v1500 = vadd.f32 %v275, %v1499
  %1501 = vmatmul.bf16.gmra.mxu0 %v1036
  %v1502 = vpop.f32.mrf.mxu0
  %v1503 = vadd.f32 %v275, %v1502
  %v1504 = vpop.f32.mrf.mxu0
  %v1505 = vadd.f32 %v275, %v1504
  %1506 = vmatmul.bf16.gmra.mxu0 %v1039
  %v1507 = vpop.f32.mrf.mxu0
  %v1508 = vadd.f32 %v275, %v1507
  %v1509 = vpop.f32.mrf.mxu0
  %v1510 = vadd.f32 %v275, %v1509
  %1511 = vmatmul.bf16.gmra.mxu0 %v1042
  %v1512 = vpop.f32.mrf.mxu0
  %v1513 = vadd.f32 %v275, %v1512
  %v1514 = vpop.f32.mrf.mxu0
  %v1515 = vadd.f32 %v275, %v1514
  %1516 = vmatmul.bf16.gmra.mxu0 %v1045
  %v1517 = vpop.f32.mrf.mxu0
  %v1518 = vadd.f32 %v275, %v1517
  %v1519 = vpop.f32.mrf.mxu0
  %v1520 = vadd.f32 %v275, %v1519
  %1521 = vmatmul.bf16.gmra.mxu0 %v1048
  %v1522 = vpop.f32.mrf.mxu0
  %v1523 = vadd.f32 %v275, %v1522
  %v1524 = vpop.f32.mrf.mxu0
  %v1525 = vadd.f32 %v275, %v1524
  %1526 = vmatmul.bf16.gmra.mxu0 %v1051
  %v1527 = vpop.f32.mrf.mxu0
  %v1528 = vadd.f32 %v275, %v1527
  %v1529 = vpop.f32.mrf.mxu0
  %v1530 = vadd.f32 %v275, %v1529
  %1531 = vmatmul.bf16.gmra.mxu0 %v1054
  %v1532 = vpop.f32.mrf.mxu0
  %v1533 = vadd.f32 %v275, %v1532
  %v1534 = vpop.f32.mrf.mxu0
  %v1535 = vadd.f32 %v275, %v1534
  %1536 = vmatmul.bf16.gmra.mxu0 %v1057
  %v1537 = vpop.f32.mrf.mxu0
  %v1538 = vadd.f32 %v275, %v1537
  %v1539 = vpop.f32.mrf.mxu0
  %v1540 = vadd.f32 %v275, %v1539
  %1541 = vmatmul.bf16.gmra.mxu0 %v1060
  %v1542 = vpop.f32.mrf.mxu0
  %v1543 = vadd.f32 %v275, %v1542
  %v1544 = vpop.f32.mrf.mxu0
  %v1545 = vadd.f32 %v275, %v1544
  %1546 = vmatmul.bf16.gmra.mxu0 %v1063
  %v1547 = vpop.f32.mrf.mxu0
  %v1548 = vadd.f32 %v275, %v1547
  %v1549 = vpop.f32.mrf.mxu0
  %v1550 = vadd.f32 %v275, %v1549
  %1551 = vmatmul.bf16.gmra.mxu0 %v1066
  %v1552 = vpop.f32.mrf.mxu0
  %v1553 = vadd.f32 %v275, %v1552
  %v1554 = vpop.f32.mrf.mxu0
  %v1555 = vadd.f32 %v275, %v1554
  %1556 = vmatmul.bf16.gmra.mxu0 %v1069
  %v1557 = vpop.f32.mrf.mxu0
  %v1558 = vadd.f32 %v275, %v1557
  %v1559 = vpop.f32.mrf.mxu0
  %v1560 = vadd.f32 %v275, %v1559
  %1561 = vmatmul.bf16.gmra.mxu0 %v1072
  %v1562 = vpop.f32.mrf.mxu0
  %v1563 = vadd.f32 %v275, %v1562
  %v1564 = vpop.f32.mrf.mxu0
  %v1565 = vadd.f32 %v275, %v1564
  %1566 = vmatmul.bf16.gmra.mxu0 %v1075
  %v1567 = vpop.f32.mrf.mxu0
  %v1568 = vadd.f32 %v275, %v1567
  %v1569 = vpop.f32.mrf.mxu0
  %v1570 = vadd.f32 %v275, %v1569
  %1571 = vmatmul.bf16.gmra.mxu0 %v1078
  %v1572 = vpop.f32.mrf.mxu0
  %v1573 = vadd.f32 %v275, %v1572
  %v1574 = vpop.f32.mrf.mxu0
  %v1575 = vadd.f32 %v275, %v1574
  %1576 = vmatmul.bf16.gmra.mxu0 %v1081
  %v1577 = vpop.f32.mrf.mxu0
  %v1578 = vadd.f32 %v275, %v1577
  %v1579 = vpop.f32.mrf.mxu0
  %v1580 = vadd.f32 %v275, %v1579
  %1581 = vmatmul.bf16.gmra.mxu0 %v1084
  %v1582 = vpop.f32.mrf.mxu0
  %v1583 = vadd.f32 %v275, %v1582
  %v1584 = vpop.f32.mrf.mxu0
  %v1585 = vadd.f32 %v275, %v1584
  %1586 = vmatmul.bf16.gmra.mxu0 %v1087
  %v1587 = vpop.f32.mrf.mxu0
  %v1588 = vadd.f32 %v275, %v1587
  %v1589 = vpop.f32.mrf.mxu0
  %v1590 = vadd.f32 %v275, %v1589
  %1591 = vmatmul.bf16.gmra.mxu0 %v1090
  %v1592 = vpop.f32.mrf.mxu0
  %v1593 = vadd.f32 %v275, %v1592
  %v1594 = vpop.f32.mrf.mxu0
  %v1595 = vadd.f32 %v275, %v1594
  %1596 = vmatmul.bf16.gmra.mxu0 %v1093
  %v1597 = vpop.f32.mrf.mxu0
  %v1598 = vadd.f32 %v275, %v1597
  %v1599 = vpop.f32.mrf.mxu0
  %v1600 = vadd.f32 %v275, %v1599
  %1601 = vmatmul.bf16.gmra.mxu0 %v1096
  %v1602 = vpop.f32.mrf.mxu0
  %v1603 = vadd.f32 %v275, %v1602
  %v1604 = vpop.f32.mrf.mxu0
  %v1605 = vadd.f32 %v275, %v1604
  %1606 = vmatmul.bf16.gmra.mxu0 %v1099
  %v1607 = vpop.f32.mrf.mxu0
  %v1608 = vadd.f32 %v275, %v1607
  %v1609 = vpop.f32.mrf.mxu0
  %v1610 = vadd.f32 %v275, %v1609
  %1611 = vmatmul.bf16.gmra.mxu0 %v1102
  %v1612 = vpop.f32.mrf.mxu0
  %v1613 = vadd.f32 %v275, %v1612
  %v1614 = vpop.f32.mrf.mxu0
  %v1615 = vadd.f32 %v275, %v1614
  %1616 = vmatmul.bf16.gmra.mxu0 %v1105
  %v1617 = vpop.f32.mrf.mxu0
  %v1618 = vadd.f32 %v275, %v1617
  %v1619 = vpop.f32.mrf.mxu0
  %v1620 = vadd.f32 %v275, %v1619
  %1621 = vmatmul.bf16.gmra.mxu0 %v1108
  %v1622 = vpop.f32.mrf.mxu0
  %v1623 = vadd.f32 %v275, %v1622
  %v1624 = vpop.f32.mrf.mxu0
  %v1625 = vadd.f32 %v275, %v1624
  %1626 = vmatmul.bf16.gmra.mxu0 %v1111
  %v1627 = vpop.f32.mrf.mxu0
  %v1628 = vadd.f32 %v275, %v1627
  %v1629 = vpop.f32.mrf.mxu0
  %v1630 = vadd.f32 %v275, %v1629
  %1631 = vmatmul.bf16.gmra.mxu0 %v1114
  %v1632 = vpop.f32.mrf.mxu0
  %v1633 = vadd.f32 %v275, %v1632
  %v1634 = vpop.f32.mrf.mxu0
  %v1635 = vadd.f32 %v275, %v1634
  %1636 = vmatmul.bf16.gmra.mxu0 %v1117
  %v1637 = vpop.f32.mrf.mxu0
  %v1638 = vadd.f32 %v275, %v1637
  %v1639 = vpop.f32.mrf.mxu0
  %v1640 = vadd.f32 %v275, %v1639
  %1641 = vmatmul.bf16.gmra.mxu0 %v1120
  %v1642 = vpop.f32.mrf.mxu0
  %v1643 = vadd.f32 %v275, %v1642
  %v1644 = vpop.f32.mrf.mxu0
  %v1645 = vadd.f32 %v275, %v1644
  %1646 = vmatmul.bf16.gmra.mxu0 %v1123
  %v1647 = vpop.f32.mrf.mxu0
  %v1648 = vadd.f32 %v275, %v1647
  %v1649 = vpop.f32.mrf.mxu0
  %v1650 = vadd.f32 %v275, %v1649
  %1651 = vmatmul.bf16.gmra.mxu0 %v1126
  %v1652 = vpop.f32.mrf.mxu0
  %v1653 = vadd.f32 %v275, %v1652
  %v1654 = vpop.f32.mrf.mxu0
  %v1655 = vadd.f32 %v275, %v1654
  %1656 = vmatmul.bf16.gmra.mxu0 %v1129
  %v1657 = vpop.f32.mrf.mxu0
  %v1658 = vadd.f32 %v275, %v1657
  %v1659 = vpop.f32.mrf.mxu0
  %v1660 = vadd.f32 %v275, %v1659
  %1661 = vmatmul.bf16.gmra.mxu0 %v1132
  %v1662 = vpop.f32.mrf.mxu0
  %v1663 = vadd.f32 %v275, %v1662
  %v1664 = vpop.f32.mrf.mxu0
  %v1665 = vadd.f32 %v275, %v1664
  %1666 = vmatmul.bf16.gmra.mxu0 %v1135
  %v1667 = vpop.f32.mrf.mxu0
  %v1668 = vadd.f32 %v275, %v1667
  %v1669 = vpop.f32.mrf.mxu0
  %v1670 = vadd.f32 %v275, %v1669
  %1671 = vmatmul.bf16.gmra.mxu0 %v1138
  %v1672 = vpop.f32.mrf.mxu0
  %v1673 = vadd.f32 %v275, %v1672
  %v1674 = vpop.f32.mrf.mxu0
  %v1675 = vadd.f32 %v275, %v1674
  %1676 = vmatmul.bf16.gmra.mxu0 %v1141
  %v1677 = vpop.f32.mrf.mxu0
  %v1678 = vadd.f32 %v275, %v1677
  %v1679 = vpop.f32.mrf.mxu0
  %v1680 = vadd.f32 %v275, %v1679
  %1681 = vmatmul.bf16.gmra.mxu0 %v1144
  %v1682 = vpop.f32.mrf.mxu0
  %v1683 = vadd.f32 %v275, %v1682
  %v1684 = vpop.f32.mrf.mxu0
  %v1685 = vadd.f32 %v275, %v1684
  %1686 = vmatmul.bf16.gmra.mxu0 %v1147
  %v1687 = vpop.f32.mrf.mxu0
  %v1688 = vadd.f32 %v275, %v1687
  %v1689 = vpop.f32.mrf.mxu0
  %v1690 = vadd.f32 %v275, %v1689
  %1691 = vmatmul.bf16.gmra.mxu0 %v1150
  %v1692 = vpop.f32.mrf.mxu0
  %v1693 = vadd.f32 %v275, %v1692
  %v1694 = vpop.f32.mrf.mxu0
  %v1695 = vadd.f32 %v275, %v1694
  %1696 = vmatmul.bf16.gmra.mxu0 %v1153
  %v1697 = vpop.f32.mrf.mxu0
  %v1698 = vadd.f32 %v275, %v1697
  %v1699 = vpop.f32.mrf.mxu0
  %v1700 = vadd.f32 %v275, %v1699
  %1701 = vmatmul.bf16.gmra.mxu0 %v1156
  %v1702 = vpop.f32.mrf.mxu0
  %v1703 = vadd.f32 %v275, %v1702
  %v1704 = vpop.f32.mrf.mxu0
  %v1705 = vadd.f32 %v275, %v1704
  %1706 = vmatmul.bf16.gmra.mxu0 %v1159
  %v1707 = vpop.f32.mrf.mxu0
  %v1708 = vadd.f32 %v275, %v1707
  %v1709 = vpop.f32.mrf.mxu0
  %v1710 = vadd.f32 %v275, %v1709
  %1711 = vmatmul.bf16.gmra.mxu0 %v1162
  %v1712 = vpop.f32.mrf.mxu0
  %v1713 = vadd.f32 %v275, %v1712
  %v1714 = vpop.f32.mrf.mxu0
  %v1715 = vadd.f32 %v275, %v1714
  %1716 = vmatmul.bf16.gmra.mxu0 %v1165
  %v1717 = vpop.f32.mrf.mxu0
  %v1718 = vadd.f32 %v275, %v1717
  %v1719 = vpop.f32.mrf.mxu0
  %v1720 = vadd.f32 %v275, %v1719
  %1721 = vmatmul.bf16.gmra.mxu0 %v1168
  %v1722 = vpop.f32.mrf.mxu0
  %v1723 = vadd.f32 %v275, %v1722
  %v1724 = vpop.f32.mrf.mxu0
  %v1725 = vadd.f32 %v275, %v1724
  %1726 = vmatmul.bf16.gmra.mxu0 %v1171
  %v1727 = vpop.f32.mrf.mxu0
  %v1728 = vadd.f32 %v275, %v1727
  %v1729 = vpop.f32.mrf.mxu0
  %v1730 = vadd.f32 %v275, %v1729
  %1731 = vmatmul.bf16.gmra.mxu0 %v1174
  %v1732 = vpop.f32.mrf.mxu0
  %v1733 = vadd.f32 %v275, %v1732
  %v1734 = vpop.f32.mrf.mxu0
  %v1735 = vadd.f32 %v275, %v1734
  %1736 = vmatmul.bf16.gmra.mxu0 %v1177
  %v1737 = vpop.f32.mrf.mxu0
  %v1738 = vadd.f32 %v275, %v1737
  %v1739 = vpop.f32.mrf.mxu0
  %v1740 = vadd.f32 %v275, %v1739
  %1741 = vmatmul.bf16.gmra.mxu0 %v1180
  %v1742 = vpop.f32.mrf.mxu0
  %v1743 = vadd.f32 %v275, %v1742
  %v1744 = vpop.f32.mrf.mxu0
  %v1745 = vadd.f32 %v275, %v1744
  %1746 = vmatmul.bf16.gmra.mxu0 %v1183
  %v1747 = vpop.f32.mrf.mxu0
  %v1748 = vadd.f32 %v275, %v1747
  %v1749 = vpop.f32.mrf.mxu0
  %v1750 = vadd.f32 %v275, %v1749
  %1751 = vmatmul.bf16.gmra.mxu0 %v1186
  %v1752 = vpop.f32.mrf.mxu0
  %v1753 = vadd.f32 %v275, %v1752
  %v1754 = vpop.f32.mrf.mxu0
  %v1755 = vadd.f32 %v275, %v1754
  %1756 = vmatmul.bf16.gmra.mxu0 %v1189
  %v1757 = vpop.f32.mrf.mxu0
  %v1758 = vadd.f32 %v275, %v1757
  %v1759 = vpop.f32.mrf.mxu0
  %v1760 = vadd.f32 %v275, %v1759
  %1761 = vmatmul.bf16.gmra.mxu0 %v1192
  %v1762 = vpop.f32.mrf.mxu0
  %v1763 = vadd.f32 %v275, %v1762
  %v1764 = vpop.f32.mrf.mxu0
  %v1765 = vadd.f32 %v275, %v1764
  %1766 = vmatmul.bf16.gmra.mxu0 %v1195
  %v1767 = vpop.f32.mrf.mxu0
  %v1768 = vadd.f32 %v275, %v1767
  %v1769 = vpop.f32.mrf.mxu0
  %v1770 = vadd.f32 %v275, %v1769
  %1771 = vmatmul.bf16.gmra.mxu0 %v1198
  %v1772 = vpop.f32.mrf.mxu0
  %v1773 = vadd.f32 %v275, %v1772
  %v1774 = vpop.f32.mrf.mxu0
  %v1775 = vadd.f32 %v275, %v1774
  %1776 = vmatmul.bf16.gmra.mxu0 %v1201
  %v1777 = vpop.f32.mrf.mxu0
  %v1778 = vadd.f32 %v275, %v1777
  %v1779 = vpop.f32.mrf.mxu0
  %v1780 = vadd.f32 %v275, %v1779
  %1781 = vmatmul.bf16.gmra.mxu0 %v1204
  %v1782 = vpop.f32.mrf.mxu0
  %v1783 = vadd.f32 %v275, %v1782
  %v1784 = vpop.f32.mrf.mxu0
  %v1785 = vadd.f32 %v275, %v1784
  %1786 = vmatmul.bf16.gmra.mxu0 %v1207
  %v1787 = vpop.f32.mrf.mxu0
  %v1788 = vadd.f32 %v275, %v1787
  %v1789 = vpop.f32.mrf.mxu0
  %v1790 = vadd.f32 %v275, %v1789
  %1791 = vmatmul.bf16.gmra.mxu0 %v1210
  %v1792 = vpop.f32.mrf.mxu0
  %v1793 = vadd.f32 %v275, %v1792
  %v1794 = vpop.f32.mrf.mxu0
  %v1795 = vadd.f32 %v275, %v1794
  %1796 = vmatmul.bf16.gmra.mxu0 %v1213
  %v1797 = vpop.f32.mrf.mxu0
  %v1798 = vadd.f32 %v275, %v1797
  %v1799 = vpop.f32.mrf.mxu0
  %v1800 = vadd.f32 %v275, %v1799
  %1801 = vmatmul.bf16.gmra.mxu0 %v1216
  %v1802 = vpop.f32.mrf.mxu0
  %v1803 = vadd.f32 %v275, %v1802
  %v1804 = vpop.f32.mrf.mxu0
  %v1805 = vadd.f32 %v275, %v1804
  %1806 = vmatmul.bf16.gmra.mxu0 %v1219
  %v1807 = vpop.f32.mrf.mxu0
  %v1808 = vadd.f32 %v275, %v1807
  %v1809 = vpop.f32.mrf.mxu0
  %v1810 = vadd.f32 %v275, %v1809
  %1811 = vmatmul.bf16.gmra.mxu0 %v1222
  %v1812 = vpop.f32.mrf.mxu0
  %v1813 = vadd.f32 %v275, %v1812
  %v1814 = vpop.f32.mrf.mxu0
  %v1815 = vadd.f32 %v275, %v1814
  %1816 = vmatmul.bf16.gmra.mxu0 %v1225
  %v1817 = vpop.f32.mrf.mxu0
  %v1818 = vadd.f32 %v275, %v1817
  %v1819 = vpop.f32.mrf.mxu0
  %v1820 = vadd.f32 %v275, %v1819
  %1821 = vmatmul.bf16.gmra.mxu0 %v1228
  %v1822 = vpop.f32.mrf.mxu0
  %v1823 = vadd.f32 %v275, %v1822
  %v1824 = vpop.f32.mrf.mxu0
  %v1825 = vadd.f32 %v275, %v1824
  %1826 = vmatmul.bf16.gmra.mxu0 %v1231
  %v1827 = vpop.f32.mrf.mxu0
  %v1828 = vadd.f32 %v275, %v1827
  %v1829 = vpop.f32.mrf.mxu0
  %v1830 = vadd.f32 %v275, %v1829
  %1831 = vmatmul.bf16.gmra.mxu0 %v1234
  %v1832 = vpop.f32.mrf.mxu0
  %v1833 = vadd.f32 %v275, %v1832
  %v1834 = vpop.f32.mrf.mxu0
  %v1835 = vadd.f32 %v275, %v1834
  %1836 = vmatmul.bf16.gmra.mxu0 %v1237
  %v1837 = vpop.f32.mrf.mxu0
  %v1838 = vadd.f32 %v275, %v1837
  %v1839 = vpop.f32.mrf.mxu0
  %v1840 = vadd.f32 %v275, %v1839
  %1841 = vmatmul.bf16.gmra.mxu0 %v1240
  %v1842 = vpop.f32.mrf.mxu0
  %v1843 = vadd.f32 %v275, %v1842
  %v1844 = vpop.f32.mrf.mxu0
  %v1845 = vadd.f32 %v275, %v1844
  %1846 = vmatmul.bf16.gmra.mxu0 %v1243
  %v1847 = vpop.f32.mrf.mxu0
  %v1848 = vadd.f32 %v275, %v1847
  %v1849 = vpop.f32.mrf.mxu0
  %v1850 = vadd.f32 %v275, %v1849
  %1851 = vmatmul.bf16.gmra.mxu0 %v1246
  %v1852 = vpop.f32.mrf.mxu0
  %v1853 = vadd.f32 %v275, %v1852
  %v1854 = vpop.f32.mrf.mxu0
  %v1855 = vadd.f32 %v275, %v1854
  %1856 = vmatmul.bf16.gmra.mxu0 %v1249
  %v1857 = vpop.f32.mrf.mxu0
  %v1858 = vadd.f32 %v275, %v1857
  %v1859 = vpop.f32.mrf.mxu0
  %v1860 = vadd.f32 %v275, %v1859
  %1861 = vmatmul.bf16.gmra.mxu0 %v1252
  %v1862 = vpop.f32.mrf.mxu0
  %v1863 = vadd.f32 %v275, %v1862
  %v1864 = vpop.f32.mrf.mxu0
  %v1865 = vadd.f32 %v275, %v1864
  %1866 = vmatmul.bf16.gmra.mxu0 %v1255
  %v1867 = vpop.f32.mrf.mxu0
  %v1868 = vadd.f32 %v275, %v1867
  %v1869 = vpop.f32.mrf.mxu0
  %v1870 = vadd.f32 %v275, %v1869
  %1871 = vmatmul.bf16.gmra.mxu0 %v1258
  %v1872 = vpop.f32.mrf.mxu0
  %v1873 = vadd.f32 %v275, %v1872
  %v1874 = vpop.f32.mrf.mxu0
  %v1875 = vadd.f32 %v275, %v1874
  %1876 = vmatmul.bf16.gmra.mxu0 %v1261
  %v1877 = vpop.f32.mrf.mxu0
  %v1878 = vadd.f32 %v275, %v1877
  %v1879 = vpop.f32.mrf.mxu0
  %v1880 = vadd.f32 %v275, %v1879
  %1881 = vmatmul.bf16.gmra.mxu0 %v1264
  %v1882 = vpop.f32.mrf.mxu0
  %v1883 = vadd.f32 %v275, %v1882
  %v1884 = vpop.f32.mrf.mxu0
  %v1885 = vadd.f32 %v275, %v1884
  %1886 = vmatmul.bf16.gmra.mxu0 %v1267
  %v1887 = vpop.f32.mrf.mxu0
  %v1888 = vadd.f32 %v275, %v1887
  %v1889 = vpop.f32.mrf.mxu0
  %v1890 = vadd.f32 %v275, %v1889
  %1891 = vmatmul.bf16.gmra.mxu0 %v1270
  %v1892 = vpop.f32.mrf.mxu0
  %v1893 = vadd.f32 %v275, %v1892
  %v1894 = vpop.f32.mrf.mxu0
  %v1895 = vadd.f32 %v275, %v1894
  %1896 = vmatmul.bf16.gmra.mxu0 %v1273
  %v1897 = vpop.f32.mrf.mxu0
  %v1898 = vadd.f32 %v275, %v1897
  %v1899 = vpop.f32.mrf.mxu0
  %v1900 = vadd.f32 %v275, %v1899
  %1901 = vmatmul.bf16.gmra.mxu0 %v1276
  %v1902 = vpop.f32.mrf.mxu0
  %v1903 = vadd.f32 %v275, %v1902
  %v1904 = vpop.f32.mrf.mxu0
  %v1905 = vadd.f32 %v275, %v1904
  %1906 = vmatmul.bf16.gmra.mxu0 %v1279
  %v1907 = vpop.f32.mrf.mxu0
  %v1908 = vadd.f32 %v275, %v1907
  %v1909 = vpop.f32.mrf.mxu0
  %v1910 = vadd.f32 %v275, %v1909
  %1911 = vmatmul.bf16.gmra.mxu0 %v1282
  %v1912 = vpop.f32.mrf.mxu0
  %v1913 = vadd.f32 %v275, %v1912
  %v1914 = vpop.f32.mrf.mxu0
  %v1915 = vadd.f32 %v275, %v1914
  %1916 = vmatmul.bf16.gmra.mxu0 %v1285
  %v1917 = vpop.f32.mrf.mxu0
  %v1918 = vadd.f32 %v275, %v1917
  %v1919 = vpop.f32.mrf.mxu0
  %v1920 = vadd.f32 %v275, %v1919
  %1921 = vmatmul.bf16.gmra.mxu0 %v1288
  %v1922 = vpop.f32.mrf.mxu0
  %v1923 = vadd.f32 %v275, %v1922
  %v1924 = vpop.f32.mrf.mxu0
  %v1925 = vadd.f32 %v275, %v1924
  %1926 = vmatmul.bf16.gmra.mxu0 %v1291
  %v1927 = vpop.f32.mrf.mxu0
  %v1928 = vadd.f32 %v275, %v1927
  %v1929 = vpop.f32.mrf.mxu0
  %v1930 = vadd.f32 %v275, %v1929
  %1931 = vmatmul.bf16.gmra.mxu0 %v1294
  %v1932 = vpop.f32.mrf.mxu0
  %v1933 = vadd.f32 %v275, %v1932
  %v1934 = vpop.f32.mrf.mxu0
  %v1935 = vadd.f32 %v275, %v1934
  %1936 = vmatmul.bf16.gmra.mxu0 %v1297
  %v1937 = vpop.f32.mrf.mxu0
  %v1938 = vadd.f32 %v275, %v1937
  %v1939 = vpop.f32.mrf.mxu0
  %v1940 = vadd.f32 %v275, %v1939
  %1941 = vmatmul.bf16.gmra.mxu0 %v1300
  %v1942 = vpop.f32.mrf.mxu0
  %v1943 = vadd.f32 %v275, %v1942
  %v1944 = vpop.f32.mrf.mxu0
  %v1945 = vadd.f32 %v275, %v1944
  %1946 = vmatmul.bf16.gmra.mxu0 %v1303
  %v1947 = vpop.f32.mrf.mxu0
  %v1948 = vadd.f32 %v275, %v1947
  %v1949 = vpop.f32.mrf.mxu0
  %v1950 = vadd.f32 %v275, %v1949
  %1951 = vmatmul.bf16.gmra.mxu0 %v1306
  %v1952 = vpop.f32.mrf.mxu0
  %v1953 = vadd.f32 %v275, %v1952
  %v1954 = vpop.f32.mrf.mxu0
  %v1955 = vadd.f32 %v275, %v1954
  %1956 = vdwg.mxu0
  %vm1957 = vcmp.ge.f32.partialorder %v1318, 0.0
  %vm1958 = vcmp.ge.f32.partialorder %v1320, 0.0
  %vm1959 = vcmp.ge.f32.partialorder %v1323, 0.0
  %vm1960 = vcmp.ge.f32.partialorder %v1325, 0.0
  %vm1961 = vcmp.ge.f32.partialorder %v1328, 0.0
  %vm1962 = vcmp.ge.f32.partialorder %v1330, 0.0
  %vm1963 = vcmp.ge.f32.partialorder %v1333, 0.0
  %vm1964 = vcmp.ge.f32.partialorder %v1335, 0.0
  %vm1965 = vcmp.ge.f32.partialorder %v1338, 0.0
  %vm1966 = vcmp.ge.f32.partialorder %v1340, 0.0
  %vm1967 = vcmp.ge.f32.partialorder %v1343, 0.0
  %vm1968 = vcmp.ge.f32.partialorder %v1345, 0.0
  %vm1969 = vcmp.ge.f32.partialorder %v1348, 0.0
  %vm1970 = vcmp.ge.f32.partialorder %v1350, 0.0
  %vm1971 = vcmp.ge.f32.partialorder %v1353, 0.0
  %vm1972 = vcmp.ge.f32.partialorder %v1355, 0.0
  %vm1973 = vcmp.ge.f32.partialorder %v1358, 0.0
  %vm1974 = vcmp.ge.f32.partialorder %v1360, 0.0
  %vm1975 = vcmp.ge.f32.partialorder %v1363, 0.0
  %vm1976 = vcmp.ge.f32.partialorder %v1365, 0.0
  %vm1977 = vcmp.ge.f32.partialorder %v1368, 0.0
  %vm1978 = vcmp.ge.f32.partialorder %v1370, 0.0
  %vm1979 = vcmp.ge.f32.partialorder %v1373, 0.0
  %vm1980 = vcmp.ge.f32.partialorder %v1375, 0.0
  %vm1981 = vcmp.ge.f32.partialorder %v1378, 0.0
  %vm1982 = vcmp.ge.f32.partialorder %v1380, 0.0
  %vm1983 = vcmp.ge.f32.partialorder %v1383, 0.0
  %vm1984 = vcmp.ge.f32.partialorder %v1385, 0.0
  %vm1985 = vcmp.ge.f32.partialorder %v1388, 0.0
  %vm1986 = vcmp.ge.f32.partialorder %v1390, 0.0
  %vm1987 = vcmp.ge.f32.partialorder %v1393, 0.0
  %vm1988 = vcmp.ge.f32.partialorder %v1395, 0.0
  %vm1989 = vcmp.ge.f32.partialorder %v1398, 0.0
  %vm1990 = vcmp.ge.f32.partialorder %v1400, 0.0
  %vm1991 = vcmp.ge.f32.partialorder %v1403, 0.0
  %vm1992 = vcmp.ge.f32.partialorder %v1405, 0.0
  %vm1993 = vcmp.ge.f32.partialorder %v1408, 0.0
  %vm1994 = vcmp.ge.f32.partialorder %v1410, 0.0
  %vm1995 = vcmp.ge.f32.partialorder %v1413, 0.0
  %vm1996 = vcmp.ge.f32.partialorder %v1415, 0.0
  %vm1997 = vcmp.ge.f32.partialorder %v1418, 0.0
  %vm1998 = vcmp.ge.f32.partialorder %v1420, 0.0
  %vm1999 = vcmp.ge.f32.partialorder %v1423, 0.0
  %vm2000 = vcmp.ge.f32.partialorder %v1425, 0.0
  %vm2001 = vcmp.ge.f32.partialorder %v1428, 0.0
  %vm2002 = vcmp.ge.f32.partialorder %v1430, 0.0
  %vm2003 = vcmp.ge.f32.partialorder %v1433, 0.0
  %vm2004 = vcmp.ge.f32.partialorder %v1435, 0.0
  %vm2005 = vcmp.ge.f32.partialorder %v1438, 0.0
  %vm2006 = vcmp.ge.f32.partialorder %v1440, 0.0
  %vm2007 = vcmp.ge.f32.partialorder %v1443, 0.0
  %vm2008 = vcmp.ge.f32.partialorder %v1445, 0.0
  %vm2009 = vcmp.ge.f32.partialorder %v1448, 0.0
  %vm2010 = vcmp.ge.f32.partialorder %v1450, 0.0
  %vm2011 = vcmp.ge.f32.partialorder %v1453, 0.0
  %vm2012 = vcmp.ge.f32.partialorder %v1455, 0.0
  %vm2013 = vcmp.ge.f32.partialorder %v1458, 0.0
  %vm2014 = vcmp.ge.f32.partialorder %v1460, 0.0
  %vm2015 = vcmp.ge.f32.partialorder %v1463, 0.0
  %vm2016 = vcmp.ge.f32.partialorder %v1465, 0.0
  %vm2017 = vcmp.ge.f32.partialorder %v1468, 0.0
  %vm2018 = vcmp.ge.f32.partialorder %v1470, 0.0
  %vm2019 = vcmp.ge.f32.partialorder %v1473, 0.0
  %vm2020 = vcmp.ge.f32.partialorder %v1475, 0.0
  %vm2021 = vcmp.ge.f32.partialorder %v1478, 0.0
  %vm2022 = vcmp.ge.f32.partialorder %v1480, 0.0
  %vm2023 = vcmp.ge.f32.partialorder %v1483, 0.0
  %vm2024 = vcmp.ge.f32.partialorder %v1485, 0.0
  %vm2025 = vcmp.ge.f32.partialorder %v1488, 0.0
  %vm2026 = vcmp.ge.f32.partialorder %v1490, 0.0
  %vm2027 = vcmp.ge.f32.partialorder %v1493, 0.0
  %vm2028 = vcmp.ge.f32.partialorder %v1495, 0.0
  %vm2029 = vcmp.ge.f32.partialorder %v1498, 0.0
  %vm2030 = vcmp.ge.f32.partialorder %v1500, 0.0
  %vm2031 = vcmp.ge.f32.partialorder %v1503, 0.0
  %vm2032 = vcmp.ge.f32.partialorder %v1505, 0.0
  %vm2033 = vcmp.ge.f32.partialorder %v1508, 0.0
  %vm2034 = vcmp.ge.f32.partialorder %v1510, 0.0
  %vm2035 = vcmp.ge.f32.partialorder %v1513, 0.0
  %vm2036 = vcmp.ge.f32.partialorder %v1515, 0.0
  %vm2037 = vcmp.ge.f32.partialorder %v1518, 0.0
  %vm2038 = vcmp.ge.f32.partialorder %v1520, 0.0
  %vm2039 = vcmp.ge.f32.partialorder %v1523, 0.0
  %vm2040 = vcmp.ge.f32.partialorder %v1525, 0.0
  %vm2041 = vcmp.ge.f32.partialorder %v1528, 0.0
  %vm2042 = vcmp.ge.f32.partialorder %v1530, 0.0
  %vm2043 = vcmp.ge.f32.partialorder %v1533, 0.0
  %vm2044 = vcmp.ge.f32.partialorder %v1535, 0.0
  %vm2045 = vcmp.ge.f32.partialorder %v1538, 0.0
  %vm2046 = vcmp.ge.f32.partialorder %v1540, 0.0
  %vm2047 = vcmp.ge.f32.partialorder %v1543, 0.0
  %vm2048 = vcmp.ge.f32.partialorder %v1545, 0.0
  %vm2049 = vcmp.ge.f32.partialorder %v1548, 0.0
  %vm2050 = vcmp.ge.f32.partialorder %v1550, 0.0
  %vm2051 = vcmp.ge.f32.partialorder %v1553, 0.0
  %vm2052 = vcmp.ge.f32.partialorder %v1555, 0.0
  %vm2053 = vcmp.ge.f32.partialorder %v1558, 0.0
  %vm2054 = vcmp.ge.f32.partialorder %v1560, 0.0
  %vm2055 = vcmp.ge.f32.partialorder %v1563, 0.0
  %vm2056 = vcmp.ge.f32.partialorder %v1565, 0.0
  %vm2057 = vcmp.ge.f32.partialorder %v1568, 0.0
  %vm2058 = vcmp.ge.f32.partialorder %v1570, 0.0
  %vm2059 = vcmp.ge.f32.partialorder %v1573, 0.0
  %vm2060 = vcmp.ge.f32.partialorder %v1575, 0.0
  %vm2061 = vcmp.ge.f32.partialorder %v1578, 0.0
  %vm2062 = vcmp.ge.f32.partialorder %v1580, 0.0
  %vm2063 = vcmp.ge.f32.partialorder %v1583, 0.0
  %vm2064 = vcmp.ge.f32.partialorder %v1585, 0.0
  %vm2065 = vcmp.ge.f32.partialorder %v1588, 0.0
  %vm2066 = vcmp.ge.f32.partialorder %v1590, 0.0
  %vm2067 = vcmp.ge.f32.partialorder %v1593, 0.0
  %vm2068 = vcmp.ge.f32.partialorder %v1595, 0.0
  %vm2069 = vcmp.ge.f32.partialorder %v1598, 0.0
  %vm2070 = vcmp.ge.f32.partialorder %v1600, 0.0
  %vm2071 = vcmp.ge.f32.partialorder %v1603, 0.0
  %vm2072 = vcmp.ge.f32.partialorder %v1605, 0.0
  %vm2073 = vcmp.ge.f32.partialorder %v1608, 0.0
  %vm2074 = vcmp.ge.f32.partialorder %v1610, 0.0
  %vm2075 = vcmp.ge.f32.partialorder %v1613, 0.0
  %vm2076 = vcmp.ge.f32.partialorder %v1615, 0.0
  %vm2077 = vcmp.ge.f32.partialorder %v1618, 0.0
  %vm2078 = vcmp.ge.f32.partialorder %v1620, 0.0
  %vm2079 = vcmp.ge.f32.partialorder %v1623, 0.0
  %vm2080 = vcmp.ge.f32.partialorder %v1625, 0.0
  %vm2081 = vcmp.ge.f32.partialorder %v1628, 0.0
  %vm2082 = vcmp.ge.f32.partialorder %v1630, 0.0
  %vm2083 = vcmp.ge.f32.partialorder %v1633, 0.0
  %vm2084 = vcmp.ge.f32.partialorder %v1635, 0.0
  %vm2085 = vcmp.ge.f32.partialorder %v1638, 0.0
  %vm2086 = vcmp.ge.f32.partialorder %v1640, 0.0
  %vm2087 = vcmp.ge.f32.partialorder %v1643, 0.0
  %vm2088 = vcmp.ge.f32.partialorder %v1645, 0.0
  %vm2089 = vcmp.ge.f32.partialorder %v1648, 0.0
  %vm2090 = vcmp.ge.f32.partialorder %v1650, 0.0
  %vm2091 = vcmp.ge.f32.partialorder %v1653, 0.0
  %vm2092 = vcmp.ge.f32.partialorder %v1655, 0.0
  %vm2093 = vcmp.ge.f32.partialorder %v1658, 0.0
  %vm2094 = vcmp.ge.f32.partialorder %v1660, 0.0
  %vm2095 = vcmp.ge.f32.partialorder %v1663, 0.0
  %vm2096 = vcmp.ge.f32.partialorder %v1665, 0.0
  %vm2097 = vcmp.ge.f32.partialorder %v1668, 0.0
  %vm2098 = vcmp.ge.f32.partialorder %v1670, 0.0
  %vm2099 = vcmp.ge.f32.partialorder %v1673, 0.0
  %vm2100 = vcmp.ge.f32.partialorder %v1675, 0.0
  %vm2101 = vcmp.ge.f32.partialorder %v1678, 0.0
  %vm2102 = vcmp.ge.f32.partialorder %v1680, 0.0
  %vm2103 = vcmp.ge.f32.partialorder %v1683, 0.0
  %vm2104 = vcmp.ge.f32.partialorder %v1685, 0.0
  %vm2105 = vcmp.ge.f32.partialorder %v1688, 0.0
  %vm2106 = vcmp.ge.f32.partialorder %v1690, 0.0
  %vm2107 = vcmp.ge.f32.partialorder %v1693, 0.0
  %vm2108 = vcmp.ge.f32.partialorder %v1695, 0.0
  %vm2109 = vcmp.ge.f32.partialorder %v1698, 0.0
  %vm2110 = vcmp.ge.f32.partialorder %v1700, 0.0
  %vm2111 = vcmp.ge.f32.partialorder %v1703, 0.0
  %vm2112 = vcmp.ge.f32.partialorder %v1705, 0.0
  %vm2113 = vcmp.ge.f32.partialorder %v1708, 0.0
  %vm2114 = vcmp.ge.f32.partialorder %v1710, 0.0
  %vm2115 = vcmp.ge.f32.partialorder %v1713, 0.0
  %vm2116 = vcmp.ge.f32.partialorder %v1715, 0.0
  %vm2117 = vcmp.ge.f32.partialorder %v1718, 0.0
  %vm2118 = vcmp.ge.f32.partialorder %v1720, 0.0
  %vm2119 = vcmp.ge.f32.partialorder %v1723, 0.0
  %vm2120 = vcmp.ge.f32.partialorder %v1725, 0.0
  %vm2121 = vcmp.ge.f32.partialorder %v1728, 0.0
  %vm2122 = vcmp.ge.f32.partialorder %v1730, 0.0
  %vm2123 = vcmp.ge.f32.partialorder %v1733, 0.0
  %vm2124 = vcmp.ge.f32.partialorder %v1735, 0.0
  %vm2125 = vcmp.ge.f32.partialorder %v1738, 0.0
  %vm2126 = vcmp.ge.f32.partialorder %v1740, 0.0
  %vm2127 = vcmp.ge.f32.partialorder %v1743, 0.0
  %vm2128 = vcmp.ge.f32.partialorder %v1745, 0.0
  %vm2129 = vcmp.ge.f32.partialorder %v1748, 0.0
  %vm2130 = vcmp.ge.f32.partialorder %v1750, 0.0
  %vm2131 = vcmp.ge.f32.partialorder %v1753, 0.0
  %vm2132 = vcmp.ge.f32.partialorder %v1755, 0.0
  %vm2133 = vcmp.ge.f32.partialorder %v1758, 0.0
  %vm2134 = vcmp.ge.f32.partialorder %v1760, 0.0
  %vm2135 = vcmp.ge.f32.partialorder %v1763, 0.0
  %vm2136 = vcmp.ge.f32.partialorder %v1765, 0.0
  %vm2137 = vcmp.ge.f32.partialorder %v1768, 0.0
  %vm2138 = vcmp.ge.f32.partialorder %v1770, 0.0
  %vm2139 = vcmp.ge.f32.partialorder %v1773, 0.0
  %vm2140 = vcmp.ge.f32.partialorder %v1775, 0.0
  %vm2141 = vcmp.ge.f32.partialorder %v1778, 0.0
  %vm2142 = vcmp.ge.f32.partialorder %v1780, 0.0
  %vm2143 = vcmp.ge.f32.partialorder %v1783, 0.0
  %vm2144 = vcmp.ge.f32.partialorder %v1785, 0.0
  %vm2145 = vcmp.ge.f32.partialorder %v1788, 0.0
  %vm2146 = vcmp.ge.f32.partialorder %v1790, 0.0
  %vm2147 = vcmp.ge.f32.partialorder %v1793, 0.0
  %vm2148 = vcmp.ge.f32.partialorder %v1795, 0.0
  %vm2149 = vcmp.ge.f32.partialorder %v1798, 0.0
  %vm2150 = vcmp.ge.f32.partialorder %v1800, 0.0
  %vm2151 = vcmp.ge.f32.partialorder %v1803, 0.0
  %vm2152 = vcmp.ge.f32.partialorder %v1805, 0.0
  %vm2153 = vcmp.ge.f32.partialorder %v1808, 0.0
  %vm2154 = vcmp.ge.f32.partialorder %v1810, 0.0
  %vm2155 = vcmp.ge.f32.partialorder %v1813, 0.0
  %vm2156 = vcmp.ge.f32.partialorder %v1815, 0.0
  %vm2157 = vcmp.ge.f32.partialorder %v1818, 0.0
  %vm2158 = vcmp.ge.f32.partialorder %v1820, 0.0
  %vm2159 = vcmp.ge.f32.partialorder %v1823, 0.0
  %vm2160 = vcmp.ge.f32.partialorder %v1825, 0.0
  %vm2161 = vcmp.ge.f32.partialorder %v1828, 0.0
  %vm2162 = vcmp.ge.f32.partialorder %v1830, 0.0
  %vm2163 = vcmp.ge.f32.partialorder %v1833, 0.0
  %vm2164 = vcmp.ge.f32.partialorder %v1835, 0.0
  %vm2165 = vcmp.ge.f32.partialorder %v1838, 0.0
  %vm2166 = vcmp.ge.f32.partialorder %v1840, 0.0
  %vm2167 = vcmp.ge.f32.partialorder %v1843, 0.0
  %vm2168 = vcmp.ge.f32.partialorder %v1845, 0.0
  %vm2169 = vcmp.ge.f32.partialorder %v1848, 0.0
  %vm2170 = vcmp.ge.f32.partialorder %v1850, 0.0
  %vm2171 = vcmp.ge.f32.partialorder %v1853, 0.0
  %vm2172 = vcmp.ge.f32.partialorder %v1855, 0.0
  %vm2173 = vcmp.ge.f32.partialorder %v1858, 0.0
  %vm2174 = vcmp.ge.f32.partialorder %v1860, 0.0
  %vm2175 = vcmp.ge.f32.partialorder %v1863, 0.0
  %vm2176 = vcmp.ge.f32.partialorder %v1865, 0.0
  %vm2177 = vcmp.ge.f32.partialorder %v1868, 0.0
  %vm2178 = vcmp.ge.f32.partialorder %v1870, 0.0
  %vm2179 = vcmp.ge.f32.partialorder %v1873, 0.0
  %vm2180 = vcmp.ge.f32.partialorder %v1875, 0.0
  %vm2181 = vcmp.ge.f32.partialorder %v1878, 0.0
  %vm2182 = vcmp.ge.f32.partialorder %v1880, 0.0
  %vm2183 = vcmp.ge.f32.partialorder %v1883, 0.0
  %vm2184 = vcmp.ge.f32.partialorder %v1885, 0.0
  %vm2185 = vcmp.ge.f32.partialorder %v1888, 0.0
  %vm2186 = vcmp.ge.f32.partialorder %v1890, 0.0
  %vm2187 = vcmp.ge.f32.partialorder %v1893, 0.0
  %vm2188 = vcmp.ge.f32.partialorder %v1895, 0.0
  %vm2189 = vcmp.ge.f32.partialorder %v1898, 0.0
  %vm2190 = vcmp.ge.f32.partialorder %v1900, 0.0
  %vm2191 = vcmp.ge.f32.partialorder %v1903, 0.0
  %vm2192 = vcmp.ge.f32.partialorder %v1905, 0.0
  %vm2193 = vcmp.ge.f32.partialorder %v1908, 0.0
  %vm2194 = vcmp.ge.f32.partialorder %v1910, 0.0
  %vm2195 = vcmp.ge.f32.partialorder %v1913, 0.0
  %vm2196 = vcmp.ge.f32.partialorder %v1915, 0.0
  %vm2197 = vcmp.ge.f32.partialorder %v1918, 0.0
  %vm2198 = vcmp.ge.f32.partialorder %v1920, 0.0
  %vm2199 = vcmp.ge.f32.partialorder %v1923, 0.0
  %vm2200 = vcmp.ge.f32.partialorder %v1925, 0.0
  %vm2201 = vcmp.ge.f32.partialorder %v1928, 0.0
  %vm2202 = vcmp.ge.f32.partialorder %v1930, 0.0
  %vm2203 = vcmp.ge.f32.partialorder %v1933, 0.0
  %vm2204 = vcmp.ge.f32.partialorder %v1935, 0.0
  %vm2205 = vcmp.ge.f32.partialorder %v1938, 0.0
  %vm2206 = vcmp.ge.f32.partialorder %v1940, 0.0
  %vm2207 = vcmp.ge.f32.partialorder %v1943, 0.0
  %vm2208 = vcmp.ge.f32.partialorder %v1945, 0.0
  %vm2209 = vcmp.ge.f32.partialorder %v1948, 0.0
  %vm2210 = vcmp.ge.f32.partialorder %v1950, 0.0
  %vm2211 = vcmp.ge.f32.partialorder %v1953, 0.0
  %vm2212 = vcmp.ge.f32.partialorder %v1955, 0.0
  %v2213 = vmul.f32 %v1318, 0.1
  %v2214 = vmul.f32 %v1320, 0.1
  %v2215 = vmul.f32 %v1323, 0.1
  %v2216 = vmul.f32 %v1325, 0.1
  %v2217 = vmul.f32 %v1328, 0.1
  %v2218 = vmul.f32 %v1330, 0.1
  %v2219 = vmul.f32 %v1333, 0.1
  %v2220 = vmul.f32 %v1335, 0.1
  %v2221 = vmul.f32 %v1338, 0.1
  %v2222 = vmul.f32 %v1340, 0.1
  %v2223 = vmul.f32 %v1343, 0.1
  %v2224 = vmul.f32 %v1345, 0.1
  %v2225 = vmul.f32 %v1348, 0.1
  %v2226 = vmul.f32 %v1350, 0.1
  %v2227 = vmul.f32 %v1353, 0.1
  %v2228 = vmul.f32 %v1355, 0.1
  %v2229 = vmul.f32 %v1358, 0.1
  %v2230 = vmul.f32 %v1360, 0.1
  %v2231 = vmul.f32 %v1363, 0.1
  %v2232 = vmul.f32 %v1365, 0.1
  %v2233 = vmul.f32 %v1368, 0.1
  %v2234 = vmul.f32 %v1370, 0.1
  %v2235 = vmul.f32 %v1373, 0.1
  %v2236 = vmul.f32 %v1375, 0.1
  %v2237 = vmul.f32 %v1378, 0.1
  %v2238 = vmul.f32 %v1380, 0.1
  %v2239 = vmul.f32 %v1383, 0.1
  %v2240 = vmul.f32 %v1385, 0.1
  %v2241 = vmul.f32 %v1388, 0.1
  %v2242 = vmul.f32 %v1390, 0.1
  %v2243 = vmul.f32 %v1393, 0.1
  %v2244 = vmul.f32 %v1395, 0.1
  %v2245 = vmul.f32 %v1398, 0.1
  %v2246 = vmul.f32 %v1400, 0.1
  %v2247 = vmul.f32 %v1403, 0.1
  %v2248 = vmul.f32 %v1405, 0.1
  %v2249 = vmul.f32 %v1408, 0.1
  %v2250 = vmul.f32 %v1410, 0.1
  %v2251 = vmul.f32 %v1413, 0.1
  %v2252 = vmul.f32 %v1415, 0.1
  %v2253 = vmul.f32 %v1418, 0.1
  %v2254 = vmul.f32 %v1420, 0.1
  %v2255 = vmul.f32 %v1423, 0.1
  %v2256 = vmul.f32 %v1425, 0.1
  %v2257 = vmul.f32 %v1428, 0.1
  %v2258 = vmul.f32 %v1430, 0.1
  %v2259 = vmul.f32 %v1433, 0.1
  %v2260 = vmul.f32 %v1435, 0.1
  %v2261 = vmul.f32 %v1438, 0.1
  %v2262 = vmul.f32 %v1440, 0.1
  %v2263 = vmul.f32 %v1443, 0.1
  %v2264 = vmul.f32 %v1445, 0.1
  %v2265 = vmul.f32 %v1448, 0.1
  %v2266 = vmul.f32 %v1450, 0.1
  %v2267 = vmul.f32 %v1453, 0.1
  %v2268 = vmul.f32 %v1455, 0.1
  %v2269 = vmul.f32 %v1458, 0.1
  %v2270 = vmul.f32 %v1460, 0.1
  %v2271 = vmul.f32 %v1463, 0.1
  %v2272 = vmul.f32 %v1465, 0.1
  %v2273 = vmul.f32 %v1468, 0.1
  %v2274 = vmul.f32 %v1470, 0.1
  %v2275 = vmul.f32 %v1473, 0.1
  %v2276 = vmul.f32 %v1475, 0.1
  %v2277 = vmul.f32 %v1478, 0.1
  %v2278 = vmul.f32 %v1480, 0.1
  %v2279 = vmul.f32 %v1483, 0.1
  %v2280 = vmul.f32 %v1485, 0.1
  %v2281 = vmul.f32 %v1488, 0.1
  %v2282 = vmul.f32 %v1490, 0.1
  %v2283 = vmul.f32 %v1493, 0.1
  %v2284 = vmul.f32 %v1495, 0.1
  %v2285 = vmul.f32 %v1498, 0.1
  %v2286 = vmul.f32 %v1500, 0.1
  %v2287 = vmul.f32 %v1503, 0.1
  %v2288 = vmul.f32 %v1505, 0.1
  %v2289 = vmul.f32 %v1508, 0.1
  %v2290 = vmul.f32 %v1510, 0.1
  %v2291 = vmul.f32 %v1513, 0.1
  %v2292 = vmul.f32 %v1515, 0.1
  %v2293 = vmul.f32 %v1518, 0.1
  %v2294 = vmul.f32 %v1520, 0.1
  %v2295 = vmul.f32 %v1523, 0.1
  %v2296 = vmul.f32 %v1525, 0.1
  %v2297 = vmul.f32 %v1528, 0.1
  %v2298 = vmul.f32 %v1530, 0.1
  %v2299 = vmul.f32 %v1533, 0.1
  %v2300 = vmul.f32 %v1535, 0.1
  %v2301 = vmul.f32 %v1538, 0.1
  %v2302 = vmul.f32 %v1540, 0.1
  %v2303 = vmul.f32 %v1543, 0.1
  %v2304 = vmul.f32 %v1545, 0.1
  %v2305 = vmul.f32 %v1548, 0.1
  %v2306 = vmul.f32 %v1550, 0.1
  %v2307 = vmul.f32 %v1553, 0.1
  %v2308 = vmul.f32 %v1555, 0.1
  %v2309 = vmul.f32 %v1558, 0.1
  %v2310 = vmul.f32 %v1560, 0.1
  %v2311 = vmul.f32 %v1563, 0.1
  %v2312 = vmul.f32 %v1565, 0.1
  %v2313 = vmul.f32 %v1568, 0.1
  %v2314 = vmul.f32 %v1570, 0.1
  %v2315 = vmul.f32 %v1573, 0.1
  %v2316 = vmul.f32 %v1575, 0.1
  %v2317 = vmul.f32 %v1578, 0.1
  %v2318 = vmul.f32 %v1580, 0.1
  %v2319 = vmul.f32 %v1583, 0.1
  %v2320 = vmul.f32 %v1585, 0.1
  %v2321 = vmul.f32 %v1588, 0.1
  %v2322 = vmul.f32 %v1590, 0.1
  %v2323 = vmul.f32 %v1593, 0.1
  %v2324 = vmul.f32 %v1595, 0.1
  %v2325 = vmul.f32 %v1598, 0.1
  %v2326 = vmul.f32 %v1600, 0.1
  %v2327 = vmul.f32 %v1603, 0.1
  %v2328 = vmul.f32 %v1605, 0.1
  %v2329 = vmul.f32 %v1608, 0.1
  %v2330 = vmul.f32 %v1610, 0.1
  %v2331 = vmul.f32 %v1613, 0.1
  %v2332 = vmul.f32 %v1615, 0.1
  %v2333 = vmul.f32 %v1618, 0.1
  %v2334 = vmul.f32 %v1620, 0.1
  %v2335 = vmul.f32 %v1623, 0.1
  %v2336 = vmul.f32 %v1625, 0.1
  %v2337 = vmul.f32 %v1628, 0.1
  %v2338 = vmul.f32 %v1630, 0.1
  %v2339 = vmul.f32 %v1633, 0.1
  %v2340 = vmul.f32 %v1635, 0.1
  %v2341 = vmul.f32 %v1638, 0.1
  %v2342 = vmul.f32 %v1640, 0.1
  %v2343 = vmul.f32 %v1643, 0.1
  %v2344 = vmul.f32 %v1645, 0.1
  %v2345 = vmul.f32 %v1648, 0.1
  %v2346 = vmul.f32 %v1650, 0.1
  %v2347 = vmul.f32 %v1653, 0.1
  %v2348 = vmul.f32 %v1655, 0.1
  %v2349 = vmul.f32 %v1658, 0.1
  %v2350 = vmul.f32 %v1660, 0.1
  %v2351 = vmul.f32 %v1663, 0.1
  %v2352 = vmul.f32 %v1665, 0.1
  %v2353 = vmul.f32 %v1668, 0.1
  %v2354 = vmul.f32 %v1670, 0.1
  %v2355 = vmul.f32 %v1673, 0.1
  %v2356 = vmul.f32 %v1675, 0.1
  %v2357 = vmul.f32 %v1678, 0.1
  %v2358 = vmul.f32 %v1680, 0.1
  %v2359 = vmul.f32 %v1683, 0.1
  %v2360 = vmul.f32 %v1685, 0.1
  %v2361 = vmul.f32 %v1688, 0.1
  %v2362 = vmul.f32 %v1690, 0.1
  %v2363 = vmul.f32 %v1693, 0.1
  %v2364 = vmul.f32 %v1695, 0.1
  %v2365 = vmul.f32 %v1698, 0.1
  %v2366 = vmul.f32 %v1700, 0.1
  %v2367 = vmul.f32 %v1703, 0.1
  %v2368 = vmul.f32 %v1705, 0.1
  %v2369 = vmul.f32 %v1708, 0.1
  %v2370 = vmul.f32 %v1710, 0.1
  %v2371 = vmul.f32 %v1713, 0.1
  %v2372 = vmul.f32 %v1715, 0.1
  %v2373 = vmul.f32 %v1718, 0.1
  %v2374 = vmul.f32 %v1720, 0.1
  %v2375 = vmul.f32 %v1723, 0.1
  %v2376 = vmul.f32 %v1725, 0.1
  %v2377 = vmul.f32 %v1728, 0.1
  %v2378 = vmul.f32 %v1730, 0.1
  %v2379 = vmul.f32 %v1733, 0.1
  %v2380 = vmul.f32 %v1735, 0.1
  %v2381 = vmul.f32 %v1738, 0.1
  %v2382 = vmul.f32 %v1740, 0.1
  %v2383 = vmul.f32 %v1743, 0.1
  %v2384 = vmul.f32 %v1745, 0.1
  %v2385 = vmul.f32 %v1748, 0.1
  %v2386 = vmul.f32 %v1750, 0.1
  %v2387 = vmul.f32 %v1753, 0.1
  %v2388 = vmul.f32 %v1755, 0.1
  %v2389 = vmul.f32 %v1758, 0.1
  %v2390 = vmul.f32 %v1760, 0.1
  %v2391 = vmul.f32 %v1763, 0.1
  %v2392 = vmul.f32 %v1765, 0.1
  %v2393 = vmul.f32 %v1768, 0.1
  %v2394 = vmul.f32 %v1770, 0.1
  %v2395 = vmul.f32 %v1773, 0.1
  %v2396 = vmul.f32 %v1775, 0.1
  %v2397 = vmul.f32 %v1778, 0.1
  %v2398 = vmul.f32 %v1780, 0.1
  %v2399 = vmul.f32 %v1783, 0.1
  %v2400 = vmul.f32 %v1785, 0.1
  %v2401 = vmul.f32 %v1788, 0.1
  %v2402 = vmul.f32 %v1790, 0.1
  %v2403 = vmul.f32 %v1793, 0.1
  %v2404 = vmul.f32 %v1795, 0.1
  %v2405 = vmul.f32 %v1798, 0.1
  %v2406 = vmul.f32 %v1800, 0.1
  %v2407 = vmul.f32 %v1803, 0.1
  %v2408 = vmul.f32 %v1805, 0.1
  %v2409 = vmul.f32 %v1808, 0.1
  %v2410 = vmul.f32 %v1810, 0.1
  %v2411 = vmul.f32 %v1813, 0.1
  %v2412 = vmul.f32 %v1815, 0.1
  %v2413 = vmul.f32 %v1818, 0.1
  %v2414 = vmul.f32 %v1820, 0.1
  %v2415 = vmul.f32 %v1823, 0.1
  %v2416 = vmul.f32 %v1825, 0.1
  %v2417 = vmul.f32 %v1828, 0.1
  %v2418 = vmul.f32 %v1830, 0.1
  %v2419 = vmul.f32 %v1833, 0.1
  %v2420 = vmul.f32 %v1835, 0.1
  %v2421 = vmul.f32 %v1838, 0.1
  %v2422 = vmul.f32 %v1840, 0.1
  %v2423 = vmul.f32 %v1843, 0.1
  %v2424 = vmul.f32 %v1845, 0.1
  %v2425 = vmul.f32 %v1848, 0.1
  %v2426 = vmul.f32 %v1850, 0.1
  %v2427 = vmul.f32 %v1853, 0.1
  %v2428 = vmul.f32 %v1855, 0.1
  %v2429 = vmul.f32 %v1858, 0.1
  %v2430 = vmul.f32 %v1860, 0.1
  %v2431 = vmul.f32 %v1863, 0.1
  %v2432 = vmul.f32 %v1865, 0.1
  %v2433 = vmul.f32 %v1868, 0.1
  %v2434 = vmul.f32 %v1870, 0.1
  %v2435 = vmul.f32 %v1873, 0.1
  %v2436 = vmul.f32 %v1875, 0.1
  %v2437 = vmul.f32 %v1878, 0.1
  %v2438 = vmul.f32 %v1880, 0.1
  %v2439 = vmul.f32 %v1883, 0.1
  %v2440 = vmul.f32 %v1885, 0.1
  %v2441 = vmul.f32 %v1888, 0.1
  %v2442 = vmul.f32 %v1890, 0.1
  %v2443 = vmul.f32 %v1893, 0.1
  %v2444 = vmul.f32 %v1895, 0.1
  %v2445 = vmul.f32 %v1898, 0.1
  %v2446 = vmul.f32 %v1900, 0.1
  %v2447 = vmul.f32 %v1903, 0.1
  %v2448 = vmul.f32 %v1905, 0.1
  %v2449 = vmul.f32 %v1908, 0.1
  %v2450 = vmul.f32 %v1910, 0.1
  %v2451 = vmul.f32 %v1913, 0.1
  %v2452 = vmul.f32 %v1915, 0.1
  %v2453 = vmul.f32 %v1918, 0.1
  %v2454 = vmul.f32 %v1920, 0.1
  %v2455 = vmul.f32 %v1923, 0.1
  %v2456 = vmul.f32 %v1925, 0.1
  %v2457 = vmul.f32 %v1928, 0.1
  %v2458 = vmul.f32 %v1930, 0.1
  %v2459 = vmul.f32 %v1933, 0.1
  %v2460 = vmul.f32 %v1935, 0.1
  %v2461 = vmul.f32 %v1938, 0.1
  %v2462 = vmul.f32 %v1940, 0.1
  %v2463 = vmul.f32 %v1943, 0.1
  %v2464 = vmul.f32 %v1945, 0.1
  %v2465 = vmul.f32 %v1948, 0.1
  %v2466 = vmul.f32 %v1950, 0.1
  %v2467 = vmul.f32 %v1953, 0.1
  %v2468 = vmul.f32 %v1955, 0.1
  %v2469 = vsel %vm1957, %v1318, %v2213
  %v2470 = vsel %vm1958, %v1320, %v2214
  %v2471 = vsel %vm1959, %v1323, %v2215
  %v2472 = vsel %vm1960, %v1325, %v2216
  %v2473 = vsel %vm1961, %v1328, %v2217
  %v2474 = vsel %vm1962, %v1330, %v2218
  %v2475 = vsel %vm1963, %v1333, %v2219
  %v2476 = vsel %vm1964, %v1335, %v2220
  %v2477 = vsel %vm1965, %v1338, %v2221
  %v2478 = vsel %vm1966, %v1340, %v2222
  %v2479 = vsel %vm1967, %v1343, %v2223
  %v2480 = vsel %vm1968, %v1345, %v2224
  %v2481 = vsel %vm1969, %v1348, %v2225
  %v2482 = vsel %vm1970, %v1350, %v2226
  %v2483 = vsel %vm1971, %v1353, %v2227
  %v2484 = vsel %vm1972, %v1355, %v2228
  %v2485 = vsel %vm1973, %v1358, %v2229
  %v2486 = vsel %vm1974, %v1360, %v2230
  %v2487 = vsel %vm1975, %v1363, %v2231
  %v2488 = vsel %vm1976, %v1365, %v2232
  %v2489 = vsel %vm1977, %v1368, %v2233
  %v2490 = vsel %vm1978, %v1370, %v2234
  %v2491 = vsel %vm1979, %v1373, %v2235
  %v2492 = vsel %vm1980, %v1375, %v2236
  %v2493 = vsel %vm1981, %v1378, %v2237
  %v2494 = vsel %vm1982, %v1380, %v2238
  %v2495 = vsel %vm1983, %v1383, %v2239
  %v2496 = vsel %vm1984, %v1385, %v2240
  %v2497 = vsel %vm1985, %v1388, %v2241
  %v2498 = vsel %vm1986, %v1390, %v2242
  %v2499 = vsel %vm1987, %v1393, %v2243
  %v2500 = vsel %vm1988, %v1395, %v2244
  %v2501 = vsel %vm1989, %v1398, %v2245
  %v2502 = vsel %vm1990, %v1400, %v2246
  %v2503 = vsel %vm1991, %v1403, %v2247
  %v2504 = vsel %vm1992, %v1405, %v2248
  %v2505 = vsel %vm1993, %v1408, %v2249
  %v2506 = vsel %vm1994, %v1410, %v2250
  %v2507 = vsel %vm1995, %v1413, %v2251
  %v2508 = vsel %vm1996, %v1415, %v2252
  %v2509 = vsel %vm1997, %v1418, %v2253
  %v2510 = vsel %vm1998, %v1420, %v2254
  %v2511 = vsel %vm1999, %v1423, %v2255
  %v2512 = vsel %vm2000, %v1425, %v2256
  %v2513 = vsel %vm2001, %v1428, %v2257
  %v2514 = vsel %vm2002, %v1430, %v2258
  %v2515 = vsel %vm2003, %v1433, %v2259
  %v2516 = vsel %vm2004, %v1435, %v2260
  %v2517 = vsel %vm2005, %v1438, %v2261
  %v2518 = vsel %vm2006, %v1440, %v2262
  %v2519 = vsel %vm2007, %v1443, %v2263
  %v2520 = vsel %vm2008, %v1445, %v2264
  %v2521 = vsel %vm2009, %v1448, %v2265
  %v2522 = vsel %vm2010, %v1450, %v2266
  %v2523 = vsel %vm2011, %v1453, %v2267
  %v2524 = vsel %vm2012, %v1455, %v2268
  %v2525 = vsel %vm2013, %v1458, %v2269
  %v2526 = vsel %vm2014, %v1460, %v2270
  %v2527 = vsel %vm2015, %v1463, %v2271
  %v2528 = vsel %vm2016, %v1465, %v2272
  %v2529 = vsel %vm2017, %v1468, %v2273
  %v2530 = vsel %vm2018, %v1470, %v2274
  %v2531 = vsel %vm2019, %v1473, %v2275
  %v2532 = vsel %vm2020, %v1475, %v2276
  %v2533 = vsel %vm2021, %v1478, %v2277
  %v2534 = vsel %vm2022, %v1480, %v2278
  %v2535 = vsel %vm2023, %v1483, %v2279
  %v2536 = vsel %vm2024, %v1485, %v2280
  %v2537 = vsel %vm2025, %v1488, %v2281
  %v2538 = vsel %vm2026, %v1490, %v2282
  %v2539 = vsel %vm2027, %v1493, %v2283
  %v2540 = vsel %vm2028, %v1495, %v2284
  %v2541 = vsel %vm2029, %v1498, %v2285
  %v2542 = vsel %vm2030, %v1500, %v2286
  %v2543 = vsel %vm2031, %v1503, %v2287
  %v2544 = vsel %vm2032, %v1505, %v2288
  %v2545 = vsel %vm2033, %v1508, %v2289
  %v2546 = vsel %vm2034, %v1510, %v2290
  %v2547 = vsel %vm2035, %v1513, %v2291
  %v2548 = vsel %vm2036, %v1515, %v2292
  %v2549 = vsel %vm2037, %v1518, %v2293
  %v2550 = vsel %vm2038, %v1520, %v2294
  %v2551 = vsel %vm2039, %v1523, %v2295
  %v2552 = vsel %vm2040, %v1525, %v2296
  %v2553 = vsel %vm2041, %v1528, %v2297
  %v2554 = vsel %vm2042, %v1530, %v2298
  %v2555 = vsel %vm2043, %v1533, %v2299
  %v2556 = vsel %vm2044, %v1535, %v2300
  %v2557 = vsel %vm2045, %v1538, %v2301
  %v2558 = vsel %vm2046, %v1540, %v2302
  %v2559 = vsel %vm2047, %v1543, %v2303
  %v2560 = vsel %vm2048, %v1545, %v2304
  %v2561 = vsel %vm2049, %v1548, %v2305
  %v2562 = vsel %vm2050, %v1550, %v2306
  %v2563 = vsel %vm2051, %v1553, %v2307
  %v2564 = vsel %vm2052, %v1555, %v2308
  %v2565 = vsel %vm2053, %v1558, %v2309
  %v2566 = vsel %vm2054, %v1560, %v2310
  %v2567 = vsel %vm2055, %v1563, %v2311
  %v2568 = vsel %vm2056, %v1565, %v2312
  %v2569 = vsel %vm2057, %v1568, %v2313
  %v2570 = vsel %vm2058, %v1570, %v2314
  %v2571 = vsel %vm2059, %v1573, %v2315
  %v2572 = vsel %vm2060, %v1575, %v2316
  %v2573 = vsel %vm2061, %v1578, %v2317
  %v2574 = vsel %vm2062, %v1580, %v2318
  %v2575 = vsel %vm2063, %v1583, %v2319
  %v2576 = vsel %vm2064, %v1585, %v2320
  %v2577 = vsel %vm2065, %v1588, %v2321
  %v2578 = vsel %vm2066, %v1590, %v2322
  %v2579 = vsel %vm2067, %v1593, %v2323
  %v2580 = vsel %vm2068, %v1595, %v2324
  %v2581 = vsel %vm2069, %v1598, %v2325
  %v2582 = vsel %vm2070, %v1600, %v2326
  %v2583 = vsel %vm2071, %v1603, %v2327
  %v2584 = vsel %vm2072, %v1605, %v2328
  %v2585 = vsel %vm2073, %v1608, %v2329
  %v2586 = vsel %vm2074, %v1610, %v2330
  %v2587 = vsel %vm2075, %v1613, %v2331
  %v2588 = vsel %vm2076, %v1615, %v2332
  %v2589 = vsel %vm2077, %v1618, %v2333
  %v2590 = vsel %vm2078, %v1620, %v2334
  %v2591 = vsel %vm2079, %v1623, %v2335
  %v2592 = vsel %vm2080, %v1625, %v2336
  %v2593 = vsel %vm2081, %v1628, %v2337
  %v2594 = vsel %vm2082, %v1630, %v2338
  %v2595 = vsel %vm2083, %v1633, %v2339
  %v2596 = vsel %vm2084, %v1635, %v2340
  %v2597 = vsel %vm2085, %v1638, %v2341
  %v2598 = vsel %vm2086, %v1640, %v2342
  %v2599 = vsel %vm2087, %v1643, %v2343
  %v2600 = vsel %vm2088, %v1645, %v2344
  %v2601 = vsel %vm2089, %v1648, %v2345
  %v2602 = vsel %vm2090, %v1650, %v2346
  %v2603 = vsel %vm2091, %v1653, %v2347
  %v2604 = vsel %vm2092, %v1655, %v2348
  %v2605 = vsel %vm2093, %v1658, %v2349
  %v2606 = vsel %vm2094, %v1660, %v2350
  %v2607 = vsel %vm2095, %v1663, %v2351
  %v2608 = vsel %vm2096, %v1665, %v2352
  %v2609 = vsel %vm2097, %v1668, %v2353
  %v2610 = vsel %vm2098, %v1670, %v2354
  %v2611 = vsel %vm2099, %v1673, %v2355
  %v2612 = vsel %vm2100, %v1675, %v2356
  %v2613 = vsel %vm2101, %v1678, %v2357
  %v2614 = vsel %vm2102, %v1680, %v2358
  %v2615 = vsel %vm2103, %v1683, %v2359
  %v2616 = vsel %vm2104, %v1685, %v2360
  %v2617 = vsel %vm2105, %v1688, %v2361
  %v2618 = vsel %vm2106, %v1690, %v2362
  %v2619 = vsel %vm2107, %v1693, %v2363
  %v2620 = vsel %vm2108, %v1695, %v2364
  %v2621 = vsel %vm2109, %v1698, %v2365
  %v2622 = vsel %vm2110, %v1700, %v2366
  %v2623 = vsel %vm2111, %v1703, %v2367
  %v2624 = vsel %vm2112, %v1705, %v2368
  %v2625 = vsel %vm2113, %v1708, %v2369
  %v2626 = vsel %vm2114, %v1710, %v2370
  %v2627 = vsel %vm2115, %v1713, %v2371
  %v2628 = vsel %vm2116, %v1715, %v2372
  %v2629 = vsel %vm2117, %v1718, %v2373
  %v2630 = vsel %vm2118, %v1720, %v2374
  %v2631 = vsel %vm2119, %v1723, %v2375
  %v2632 = vsel %vm2120, %v1725, %v2376
  %v2633 = vsel %vm2121, %v1728, %v2377
  %v2634 = vsel %vm2122, %v1730, %v2378
  %v2635 = vsel %vm2123, %v1733, %v2379
  %v2636 = vsel %vm2124, %v1735, %v2380
  %v2637 = vsel %vm2125, %v1738, %v2381
  %v2638 = vsel %vm2126, %v1740, %v2382
  %v2639 = vsel %vm2127, %v1743, %v2383
  %v2640 = vsel %vm2128, %v1745, %v2384
  %v2641 = vsel %vm2129, %v1748, %v2385
  %v2642 = vsel %vm2130, %v1750, %v2386
  %v2643 = vsel %vm2131, %v1753, %v2387
  %v2644 = vsel %vm2132, %v1755, %v2388
  %v2645 = vsel %vm2133, %v1758, %v2389
  %v2646 = vsel %vm2134, %v1760, %v2390
  %v2647 = vsel %vm2135, %v1763, %v2391
  %v2648 = vsel %vm2136, %v1765, %v2392
  %v2649 = vsel %vm2137, %v1768, %v2393
  %v2650 = vsel %vm2138, %v1770, %v2394
  %v2651 = vsel %vm2139, %v1773, %v2395
  %v2652 = vsel %vm2140, %v1775, %v2396
  %v2653 = vsel %vm2141, %v1778, %v2397
  %v2654 = vsel %vm2142, %v1780, %v2398
  %v2655 = vsel %vm2143, %v1783, %v2399
  %v2656 = vsel %vm2144, %v1785, %v2400
  %v2657 = vsel %vm2145, %v1788, %v2401
  %v2658 = vsel %vm2146, %v1790, %v2402
  %v2659 = vsel %vm2147, %v1793, %v2403
  %v2660 = vsel %vm2148, %v1795, %v2404
  %v2661 = vsel %vm2149, %v1798, %v2405
  %v2662 = vsel %vm2150, %v1800, %v2406
  %v2663 = vsel %vm2151, %v1803, %v2407
  %v2664 = vsel %vm2152, %v1805, %v2408
  %v2665 = vsel %vm2153, %v1808, %v2409
  %v2666 = vsel %vm2154, %v1810, %v2410
  %v2667 = vsel %vm2155, %v1813, %v2411
  %v2668 = vsel %vm2156, %v1815, %v2412
  %v2669 = vsel %vm2157, %v1818, %v2413
  %v2670 = vsel %vm2158, %v1820, %v2414
  %v2671 = vsel %vm2159, %v1823, %v2415
  %v2672 = vsel %vm2160, %v1825, %v2416
  %v2673 = vsel %vm2161, %v1828, %v2417
  %v2674 = vsel %vm2162, %v1830, %v2418
  %v2675 = vsel %vm2163, %v1833, %v2419
  %v2676 = vsel %vm2164, %v1835, %v2420
  %v2677 = vsel %vm2165, %v1838, %v2421
  %v2678 = vsel %vm2166, %v1840, %v2422
  %v2679 = vsel %vm2167, %v1843, %v2423
  %v2680 = vsel %vm2168, %v1845, %v2424
  %v2681 = vsel %vm2169, %v1848, %v2425
  %v2682 = vsel %vm2170, %v1850, %v2426
  %v2683 = vsel %vm2171, %v1853, %v2427
  %v2684 = vsel %vm2172, %v1855, %v2428
  %v2685 = vsel %vm2173, %v1858, %v2429
  %v2686 = vsel %vm2174, %v1860, %v2430
  %v2687 = vsel %vm2175, %v1863, %v2431
  %v2688 = vsel %vm2176, %v1865, %v2432
  %v2689 = vsel %vm2177, %v1868, %v2433
  %v2690 = vsel %vm2178, %v1870, %v2434
  %v2691 = vsel %vm2179, %v1873, %v2435
  %v2692 = vsel %vm2180, %v1875, %v2436
  %v2693 = vsel %vm2181, %v1878, %v2437
  %v2694 = vsel %vm2182, %v1880, %v2438
  %v2695 = vsel %vm2183, %v1883, %v2439
  %v2696 = vsel %vm2184, %v1885, %v2440
  %v2697 = vsel %vm2185, %v1888, %v2441
  %v2698 = vsel %vm2186, %v1890, %v2442
  %v2699 = vsel %vm2187, %v1893, %v2443
  %v2700 = vsel %vm2188, %v1895, %v2444
  %v2701 = vsel %vm2189, %v1898, %v2445
  %v2702 = vsel %vm2190, %v1900, %v2446
  %v2703 = vsel %vm2191, %v1903, %v2447
  %v2704 = vsel %vm2192, %v1905, %v2448
  %v2705 = vsel %vm2193, %v1908, %v2449
  %v2706 = vsel %vm2194, %v1910, %v2450
  %v2707 = vsel %vm2195, %v1913, %v2451
  %v2708 = vsel %vm2196, %v1915, %v2452
  %v2709 = vsel %vm2197, %v1918, %v2453
  %v2710 = vsel %vm2198, %v1920, %v2454
  %v2711 = vsel %vm2199, %v1923, %v2455
  %v2712 = vsel %vm2200, %v1925, %v2456
  %v2713 = vsel %vm2201, %v1928, %v2457
  %v2714 = vsel %vm2202, %v1930, %v2458
  %v2715 = vsel %vm2203, %v1933, %v2459
  %v2716 = vsel %vm2204, %v1935, %v2460
  %v2717 = vsel %vm2205, %v1938, %v2461
  %v2718 = vsel %vm2206, %v1940, %v2462
  %v2719 = vsel %vm2207, %v1943, %v2463
  %v2720 = vsel %vm2208, %v1945, %v2464
  %v2721 = vsel %vm2209, %v1948, %v2465
  %v2722 = vsel %vm2210, %v1950, %v2466
  %v2723 = vsel %vm2211, %v1953, %v2467
  %v2724 = vsel %vm2212, %v1955, %v2468
  %v2725 = vpack.c.bf16 %v2469, %v2469
  %v2726 = vpack.c.bf16 %v2470, %v2470
  %v2727 = vpack.c.bf16 %v2471, %v2471
  %v2728 = vpack.c.bf16 %v2472, %v2472
  %v2729 = vpack.c.bf16 %v2473, %v2473
  %v2730 = vpack.c.bf16 %v2474, %v2474
  %v2731 = vpack.c.bf16 %v2475, %v2475
  %v2732 = vpack.c.bf16 %v2476, %v2476
  %v2733 = vpack.c.bf16 %v2477, %v2477
  %v2734 = vpack.c.bf16 %v2478, %v2478
  %v2735 = vpack.c.bf16 %v2479, %v2479
  %v2736 = vpack.c.bf16 %v2480, %v2480
  %v2737 = vpack.c.bf16 %v2481, %v2481
  %v2738 = vpack.c.bf16 %v2482, %v2482
  %v2739 = vpack.c.bf16 %v2483, %v2483
  %v2740 = vpack.c.bf16 %v2484, %v2484
  %v2741 = vpack.c.bf16 %v2485, %v2485
  %v2742 = vpack.c.bf16 %v2486, %v2486
  %v2743 = vpack.c.bf16 %v2487, %v2487
  %v2744 = vpack.c.bf16 %v2488, %v2488
  %v2745 = vpack.c.bf16 %v2489, %v2489
  %v2746 = vpack.c.bf16 %v2490, %v2490
  %v2747 = vpack.c.bf16 %v2491, %v2491
  %v2748 = vpack.c.bf16 %v2492, %v2492
  %v2749 = vpack.c.bf16 %v2493, %v2493
  %v2750 = vpack.c.bf16 %v2494, %v2494
  %v2751 = vpack.c.bf16 %v2495, %v2495
  %v2752 = vpack.c.bf16 %v2496, %v2496
  %v2753 = vpack.c.bf16 %v2497, %v2497
  %v2754 = vpack.c.bf16 %v2498, %v2498
  %v2755 = vpack.c.bf16 %v2499, %v2499
  %v2756 = vpack.c.bf16 %v2500, %v2500
  %v2757 = vpack.c.bf16 %v2501, %v2501
  %v2758 = vpack.c.bf16 %v2502, %v2502
  %v2759 = vpack.c.bf16 %v2503, %v2503
  %v2760 = vpack.c.bf16 %v2504, %v2504
  %v2761 = vpack.c.bf16 %v2505, %v2505
  %v2762 = vpack.c.bf16 %v2506, %v2506
  %v2763 = vpack.c.bf16 %v2507, %v2507
  %v2764 = vpack.c.bf16 %v2508, %v2508
  %v2765 = vpack.c.bf16 %v2509, %v2509
  %v2766 = vpack.c.bf16 %v2510, %v2510
  %v2767 = vpack.c.bf16 %v2511, %v2511
  %v2768 = vpack.c.bf16 %v2512, %v2512
  %v2769 = vpack.c.bf16 %v2513, %v2513
  %v2770 = vpack.c.bf16 %v2514, %v2514
  %v2771 = vpack.c.bf16 %v2515, %v2515
  %v2772 = vpack.c.bf16 %v2516, %v2516
  %v2773 = vpack.c.bf16 %v2517, %v2517
  %v2774 = vpack.c.bf16 %v2518, %v2518
  %v2775 = vpack.c.bf16 %v2519, %v2519
  %v2776 = vpack.c.bf16 %v2520, %v2520
  %v2777 = vpack.c.bf16 %v2521, %v2521
  %v2778 = vpack.c.bf16 %v2522, %v2522
  %v2779 = vpack.c.bf16 %v2523, %v2523
  %v2780 = vpack.c.bf16 %v2524, %v2524
  %v2781 = vpack.c.bf16 %v2525, %v2525
  %v2782 = vpack.c.bf16 %v2526, %v2526
  %v2783 = vpack.c.bf16 %v2527, %v2527
  %v2784 = vpack.c.bf16 %v2528, %v2528
  %v2785 = vpack.c.bf16 %v2529, %v2529
  %v2786 = vpack.c.bf16 %v2530, %v2530
  %v2787 = vpack.c.bf16 %v2531, %v2531
  %v2788 = vpack.c.bf16 %v2532, %v2532
  %v2789 = vpack.c.bf16 %v2533, %v2533
  %v2790 = vpack.c.bf16 %v2534, %v2534
  %v2791 = vpack.c.bf16 %v2535, %v2535
  %v2792 = vpack.c.bf16 %v2536, %v2536
  %v2793 = vpack.c.bf16 %v2537, %v2537
  %v2794 = vpack.c.bf16 %v2538, %v2538
  %v2795 = vpack.c.bf16 %v2539, %v2539
  %v2796 = vpack.c.bf16 %v2540, %v2540
  %v2797 = vpack.c.bf16 %v2541, %v2541
  %v2798 = vpack.c.bf16 %v2542, %v2542
  %v2799 = vpack.c.bf16 %v2543, %v2543
  %v2800 = vpack.c.bf16 %v2544, %v2544
  %v2801 = vpack.c.bf16 %v2545, %v2545
  %v2802 = vpack.c.bf16 %v2546, %v2546
  %v2803 = vpack.c.bf16 %v2547, %v2547
  %v2804 = vpack.c.bf16 %v2548, %v2548
  %v2805 = vpack.c.bf16 %v2549, %v2549
  %v2806 = vpack.c.bf16 %v2550, %v2550
  %v2807 = vpack.c.bf16 %v2551, %v2551
  %v2808 = vpack.c.bf16 %v2552, %v2552
  %v2809 = vpack.c.bf16 %v2553, %v2553
  %v2810 = vpack.c.bf16 %v2554, %v2554
  %v2811 = vpack.c.bf16 %v2555, %v2555
  %v2812 = vpack.c.bf16 %v2556, %v2556
  %v2813 = vpack.c.bf16 %v2557, %v2557
  %v2814 = vpack.c.bf16 %v2558, %v2558
  %v2815 = vpack.c.bf16 %v2559, %v2559
  %v2816 = vpack.c.bf16 %v2560, %v2560
  %v2817 = vpack.c.bf16 %v2561, %v2561
  %v2818 = vpack.c.bf16 %v2562, %v2562
  %v2819 = vpack.c.bf16 %v2563, %v2563
  %v2820 = vpack.c.bf16 %v2564, %v2564
  %v2821 = vpack.c.bf16 %v2565, %v2565
  %v2822 = vpack.c.bf16 %v2566, %v2566
  %v2823 = vpack.c.bf16 %v2567, %v2567
  %v2824 = vpack.c.bf16 %v2568, %v2568
  %v2825 = vpack.c.bf16 %v2569, %v2569
  %v2826 = vpack.c.bf16 %v2570, %v2570
  %v2827 = vpack.c.bf16 %v2571, %v2571
  %v2828 = vpack.c.bf16 %v2572, %v2572
  %v2829 = vpack.c.bf16 %v2573, %v2573
  %v2830 = vpack.c.bf16 %v2574, %v2574
  %v2831 = vpack.c.bf16 %v2575, %v2575
  %v2832 = vpack.c.bf16 %v2576, %v2576
  %v2833 = vpack.c.bf16 %v2577, %v2577
  %v2834 = vpack.c.bf16 %v2578, %v2578
  %v2835 = vpack.c.bf16 %v2579, %v2579
  %v2836 = vpack.c.bf16 %v2580, %v2580
  %v2837 = vpack.c.bf16 %v2581, %v2581
  %v2838 = vpack.c.bf16 %v2582, %v2582
  %v2839 = vpack.c.bf16 %v2583, %v2583
  %v2840 = vpack.c.bf16 %v2584, %v2584
  %v2841 = vpack.c.bf16 %v2585, %v2585
  %v2842 = vpack.c.bf16 %v2586, %v2586
  %v2843 = vpack.c.bf16 %v2587, %v2587
  %v2844 = vpack.c.bf16 %v2588, %v2588
  %v2845 = vpack.c.bf16 %v2589, %v2589
  %v2846 = vpack.c.bf16 %v2590, %v2590
  %v2847 = vpack.c.bf16 %v2591, %v2591
  %v2848 = vpack.c.bf16 %v2592, %v2592
  %v2849 = vpack.c.bf16 %v2593, %v2593
  %v2850 = vpack.c.bf16 %v2594, %v2594
  %v2851 = vpack.c.bf16 %v2595, %v2595
  %v2852 = vpack.c.bf16 %v2596, %v2596
  %v2853 = vpack.c.bf16 %v2597, %v2597
  %v2854 = vpack.c.bf16 %v2598, %v2598
  %v2855 = vpack.c.bf16 %v2599, %v2599
  %v2856 = vpack.c.bf16 %v2600, %v2600
  %v2857 = vpack.c.bf16 %v2601, %v2601
  %v2858 = vpack.c.bf16 %v2602, %v2602
  %v2859 = vpack.c.bf16 %v2603, %v2603
  %v2860 = vpack.c.bf16 %v2604, %v2604
  %v2861 = vpack.c.bf16 %v2605, %v2605
  %v2862 = vpack.c.bf16 %v2606, %v2606
  %v2863 = vpack.c.bf16 %v2607, %v2607
  %v2864 = vpack.c.bf16 %v2608, %v2608
  %v2865 = vpack.c.bf16 %v2609, %v2609
  %v2866 = vpack.c.bf16 %v2610, %v2610
  %v2867 = vpack.c.bf16 %v2611, %v2611
  %v2868 = vpack.c.bf16 %v2612, %v2612
  %v2869 = vpack.c.bf16 %v2613, %v2613
  %v2870 = vpack.c.bf16 %v2614, %v2614
  %v2871 = vpack.c.bf16 %v2615, %v2615
  %v2872 = vpack.c.bf16 %v2616, %v2616
  %v2873 = vpack.c.bf16 %v2617, %v2617
  %v2874 = vpack.c.bf16 %v2618, %v2618
  %v2875 = vpack.c.bf16 %v2619, %v2619
  %v2876 = vpack.c.bf16 %v2620, %v2620
  %v2877 = vpack.c.bf16 %v2621, %v2621
  %v2878 = vpack.c.bf16 %v2622, %v2622
  %v2879 = vpack.c.bf16 %v2623, %v2623
  %v2880 = vpack.c.bf16 %v2624, %v2624
  %v2881 = vpack.c.bf16 %v2625, %v2625
  %v2882 = vpack.c.bf16 %v2626, %v2626
  %v2883 = vpack.c.bf16 %v2627, %v2627
  %v2884 = vpack.c.bf16 %v2628, %v2628
  %v2885 = vpack.c.bf16 %v2629, %v2629
  %v2886 = vpack.c.bf16 %v2630, %v2630
  %v2887 = vpack.c.bf16 %v2631, %v2631
  %v2888 = vpack.c.bf16 %v2632, %v2632
  %v2889 = vpack.c.bf16 %v2633, %v2633
  %v2890 = vpack.c.bf16 %v2634, %v2634
  %v2891 = vpack.c.bf16 %v2635, %v2635
  %v2892 = vpack.c.bf16 %v2636, %v2636
  %v2893 = vpack.c.bf16 %v2637, %v2637
  %v2894 = vpack.c.bf16 %v2638, %v2638
  %v2895 = vpack.c.bf16 %v2639, %v2639
  %v2896 = vpack.c.bf16 %v2640, %v2640
  %v2897 = vpack.c.bf16 %v2641, %v2641
  %v2898 = vpack.c.bf16 %v2642, %v2642
  %v2899 = vpack.c.bf16 %v2643, %v2643
  %v2900 = vpack.c.bf16 %v2644, %v2644
  %v2901 = vpack.c.bf16 %v2645, %v2645
  %v2902 = vpack.c.bf16 %v2646, %v2646
  %v2903 = vpack.c.bf16 %v2647, %v2647
  %v2904 = vpack.c.bf16 %v2648, %v2648
  %v2905 = vpack.c.bf16 %v2649, %v2649
  %v2906 = vpack.c.bf16 %v2650, %v2650
  %v2907 = vpack.c.bf16 %v2651, %v2651
  %v2908 = vpack.c.bf16 %v2652, %v2652
  %v2909 = vpack.c.bf16 %v2653, %v2653
  %v2910 = vpack.c.bf16 %v2654, %v2654
  %v2911 = vpack.c.bf16 %v2655, %v2655
  %v2912 = vpack.c.bf16 %v2656, %v2656
  %v2913 = vpack.c.bf16 %v2657, %v2657
  %v2914 = vpack.c.bf16 %v2658, %v2658
  %v2915 = vpack.c.bf16 %v2659, %v2659
  %v2916 = vpack.c.bf16 %v2660, %v2660
  %v2917 = vpack.c.bf16 %v2661, %v2661
  %v2918 = vpack.c.bf16 %v2662, %v2662
  %v2919 = vpack.c.bf16 %v2663, %v2663
  %v2920 = vpack.c.bf16 %v2664, %v2664
  %v2921 = vpack.c.bf16 %v2665, %v2665
  %v2922 = vpack.c.bf16 %v2666, %v2666
  %v2923 = vpack.c.bf16 %v2667, %v2667
  %v2924 = vpack.c.bf16 %v2668, %v2668
  %v2925 = vpack.c.bf16 %v2669, %v2669
  %v2926 = vpack.c.bf16 %v2670, %v2670
  %v2927 = vpack.c.bf16 %v2671, %v2671
  %v2928 = vpack.c.bf16 %v2672, %v2672
  %v2929 = vpack.c.bf16 %v2673, %v2673
  %v2930 = vpack.c.bf16 %v2674, %v2674
  %v2931 = vpack.c.bf16 %v2675, %v2675
  %v2932 = vpack.c.bf16 %v2676, %v2676
  %v2933 = vpack.c.bf16 %v2677, %v2677
  %v2934 = vpack.c.bf16 %v2678, %v2678
  %v2935 = vpack.c.bf16 %v2679, %v2679
  %v2936 = vpack.c.bf16 %v2680, %v2680
  %v2937 = vpack.c.bf16 %v2681, %v2681
  %v2938 = vpack.c.bf16 %v2682, %v2682
  %v2939 = vpack.c.bf16 %v2683, %v2683
  %v2940 = vpack.c.bf16 %v2684, %v2684
  %v2941 = vpack.c.bf16 %v2685, %v2685
  %v2942 = vpack.c.bf16 %v2686, %v2686
  %v2943 = vpack.c.bf16 %v2687, %v2687
  %v2944 = vpack.c.bf16 %v2688, %v2688
  %v2945 = vpack.c.bf16 %v2689, %v2689
  %v2946 = vpack.c.bf16 %v2690, %v2690
  %v2947 = vpack.c.bf16 %v2691, %v2691
  %v2948 = vpack.c.bf16 %v2692, %v2692
  %v2949 = vpack.c.bf16 %v2693, %v2693
  %v2950 = vpack.c.bf16 %v2694, %v2694
  %v2951 = vpack.c.bf16 %v2695, %v2695
  %v2952 = vpack.c.bf16 %v2696, %v2696
  %v2953 = vpack.c.bf16 %v2697, %v2697
  %v2954 = vpack.c.bf16 %v2698, %v2698
  %v2955 = vpack.c.bf16 %v2699, %v2699
  %v2956 = vpack.c.bf16 %v2700, %v2700
  %v2957 = vpack.c.bf16 %v2701, %v2701
  %v2958 = vpack.c.bf16 %v2702, %v2702
  %v2959 = vpack.c.bf16 %v2703, %v2703
  %v2960 = vpack.c.bf16 %v2704, %v2704
  %v2961 = vpack.c.bf16 %v2705, %v2705
  %v2962 = vpack.c.bf16 %v2706, %v2706
  %v2963 = vpack.c.bf16 %v2707, %v2707
  %v2964 = vpack.c.bf16 %v2708, %v2708
  %v2965 = vpack.c.bf16 %v2709, %v2709
  %v2966 = vpack.c.bf16 %v2710, %v2710
  %v2967 = vpack.c.bf16 %v2711, %v2711
  %v2968 = vpack.c.bf16 %v2712, %v2712
  %v2969 = vpack.c.bf16 %v2713, %v2713
  %v2970 = vpack.c.bf16 %v2714, %v2714
  %v2971 = vpack.c.bf16 %v2715, %v2715
  %v2972 = vpack.c.bf16 %v2716, %v2716
  %v2973 = vpack.c.bf16 %v2717, %v2717
  %v2974 = vpack.c.bf16 %v2718, %v2718
  %v2975 = vpack.c.bf16 %v2719, %v2719
  %v2976 = vpack.c.bf16 %v2720, %v2720
  %v2977 = vpack.c.bf16 %v2721, %v2721
  %v2978 = vpack.c.bf16 %v2722, %v2722
  %v2979 = vpack.c.bf16 %v2723, %v2723
  %v2980 = vpack.c.bf16 %v2724, %v2724
  %2981 = vst [vmem:[%s3] sm:$0xf] %v2725
  %2982 = vst [vmem:[%s3 + $0x4] sm:$0xf] %v2726
  %2983 = vst [vmem:[%s3 + $0x8] sm:$0xf] %v2727
  %2984 = vst [vmem:[%s3 + $0xc] sm:$0xf] %v2728
  %2985 = vst [vmem:[%s3 + $0x10] sm:$0xf] %v2729
  %2986 = vst [vmem:[%s3 + $0x14] sm:$0xf] %v2730
  %2987 = vst [vmem:[%s3 + $0x18] sm:$0xf] %v2731
  %2988 = vst [vmem:[%s3 + $0x1c] sm:$0xf] %v2732
  %2989 = vst [vmem:[%s3 + $0x20] sm:$0xf] %v2733
  %2990 = vst [vmem:[%s3 + $0x24] sm:$0xf] %v2734
  %2991 = vst [vmem:[%s3 + $0x28] sm:$0xf] %v2735
  %2992 = vst [vmem:[%s3 + $0x2c] sm:$0xf] %v2736
  %2993 = vst [vmem:[%s3 + $0x30] sm:$0xf] %v2737
  %2994 = vst [vmem:[%s3 + $0x34] sm:$0xf] %v2738
  %2995 = vst [vmem:[%s3 + $0x38] sm:$0xf] %v2739
  %2996 = vst [vmem:[%s3 + $0x3c] sm:$0xf] %v2740
  %2997 = vst [vmem:[%s3 + $0x40] sm:$0xf] %v2741
  %2998 = vst [vmem:[%s3 + $0x44] sm:$0xf] %v2742
  %2999 = vst [vmem:[%s3 + $0x48] sm:$0xf] %v2743
  %3000 = vst [vmem:[%s3 + $0x4c] sm:$0xf] %v2744
  %3001 = vst [vmem:[%s3 + $0x50] sm:$0xf] %v2745
  %3002 = vst [vmem:[%s3 + $0x54] sm:$0xf] %v2746
  %3003 = vst [vmem:[%s3 + $0x58] sm:$0xf] %v2747
  %3004 = vst [vmem:[%s3 + $0x5c] sm:$0xf] %v2748
  %3005 = vst [vmem:[%s3 + $0x60] sm:$0xf] %v2749
  %3006 = vst [vmem:[%s3 + $0x64] sm:$0xf] %v2750
  %3007 = vst [vmem:[%s3 + $0x68] sm:$0xf] %v2751
  %3008 = vst [vmem:[%s3 + $0x6c] sm:$0xf] %v2752
  %3009 = vst [vmem:[%s3 + $0x70] sm:$0xf] %v2753
  %3010 = vst [vmem:[%s3 + $0x74] sm:$0xf] %v2754
  %3011 = vst [vmem:[%s3 + $0x78] sm:$0xf] %v2755
  %3012 = vst [vmem:[%s3 + $0x7c] sm:$0xf] %v2756
  %3013 = vst [vmem:[%s3 + $0x80] sm:$0xf] %v2757
  %3014 = vst [vmem:[%s3 + $0x84] sm:$0xf] %v2758
  %3015 = vst [vmem:[%s3 + $0x88] sm:$0xf] %v2759
  %3016 = vst [vmem:[%s3 + $0x8c] sm:$0xf] %v2760
  %3017 = vst [vmem:[%s3 + $0x90] sm:$0xf] %v2761
  %3018 = vst [vmem:[%s3 + $0x94] sm:$0xf] %v2762
  %3019 = vst [vmem:[%s3 + $0x98] sm:$0xf] %v2763
  %3020 = vst [vmem:[%s3 + $0x9c] sm:$0xf] %v2764
  %3021 = vst [vmem:[%s3 + $0xa0] sm:$0xf] %v2765
  %3022 = vst [vmem:[%s3 + $0xa4] sm:$0xf] %v2766
  %3023 = vst [vmem:[%s3 + $0xa8] sm:$0xf] %v2767
  %3024 = vst [vmem:[%s3 + $0xac] sm:$0xf] %v2768
  %3025 = vst [vmem:[%s3 + $0xb0] sm:$0xf] %v2769
  %3026 = vst [vmem:[%s3 + $0xb4] sm:$0xf] %v2770
  %3027 = vst [vmem:[%s3 + $0xb8] sm:$0xf] %v2771
  %3028 = vst [vmem:[%s3 + $0xbc] sm:$0xf] %v2772
  %3029 = vst [vmem:[%s3 + $0xc0] sm:$0xf] %v2773
  %3030 = vst [vmem:[%s3 + $0xc4] sm:$0xf] %v2774
  %3031 = vst [vmem:[%s3 + $0xc8] sm:$0xf] %v2775
  %3032 = vst [vmem:[%s3 + $0xcc] sm:$0xf] %v2776
  %3033 = vst [vmem:[%s3 + $0xd0] sm:$0xf] %v2777
  %3034 = vst [vmem:[%s3 + $0xd4] sm:$0xf] %v2778
  %3035 = vst [vmem:[%s3 + $0xd8] sm:$0xf] %v2779
  %3036 = vst [vmem:[%s3 + $0xdc] sm:$0xf] %v2780
  %3037 = vst [vmem:[%s3 + $0xe0] sm:$0xf] %v2781
  %3038 = vst [vmem:[%s3 + $0xe4] sm:$0xf] %v2782
  %3039 = vst [vmem:[%s3 + $0xe8] sm:$0xf] %v2783
  %3040 = vst [vmem:[%s3 + $0xec] sm:$0xf] %v2784
  %3041 = vst [vmem:[%s3 + $0xf0] sm:$0xf] %v2785
  %3042 = vst [vmem:[%s3 + $0xf4] sm:$0xf] %v2786
  %3043 = vst [vmem:[%s3 + $0xf8] sm:$0xf] %v2787
  %3044 = vst [vmem:[%s3 + $0xfc] sm:$0xf] %v2788
  %3045 = vst [vmem:[%s3 + $0x100] sm:$0xf] %v2789
  %3046 = vst [vmem:[%s3 + $0x104] sm:$0xf] %v2790
  %3047 = vst [vmem:[%s3 + $0x108] sm:$0xf] %v2791
  %3048 = vst [vmem:[%s3 + $0x10c] sm:$0xf] %v2792
  %3049 = vst [vmem:[%s3 + $0x110] sm:$0xf] %v2793
  %3050 = vst [vmem:[%s3 + $0x114] sm:$0xf] %v2794
  %3051 = vst [vmem:[%s3 + $0x118] sm:$0xf] %v2795
  %3052 = vst [vmem:[%s3 + $0x11c] sm:$0xf] %v2796
  %3053 = vst [vmem:[%s3 + $0x120] sm:$0xf] %v2797
  %3054 = vst [vmem:[%s3 + $0x124] sm:$0xf] %v2798
  %3055 = vst [vmem:[%s3 + $0x128] sm:$0xf] %v2799
  %3056 = vst [vmem:[%s3 + $0x12c] sm:$0xf] %v2800
  %3057 = vst [vmem:[%s3 + $0x130] sm:$0xf] %v2801
  %3058 = vst [vmem:[%s3 + $0x134] sm:$0xf] %v2802
  %3059 = vst [vmem:[%s3 + $0x138] sm:$0xf] %v2803
  %3060 = vst [vmem:[%s3 + $0x13c] sm:$0xf] %v2804
  %3061 = vst [vmem:[%s3 + $0x140] sm:$0xf] %v2805
  %3062 = vst [vmem:[%s3 + $0x144] sm:$0xf] %v2806
  %3063 = vst [vmem:[%s3 + $0x148] sm:$0xf] %v2807
  %3064 = vst [vmem:[%s3 + $0x14c] sm:$0xf] %v2808
  %3065 = vst [vmem:[%s3 + $0x150] sm:$0xf] %v2809
  %3066 = vst [vmem:[%s3 + $0x154] sm:$0xf] %v2810
  %3067 = vst [vmem:[%s3 + $0x158] sm:$0xf] %v2811
  %3068 = vst [vmem:[%s3 + $0x15c] sm:$0xf] %v2812
  %3069 = vst [vmem:[%s3 + $0x160] sm:$0xf] %v2813
  %3070 = vst [vmem:[%s3 + $0x164] sm:$0xf] %v2814
  %3071 = vst [vmem:[%s3 + $0x168] sm:$0xf] %v2815
  %3072 = vst [vmem:[%s3 + $0x16c] sm:$0xf] %v2816
  %3073 = vst [vmem:[%s3 + $0x170] sm:$0xf] %v2817
  %3074 = vst [vmem:[%s3 + $0x174] sm:$0xf] %v2818
  %3075 = vst [vmem:[%s3 + $0x178] sm:$0xf] %v2819
  %3076 = vst [vmem:[%s3 + $0x17c] sm:$0xf] %v2820
  %3077 = vst [vmem:[%s3 + $0x180] sm:$0xf] %v2821
  %3078 = vst [vmem:[%s3 + $0x184] sm:$0xf] %v2822
  %3079 = vst [vmem:[%s3 + $0x188] sm:$0xf] %v2823
  %3080 = vst [vmem:[%s3 + $0x18c] sm:$0xf] %v2824
  %3081 = vst [vmem:[%s3 + $0x190] sm:$0xf] %v2825
  %3082 = vst [vmem:[%s3 + $0x194] sm:$0xf] %v2826
  %3083 = vst [vmem:[%s3 + $0x198] sm:$0xf] %v2827
  %3084 = vst [vmem:[%s3 + $0x19c] sm:$0xf] %v2828
  %3085 = vst [vmem:[%s3 + $0x1a0] sm:$0xf] %v2829
  %3086 = vst [vmem:[%s3 + $0x1a4] sm:$0xf] %v2830
  %3087 = vst [vmem:[%s3 + $0x1a8] sm:$0xf] %v2831
  %3088 = vst [vmem:[%s3 + $0x1ac] sm:$0xf] %v2832
  %3089 = vst [vmem:[%s3 + $0x1b0] sm:$0xf] %v2833
  %3090 = vst [vmem:[%s3 + $0x1b4] sm:$0xf] %v2834
  %3091 = vst [vmem:[%s3 + $0x1b8] sm:$0xf] %v2835
  %3092 = vst [vmem:[%s3 + $0x1bc] sm:$0xf] %v2836
  %3093 = vst [vmem:[%s3 + $0x1c0] sm:$0xf] %v2837
  %3094 = vst [vmem:[%s3 + $0x1c4] sm:$0xf] %v2838
  %3095 = vst [vmem:[%s3 + $0x1c8] sm:$0xf] %v2839
  %3096 = vst [vmem:[%s3 + $0x1cc] sm:$0xf] %v2840
  %3097 = vst [vmem:[%s3 + $0x1d0] sm:$0xf] %v2841
  %3098 = vst [vmem:[%s3 + $0x1d4] sm:$0xf] %v2842
  %3099 = vst [vmem:[%s3 + $0x1d8] sm:$0xf] %v2843
  %3100 = vst [vmem:[%s3 + $0x1dc] sm:$0xf] %v2844
  %3101 = vst [vmem:[%s3 + $0x1e0] sm:$0xf] %v2845
  %3102 = vst [vmem:[%s3 + $0x1e4] sm:$0xf] %v2846
  %3103 = vst [vmem:[%s3 + $0x1e8] sm:$0xf] %v2847
  %3104 = vst [vmem:[%s3 + $0x1ec] sm:$0xf] %v2848
  %3105 = vst [vmem:[%s3 + $0x1f0] sm:$0xf] %v2849
  %3106 = vst [vmem:[%s3 + $0x1f4] sm:$0xf] %v2850
  %3107 = vst [vmem:[%s3 + $0x1f8] sm:$0xf] %v2851
  %3108 = vst [vmem:[%s3 + $0x1fc] sm:$0xf] %v2852
  %3109 = vst [vmem:[%s3 + $0x200] sm:$0xf] %v2853
  %3110 = vst [vmem:[%s3 + $0x204] sm:$0xf] %v2854
  %3111 = vst [vmem:[%s3 + $0x208] sm:$0xf] %v2855
  %3112 = vst [vmem:[%s3 + $0x20c] sm:$0xf] %v2856
  %3113 = vst [vmem:[%s3 + $0x210] sm:$0xf] %v2857
  %3114 = vst [vmem:[%s3 + $0x214] sm:$0xf] %v2858
  %3115 = vst [vmem:[%s3 + $0x218] sm:$0xf] %v2859
  %3116 = vst [vmem:[%s3 + $0x21c] sm:$0xf] %v2860
  %3117 = vst [vmem:[%s3 + $0x220] sm:$0xf] %v2861
  %3118 = vst [vmem:[%s3 + $0x224] sm:$0xf] %v2862
  %3119 = vst [vmem:[%s3 + $0x228] sm:$0xf] %v2863
  %3120 = vst [vmem:[%s3 + $0x22c] sm:$0xf] %v2864
  %3121 = vst [vmem:[%s3 + $0x230] sm:$0xf] %v2865
  %3122 = vst [vmem:[%s3 + $0x234] sm:$0xf] %v2866
  %3123 = vst [vmem:[%s3 + $0x238] sm:$0xf] %v2867
  %3124 = vst [vmem:[%s3 + $0x23c] sm:$0xf] %v2868
  %3125 = vst [vmem:[%s3 + $0x240] sm:$0xf] %v2869
  %3126 = vst [vmem:[%s3 + $0x244] sm:$0xf] %v2870
  %3127 = vst [vmem:[%s3 + $0x248] sm:$0xf] %v2871
  %3128 = vst [vmem:[%s3 + $0x24c] sm:$0xf] %v2872
  %3129 = vst [vmem:[%s3 + $0x250] sm:$0xf] %v2873
  %3130 = vst [vmem:[%s3 + $0x254] sm:$0xf] %v2874
  %3131 = vst [vmem:[%s3 + $0x258] sm:$0xf] %v2875
  %3132 = vst [vmem:[%s3 + $0x25c] sm:$0xf] %v2876
  %3133 = vst [vmem:[%s3 + $0x260] sm:$0xf] %v2877
  %3134 = vst [vmem:[%s3 + $0x264] sm:$0xf] %v2878
  %3135 = vst [vmem:[%s3 + $0x268] sm:$0xf] %v2879
  %3136 = vst [vmem:[%s3 + $0x26c] sm:$0xf] %v2880
  %3137 = vst [vmem:[%s3 + $0x270] sm:$0xf] %v2881
  %3138 = vst [vmem:[%s3 + $0x274] sm:$0xf] %v2882
  %3139 = vst [vmem:[%s3 + $0x278] sm:$0xf] %v2883
  %3140 = vst [vmem:[%s3 + $0x27c] sm:$0xf] %v2884
  %3141 = vst [vmem:[%s3 + $0x280] sm:$0xf] %v2885
  %3142 = vst [vmem:[%s3 + $0x284] sm:$0xf] %v2886
  %3143 = vst [vmem:[%s3 + $0x288] sm:$0xf] %v2887
  %3144 = vst [vmem:[%s3 + $0x28c] sm:$0xf] %v2888
  %3145 = vst [vmem:[%s3 + $0x290] sm:$0xf] %v2889
  %3146 = vst [vmem:[%s3 + $0x294] sm:$0xf] %v2890
  %3147 = vst [vmem:[%s3 + $0x298] sm:$0xf] %v2891
  %3148 = vst [vmem:[%s3 + $0x29c] sm:$0xf] %v2892
  %3149 = vst [vmem:[%s3 + $0x2a0] sm:$0xf] %v2893
  %3150 = vst [vmem:[%s3 + $0x2a4] sm:$0xf] %v2894
  %3151 = vst [vmem:[%s3 + $0x2a8] sm:$0xf] %v2895
  %3152 = vst [vmem:[%s3 + $0x2ac] sm:$0xf] %v2896
  %3153 = vst [vmem:[%s3 + $0x2b0] sm:$0xf] %v2897
  %3154 = vst [vmem:[%s3 + $0x2b4] sm:$0xf] %v2898
  %3155 = vst [vmem:[%s3 + $0x2b8] sm:$0xf] %v2899
  %3156 = vst [vmem:[%s3 + $0x2bc] sm:$0xf] %v2900
  %3157 = vst [vmem:[%s3 + $0x2c0] sm:$0xf] %v2901
  %3158 = vst [vmem:[%s3 + $0x2c4] sm:$0xf] %v2902
  %3159 = vst [vmem:[%s3 + $0x2c8] sm:$0xf] %v2903
  %3160 = vst [vmem:[%s3 + $0x2cc] sm:$0xf] %v2904
  %3161 = vst [vmem:[%s3 + $0x2d0] sm:$0xf] %v2905
  %3162 = vst [vmem:[%s3 + $0x2d4] sm:$0xf] %v2906
  %3163 = vst [vmem:[%s3 + $0x2d8] sm:$0xf] %v2907
  %3164 = vst [vmem:[%s3 + $0x2dc] sm:$0xf] %v2908
  %3165 = vst [vmem:[%s3 + $0x2e0] sm:$0xf] %v2909
  %3166 = vst [vmem:[%s3 + $0x2e4] sm:$0xf] %v2910
  %3167 = vst [vmem:[%s3 + $0x2e8] sm:$0xf] %v2911
  %3168 = vst [vmem:[%s3 + $0x2ec] sm:$0xf] %v2912
  %3169 = vst [vmem:[%s3 + $0x2f0] sm:$0xf] %v2913
  %3170 = vst [vmem:[%s3 + $0x2f4] sm:$0xf] %v2914
  %3171 = vst [vmem:[%s3 + $0x2f8] sm:$0xf] %v2915
  %3172 = vst [vmem:[%s3 + $0x2fc] sm:$0xf] %v2916
  %3173 = vst [vmem:[%s3 + $0x300] sm:$0xf] %v2917
  %3174 = vst [vmem:[%s3 + $0x304] sm:$0xf] %v2918
  %3175 = vst [vmem:[%s3 + $0x308] sm:$0xf] %v2919
  %3176 = vst [vmem:[%s3 + $0x30c] sm:$0xf] %v2920
  %3177 = vst [vmem:[%s3 + $0x310] sm:$0xf] %v2921
  %3178 = vst [vmem:[%s3 + $0x314] sm:$0xf] %v2922
  %3179 = vst [vmem:[%s3 + $0x318] sm:$0xf] %v2923
  %3180 = vst [vmem:[%s3 + $0x31c] sm:$0xf] %v2924
  %3181 = vst [vmem:[%s3 + $0x320] sm:$0xf] %v2925
  %3182 = vst [vmem:[%s3 + $0x324] sm:$0xf] %v2926
  %3183 = vst [vmem:[%s3 + $0x328] sm:$0xf] %v2927
  %3184 = vst [vmem:[%s3 + $0x32c] sm:$0xf] %v2928
  %3185 = vst [vmem:[%s3 + $0x330] sm:$0xf] %v2929
  %3186 = vst [vmem:[%s3 + $0x334] sm:$0xf] %v2930
  %3187 = vst [vmem:[%s3 + $0x338] sm:$0xf] %v2931
  %3188 = vst [vmem:[%s3 + $0x33c] sm:$0xf] %v2932
  %3189 = vst [vmem:[%s3 + $0x340] sm:$0xf] %v2933
  %3190 = vst [vmem:[%s3 + $0x344] sm:$0xf] %v2934
  %3191 = vst [vmem:[%s3 + $0x348] sm:$0xf] %v2935
  %3192 = vst [vmem:[%s3 + $0x34c] sm:$0xf] %v2936
  %3193 = vst [vmem:[%s3 + $0x350] sm:$0xf] %v2937
  %3194 = vst [vmem:[%s3 + $0x354] sm:$0xf] %v2938
  %3195 = vst [vmem:[%s3 + $0x358] sm:$0xf] %v2939
  %3196 = vst [vmem:[%s3 + $0x35c] sm:$0xf] %v2940
  %3197 = vst [vmem:[%s3 + $0x360] sm:$0xf] %v2941
  %3198 = vst [vmem:[%s3 + $0x364] sm:$0xf] %v2942
  %3199 = vst [vmem:[%s3 + $0x368] sm:$0xf] %v2943
  %3200 = vst [vmem:[%s3 + $0x36c] sm:$0xf] %v2944
  %3201 = vst [vmem:[%s3 + $0x370] sm:$0xf] %v2945
  %3202 = vst [vmem:[%s3 + $0x374] sm:$0xf] %v2946
  %3203 = vst [vmem:[%s3 + $0x378] sm:$0xf] %v2947
  %3204 = vst [vmem:[%s3 + $0x37c] sm:$0xf] %v2948
  %3205 = vst [vmem:[%s3 + $0x380] sm:$0xf] %v2949
  %3206 = vst [vmem:[%s3 + $0x384] sm:$0xf] %v2950
  %3207 = vst [vmem:[%s3 + $0x388] sm:$0xf] %v2951
  %3208 = vst [vmem:[%s3 + $0x38c] sm:$0xf] %v2952
  %3209 = vst [vmem:[%s3 + $0x390] sm:$0xf] %v2953
  %3210 = vst [vmem:[%s3 + $0x394] sm:$0xf] %v2954
  %3211 = vst [vmem:[%s3 + $0x398] sm:$0xf] %v2955
  %3212 = vst [vmem:[%s3 + $0x39c] sm:$0xf] %v2956
  %3213 = vst [vmem:[%s3 + $0x3a0] sm:$0xf] %v2957
  %3214 = vst [vmem:[%s3 + $0x3a4] sm:$0xf] %v2958
  %3215 = vst [vmem:[%s3 + $0x3a8] sm:$0xf] %v2959
  %3216 = vst [vmem:[%s3 + $0x3ac] sm:$0xf] %v2960
  %3217 = vst [vmem:[%s3 + $0x3b0] sm:$0xf] %v2961
  %3218 = vst [vmem:[%s3 + $0x3b4] sm:$0xf] %v2962
  %3219 = vst [vmem:[%s3 + $0x3b8] sm:$0xf] %v2963
  %3220 = vst [vmem:[%s3 + $0x3bc] sm:$0xf] %v2964
  %3221 = vst [vmem:[%s3 + $0x3c0] sm:$0xf] %v2965
  %3222 = vst [vmem:[%s3 + $0x3c4] sm:$0xf] %v2966
  %3223 = vst [vmem:[%s3 + $0x3c8] sm:$0xf] %v2967
  %3224 = vst [vmem:[%s3 + $0x3cc] sm:$0xf] %v2968
  %3225 = vst [vmem:[%s3 + $0x3d0] sm:$0xf] %v2969
  %3226 = vst [vmem:[%s3 + $0x3d4] sm:$0xf] %v2970
  %3227 = vst [vmem:[%s3 + $0x3d8] sm:$0xf] %v2971
  %3228 = vst [vmem:[%s3 + $0x3dc] sm:$0xf] %v2972
  %3229 = vst [vmem:[%s3 + $0x3e0] sm:$0xf] %v2973
  %3230 = vst [vmem:[%s3 + $0x3e4] sm:$0xf] %v2974
  %3231 = vst [vmem:[%s3 + $0x3e8] sm:$0xf] %v2975
  %3232 = vst [vmem:[%s3 + $0x3ec] sm:$0xf] %v2976
  %3233 = vst [vmem:[%s3 + $0x3f0] sm:$0xf] %v2977
  %3234 = vst [vmem:[%s3 + $0x3f4] sm:$0xf] %v2978
  %3235 = vst [vmem:[%s3 + $0x3f8] sm:$0xf] %v2979
  %3236 = vst [vmem:[%s3 + $0x3fc] sm:$0xf] %v2980
  // Predicated region
  $region14: #{discriminator_forward.6} parent=0 // pred_check
    _
  $region15: #{discriminator_forward.6} parent=0 // pred_check_branch
    %3238 = sbr.rel (0) target = $region17
  $region16: #{discriminator_forward.6} parent=0 // pred_region
    _
  $region17: #{discriminator_forward.6} parent=0 // pred_fallthru
    _
  // Predicated region
  $region18: #{discriminator_forward.6} parent=0 // pred_check
    _
  $region19: #{discriminator_forward.6} parent=0 // pred_check_branch
    %3240 = sbr.rel (0) target = $region21
  $region20: #{discriminator_forward.6} parent=0 // pred_region
    _
  $region21: #{discriminator_forward.6} parent=0 // pred_fallthru
    _

// kernel: discriminator_forward.8
$region0: #{discriminator_forward.8}
  #allocation0 [shape = 'u32[]', space=smem, size = 0x4, offset = 0x4, fixed_abs, tag = 'smem constant byte address 0x4 - core index']
  #allocation1 [shape = 'u32[72,128]{1,0:T(1,128)}', space=vmem, size = 0x9000, scoped, tag = 'internal scratch']
  %s0 = inlined_call_operand.vmem [shape: bf16[128,256], index: 0, kind: input, shape index: {}]
  %s1 = inlined_call_operand.vmem [shape: bf16[256,128], index: 1, kind: input, shape index: {}]
  %s2 = inlined_call_operand.vmem [shape: f32[1,128], index: 2, kind: input, shape index: {}]
  %s3 = inlined_call_operand.vmem [shape: bf16[128,128], index: 3, kind: output, shape index: {}]
  %s4 = sld [smem:[#allocation0]]
  $region22: #{discriminator_forward.8} parent=0
    _
  %s6 = ssub.s32 1, %s4
  %s7 = scalar_select 0, %s6, %s4
  // Predicated region
  $region2: #{discriminator_forward.8} parent=0 // pred_check
    _
  $region3: #{discriminator_forward.8} parent=0 // pred_check_branch
    %9 = sbr.rel (0) target = $region5
  $region4: #{discriminator_forward.8} parent=0 // pred_region
    _
  $region5: #{discriminator_forward.8} parent=0 // pred_fallthru
    _
  // Predicated region
  $region6: #{discriminator_forward.8} parent=0 // pred_check
    _
  $region7: #{discriminator_forward.8} parent=0 // pred_check_branch
    %11 = sbr.rel (0) target = $region9
  $region8: #{discriminator_forward.8} parent=0 // pred_region
    _
  $region9: #{discriminator_forward.8} parent=0 // pred_fallthru
    _
  // Predicated region
  $region10: #{discriminator_forward.8} parent=0 // pred_check
    _
  $region11: #{discriminator_forward.8} parent=0 // pred_check_branch
    %13 = sbr.rel (0) target = $region13
  $region12: #{discriminator_forward.8} parent=0 // pred_region
    _
  $region13: #{discriminator_forward.8} parent=0 // pred_fallthru
    _
  %v14 = vld [vmem:[%s0] sm:$0xff]
  %v15 = vld [vmem:[%s0 + $0x8] sm:$0xff]
  %v16 = vld [vmem:[%s0 + $0x10] sm:$0xff]
  %v17 = vld [vmem:[%s0 + $0x18] sm:$0xff]
  %v18 = vld [vmem:[%s0 + $0x20] sm:$0xff]
  %v19 = vld [vmem:[%s0 + $0x28] sm:$0xff]
  %v20 = vld [vmem:[%s0 + $0x30] sm:$0xff]
  %v21 = vld [vmem:[%s0 + $0x38] sm:$0xff]
  %v22 = vld [vmem:[%s0 + $0x40] sm:$0xff]
  %v23 = vld [vmem:[%s0 + $0x48] sm:$0xff]
  %v24 = vld [vmem:[%s0 + $0x50] sm:$0xff]
  %v25 = vld [vmem:[%s0 + $0x58] sm:$0xff]
  %v26 = vld [vmem:[%s0 + $0x60] sm:$0xff]
  %v27 = vld [vmem:[%s0 + $0x68] sm:$0xff]
  %v28 = vld [vmem:[%s0 + $0x70] sm:$0xff]
  %v29 = vld [vmem:[%s0 + $0x78] sm:$0xff]
  %v30 = vld [vmem:[%s1] sm:$0xf]
  %v31 = vld [vmem:[%s1 + $0x4] sm:$0xf]
  %v32 = vld [vmem:[%s1 + $0x8] sm:$0xf]
  %v33 = vld [vmem:[%s1 + $0xc] sm:$0xf]
  %v34 = vld [vmem:[%s1 + $0x10] sm:$0xf]
  %v35 = vld [vmem:[%s1 + $0x14] sm:$0xf]
  %v36 = vld [vmem:[%s1 + $0x18] sm:$0xf]
  %v37 = vld [vmem:[%s1 + $0x1c] sm:$0xf]
  %v38 = vld [vmem:[%s1 + $0x20] sm:$0xf]
  %v39 = vld [vmem:[%s1 + $0x24] sm:$0xf]
  %v40 = vld [vmem:[%s1 + $0x28] sm:$0xf]
  %v41 = vld [vmem:[%s1 + $0x2c] sm:$0xf]
  %v42 = vld [vmem:[%s1 + $0x30] sm:$0xf]
  %v43 = vld [vmem:[%s1 + $0x34] sm:$0xf]
  %v44 = vld [vmem:[%s1 + $0x38] sm:$0xf]
  %v45 = vld [vmem:[%s1 + $0x3c] sm:$0xf]
  %v46 = vld [vmem:[%s1 + $0x40] sm:$0xf]
  %v47 = vld [vmem:[%s1 + $0x44] sm:$0xf]
  %v48 = vld [vmem:[%s1 + $0x48] sm:$0xf]
  %v49 = vld [vmem:[%s1 + $0x4c] sm:$0xf]
  %v50 = vld [vmem:[%s1 + $0x50] sm:$0xf]
  %v51 = vld [vmem:[%s1 + $0x54] sm:$0xf]
  %v52 = vld [vmem:[%s1 + $0x58] sm:$0xf]
  %v53 = vld [vmem:[%s1 + $0x5c] sm:$0xf]
  %v54 = vld [vmem:[%s1 + $0x60] sm:$0xf]
  %v55 = vld [vmem:[%s1 + $0x64] sm:$0xf]
  %v56 = vld [vmem:[%s1 + $0x68] sm:$0xf]
  %v57 = vld [vmem:[%s1 + $0x6c] sm:$0xf]
  %v58 = vld [vmem:[%s1 + $0x70] sm:$0xf]
  %v59 = vld [vmem:[%s1 + $0x74] sm:$0xf]
  %v60 = vld [vmem:[%s1 + $0x78] sm:$0xf]
  %v61 = vld [vmem:[%s1 + $0x7c] sm:$0xf]
  %v62 = vld [vmem:[%s2] sm:$0x1]
  %v64 = vperm.slane %v62, 0
  %v82 = vunpack.c.l.b16 %v14
  %v83 = vunpack.c.h.b16 %v14
  %v84 = vunpack.c.l.b16 %v15
  %v85 = vunpack.c.h.b16 %v15
  %v86 = vunpack.c.l.b16 %v16
  %v87 = vunpack.c.h.b16 %v16
  %v88 = vunpack.c.l.b16 %v17
  %v89 = vunpack.c.h.b16 %v17
  %v90 = vunpack.c.l.b16 %v18
  %v91 = vunpack.c.h.b16 %v18
  %v92 = vunpack.c.l.b16 %v19
  %v93 = vunpack.c.h.b16 %v19
  %v94 = vunpack.c.l.b16 %v20
  %v95 = vunpack.c.h.b16 %v20
  %v96 = vunpack.c.l.b16 %v21
  %v97 = vunpack.c.h.b16 %v21
  %v98 = vunpack.c.l.b16 %v22
  %v99 = vunpack.c.h.b16 %v22
  %v100 = vunpack.c.l.b16 %v23
  %v101 = vunpack.c.h.b16 %v23
  %v102 = vunpack.c.l.b16 %v24
  %v103 = vunpack.c.h.b16 %v24
  %v104 = vunpack.c.l.b16 %v25
  %v105 = vunpack.c.h.b16 %v25
  %v106 = vunpack.c.l.b16 %v26
  %v107 = vunpack.c.h.b16 %v26
  %v108 = vunpack.c.l.b16 %v27
  %v109 = vunpack.c.h.b16 %v27
  %v110 = vunpack.c.l.b16 %v28
  %v111 = vunpack.c.h.b16 %v28
  %v112 = vunpack.c.l.b16 %v29
  %v113 = vunpack.c.h.b16 %v29
  %v114 = vpack.c.b16 %v84, %v82
  %v115 = vpack.c.b16 %v85, %v83
  %v116 = vpack.c.b16 %v88, %v86
  %v117 = vpack.c.b16 %v89, %v87
  %v118 = vpack.c.b16 %v92, %v90
  %v119 = vpack.c.b16 %v93, %v91
  %v120 = vpack.c.b16 %v96, %v94
  %v121 = vpack.c.b16 %v97, %v95
  %v122 = vpack.c.b16 %v100, %v98
  %v123 = vpack.c.b16 %v101, %v99
  %v124 = vpack.c.b16 %v104, %v102
  %v125 = vpack.c.b16 %v105, %v103
  %v126 = vpack.c.b16 %v108, %v106
  %v127 = vpack.c.b16 %v109, %v107
  %v128 = vpack.c.b16 %v112, %v110
  %v129 = vpack.c.b16 %v113, %v111
  %v178 = vunpack.c.l.b16 %v30
  %v179 = vunpack.c.l.b16 %v31
  %v180 = vunpack.c.l.b16 %v32
  %v181 = vunpack.c.l.b16 %v33
  %v182 = vunpack.c.l.b16 %v34
  %v183 = vunpack.c.l.b16 %v35
  %v184 = vunpack.c.l.b16 %v36
  %v185 = vunpack.c.l.b16 %v37
  %v186 = vunpack.c.l.b16 %v38
  %v187 = vunpack.c.l.b16 %v39
  %v188 = vunpack.c.l.b16 %v40
  %v189 = vunpack.c.l.b16 %v41
  %v190 = vunpack.c.l.b16 %v42
  %v191 = vunpack.c.l.b16 %v43
  %v192 = vunpack.c.l.b16 %v44
  %v193 = vunpack.c.l.b16 %v45
  %v194 = vunpack.c.l.b16 %v46
  %v195 = vunpack.c.l.b16 %v47
  %v196 = vunpack.c.l.b16 %v48
  %v197 = vunpack.c.l.b16 %v49
  %v198 = vunpack.c.l.b16 %v50
  %v199 = vunpack.c.l.b16 %v51
  %v200 = vunpack.c.l.b16 %v52
  %v201 = vunpack.c.l.b16 %v53
  %v202 = vunpack.c.l.b16 %v54
  %v203 = vunpack.c.l.b16 %v55
  %v204 = vunpack.c.l.b16 %v56
  %v205 = vunpack.c.l.b16 %v57
  %v206 = vunpack.c.l.b16 %v58
  %v207 = vunpack.c.l.b16 %v59
  %v208 = vunpack.c.l.b16 %v60
  %v209 = vunpack.c.l.b16 %v61
  %v210 = vpack.c.b16 %v179, %v178
  %v211 = vpack.c.b16 %v181, %v180
  %v212 = vpack.c.b16 %v183, %v182
  %v213 = vpack.c.b16 %v185, %v184
  %v214 = vpack.c.b16 %v187, %v186
  %v215 = vpack.c.b16 %v189, %v188
  %v216 = vpack.c.b16 %v191, %v190
  %v217 = vpack.c.b16 %v193, %v192
  %v218 = vpack.c.b16 %v195, %v194
  %v219 = vpack.c.b16 %v197, %v196
  %v220 = vpack.c.b16 %v199, %v198
  %v221 = vpack.c.b16 %v201, %v200
  %v222 = vpack.c.b16 %v203, %v202
  %v223 = vpack.c.b16 %v205, %v204
  %v224 = vpack.c.b16 %v207, %v206
  %v225 = vpack.c.b16 %v209, %v208
  %242 = vmatpush.bf16.msra.mxu0 %v217
  %243 = vmatpush.bf16.msra.mxu0 %v216
  %244 = vmatpush.bf16.msra.mxu0 %v215
  %245 = vmatpush.bf16.msra.mxu0 %v214
  %246 = vmatpush.bf16.msra.mxu0 %v213
  %247 = vmatpush.bf16.msra.mxu0 %v212
  %248 = vmatpush.bf16.msra.mxu0 %v211
  %249 = vmatpush.bf16.msra.mxu0 %v210
  %250 = vmatmul.bf16.gmra.mxu0 %v114
  %v251 = vpop.f32.mrf.mxu0
  %v252 = vadd.f32 %v64, %v251
  %v253 = vpop.f32.mrf.mxu0
  %v254 = vadd.f32 %v64, %v253
  %255 = vmatmul.bf16.gmra.mxu0 %v116
  %v256 = vpop.f32.mrf.mxu0
  %v257 = vadd.f32 %v64, %v256
  %v258 = vpop.f32.mrf.mxu0
  %v259 = vadd.f32 %v64, %v258
  %260 = vmatmul.bf16.gmra.mxu0 %v118
  %v261 = vpop.f32.mrf.mxu0
  %v262 = vadd.f32 %v64, %v261
  %v263 = vpop.f32.mrf.mxu0
  %v264 = vadd.f32 %v64, %v263
  %265 = vmatmul.bf16.gmra.mxu0 %v120
  %v266 = vpop.f32.mrf.mxu0
  %v267 = vadd.f32 %v64, %v266
  %v268 = vpop.f32.mrf.mxu0
  %v269 = vadd.f32 %v64, %v268
  %270 = vmatmul.bf16.gmra.mxu0 %v122
  %v271 = vpop.f32.mrf.mxu0
  %v272 = vadd.f32 %v64, %v271
  %v273 = vpop.f32.mrf.mxu0
  %v274 = vadd.f32 %v64, %v273
  %275 = vmatmul.bf16.gmra.mxu0 %v124
  %v276 = vpop.f32.mrf.mxu0
  %v277 = vadd.f32 %v64, %v276
  %v278 = vpop.f32.mrf.mxu0
  %v279 = vadd.f32 %v64, %v278
  %280 = vmatmul.bf16.gmra.mxu0 %v126
  %v281 = vpop.f32.mrf.mxu0
  %v282 = vadd.f32 %v64, %v281
  %v283 = vpop.f32.mrf.mxu0
  %v284 = vadd.f32 %v64, %v283
  %285 = vmatmul.bf16.gmra.mxu0 %v128
  %v286 = vpop.f32.mrf.mxu0
  %v287 = vadd.f32 %v64, %v286
  %v288 = vpop.f32.mrf.mxu0
  %v289 = vadd.f32 %v64, %v288
  %290 = vdwg.mxu0
  %291 = vmatpush.bf16.msra.mxu0 %v225
  %292 = vmatpush.bf16.msra.mxu0 %v224
  %293 = vmatpush.bf16.msra.mxu0 %v223
  %294 = vmatpush.bf16.msra.mxu0 %v222
  %295 = vmatpush.bf16.msra.mxu0 %v221
  %296 = vmatpush.bf16.msra.mxu0 %v220
  %297 = vmatpush.bf16.msra.mxu0 %v219
  %298 = vmatpush.bf16.msra.mxu0 %v218
  %299 = vmatmul.bf16.gmra.mxu0 %v115
  %v300 = vpop.f32.mrf.mxu0
  %v301 = vadd.f32 %v252, %v300
  %v302 = vpop.f32.mrf.mxu0
  %v303 = vadd.f32 %v254, %v302
  %304 = vmatmul.bf16.gmra.mxu0 %v117
  %v305 = vpop.f32.mrf.mxu0
  %v306 = vadd.f32 %v257, %v305
  %v307 = vpop.f32.mrf.mxu0
  %v308 = vadd.f32 %v259, %v307
  %309 = vmatmul.bf16.gmra.mxu0 %v119
  %v310 = vpop.f32.mrf.mxu0
  %v311 = vadd.f32 %v262, %v310
  %v312 = vpop.f32.mrf.mxu0
  %v313 = vadd.f32 %v264, %v312
  %314 = vmatmul.bf16.gmra.mxu0 %v121
  %v315 = vpop.f32.mrf.mxu0
  %v316 = vadd.f32 %v267, %v315
  %v317 = vpop.f32.mrf.mxu0
  %v318 = vadd.f32 %v269, %v317
  %319 = vmatmul.bf16.gmra.mxu0 %v123
  %v320 = vpop.f32.mrf.mxu0
  %v321 = vadd.f32 %v272, %v320
  %v322 = vpop.f32.mrf.mxu0
  %v323 = vadd.f32 %v274, %v322
  %324 = vmatmul.bf16.gmra.mxu0 %v125
  %v325 = vpop.f32.mrf.mxu0
  %v326 = vadd.f32 %v277, %v325
  %v327 = vpop.f32.mrf.mxu0
  %v328 = vadd.f32 %v279, %v327
  %329 = vmatmul.bf16.gmra.mxu0 %v127
  %v330 = vpop.f32.mrf.mxu0
  %v331 = vadd.f32 %v282, %v330
  %v332 = vpop.f32.mrf.mxu0
  %v333 = vadd.f32 %v284, %v332
  %334 = vmatmul.bf16.gmra.mxu0 %v129
  %v335 = vpop.f32.mrf.mxu0
  %v336 = vadd.f32 %v287, %v335
  %v337 = vpop.f32.mrf.mxu0
  %v338 = vadd.f32 %v289, %v337
  %339 = vdwg.mxu0
  %vm340 = vcmp.ge.f32.partialorder %v301, 0.0
  %vm341 = vcmp.ge.f32.partialorder %v303, 0.0
  %vm342 = vcmp.ge.f32.partialorder %v306, 0.0
  %vm343 = vcmp.ge.f32.partialorder %v308, 0.0
  %vm344 = vcmp.ge.f32.partialorder %v311, 0.0
  %vm345 = vcmp.ge.f32.partialorder %v313, 0.0
  %vm346 = vcmp.ge.f32.partialorder %v316, 0.0
  %vm347 = vcmp.ge.f32.partialorder %v318, 0.0
  %vm348 = vcmp.ge.f32.partialorder %v321, 0.0
  %vm349 = vcmp.ge.f32.partialorder %v323, 0.0
  %vm350 = vcmp.ge.f32.partialorder %v326, 0.0
  %vm351 = vcmp.ge.f32.partialorder %v328, 0.0
  %vm352 = vcmp.ge.f32.partialorder %v331, 0.0
  %vm353 = vcmp.ge.f32.partialorder %v333, 0.0
  %vm354 = vcmp.ge.f32.partialorder %v336, 0.0
  %vm355 = vcmp.ge.f32.partialorder %v338, 0.0
  %v356 = vmul.f32 %v301, 0.1
  %v357 = vmul.f32 %v303, 0.1
  %v358 = vmul.f32 %v306, 0.1
  %v359 = vmul.f32 %v308, 0.1
  %v360 = vmul.f32 %v311, 0.1
  %v361 = vmul.f32 %v313, 0.1
  %v362 = vmul.f32 %v316, 0.1
  %v363 = vmul.f32 %v318, 0.1
  %v364 = vmul.f32 %v321, 0.1
  %v365 = vmul.f32 %v323, 0.1
  %v366 = vmul.f32 %v326, 0.1
  %v367 = vmul.f32 %v328, 0.1
  %v368 = vmul.f32 %v331, 0.1
  %v369 = vmul.f32 %v333, 0.1
  %v370 = vmul.f32 %v336, 0.1
  %v371 = vmul.f32 %v338, 0.1
  %v372 = vsel %vm340, %v301, %v356
  %v373 = vsel %vm341, %v303, %v357
  %v374 = vsel %vm342, %v306, %v358
  %v375 = vsel %vm343, %v308, %v359
  %v376 = vsel %vm344, %v311, %v360
  %v377 = vsel %vm345, %v313, %v361
  %v378 = vsel %vm346, %v316, %v362
  %v379 = vsel %vm347, %v318, %v363
  %v380 = vsel %vm348, %v321, %v364
  %v381 = vsel %vm349, %v323, %v365
  %v382 = vsel %vm350, %v326, %v366
  %v383 = vsel %vm351, %v328, %v367
  %v384 = vsel %vm352, %v331, %v368
  %v385 = vsel %vm353, %v333, %v369
  %v386 = vsel %vm354, %v336, %v370
  %v387 = vsel %vm355, %v338, %v371
  %v388 = vpack.c.bf16 %v372, %v372
  %v389 = vpack.c.bf16 %v373, %v373
  %v390 = vpack.c.bf16 %v374, %v374
  %v391 = vpack.c.bf16 %v375, %v375
  %v392 = vpack.c.bf16 %v376, %v376
  %v393 = vpack.c.bf16 %v377, %v377
  %v394 = vpack.c.bf16 %v378, %v378
  %v395 = vpack.c.bf16 %v379, %v379
  %v396 = vpack.c.bf16 %v380, %v380
  %v397 = vpack.c.bf16 %v381, %v381
  %v398 = vpack.c.bf16 %v382, %v382
  %v399 = vpack.c.bf16 %v383, %v383
  %v400 = vpack.c.bf16 %v384, %v384
  %v401 = vpack.c.bf16 %v385, %v385
  %v402 = vpack.c.bf16 %v386, %v386
  %v403 = vpack.c.bf16 %v387, %v387
  %404 = vst [vmem:[%s3] sm:$0xf] %v388
  %405 = vst [vmem:[%s3 + $0x4] sm:$0xf] %v389
  %406 = vst [vmem:[%s3 + $0x8] sm:$0xf] %v390
  %407 = vst [vmem:[%s3 + $0xc] sm:$0xf] %v391
  %408 = vst [vmem:[%s3 + $0x10] sm:$0xf] %v392
  %409 = vst [vmem:[%s3 + $0x14] sm:$0xf] %v393
  %410 = vst [vmem:[%s3 + $0x18] sm:$0xf] %v394
  %411 = vst [vmem:[%s3 + $0x1c] sm:$0xf] %v395
  %412 = vst [vmem:[%s3 + $0x20] sm:$0xf] %v396
  %413 = vst [vmem:[%s3 + $0x24] sm:$0xf] %v397
  %414 = vst [vmem:[%s3 + $0x28] sm:$0xf] %v398
  %415 = vst [vmem:[%s3 + $0x2c] sm:$0xf] %v399
  %416 = vst [vmem:[%s3 + $0x30] sm:$0xf] %v400
  %417 = vst [vmem:[%s3 + $0x34] sm:$0xf] %v401
  %418 = vst [vmem:[%s3 + $0x38] sm:$0xf] %v402
  %419 = vst [vmem:[%s3 + $0x3c] sm:$0xf] %v403
  // Predicated region
  $region14: #{discriminator_forward.8} parent=0 // pred_check
    _
  $region15: #{discriminator_forward.8} parent=0 // pred_check_branch
    %421 = sbr.rel (0) target = $region17
  $region16: #{discriminator_forward.8} parent=0 // pred_region
    _
  $region17: #{discriminator_forward.8} parent=0 // pred_fallthru
    _
  // Predicated region
  $region18: #{discriminator_forward.8} parent=0 // pred_check
    _
  $region19: #{discriminator_forward.8} parent=0 // pred_check_branch
    %423 = sbr.rel (0) target = $region21
  $region20: #{discriminator_forward.8} parent=0 // pred_region
    _
  $region21: #{discriminator_forward.8} parent=0 // pred_fallthru
    _

// kernel: discriminator_forward.9
$region0: #{discriminator_forward.9}
  #allocation0 [shape = 'u32[]', space=smem, size = 0x4, offset = 0x4, fixed_abs, tag = 'smem constant byte address 0x4 - core index']
  #allocation1 [shape = 'u32[72,128]{1,0:T(1,128)}', space=vmem, size = 0x9000, scoped, tag = 'internal scratch']
  #allocation2 [shape = 'f32[1]{0:T(128)S(6)}', space=smem, size = 0x200, scoped, tag = 'scoped memory for discriminator_forward.9']
  %s0 = inlined_call_operand.vmem [shape: bf16[2,64,32], index: 0, kind: input, shape index: {}]
  %s1 = inlined_call_operand.vmem [shape: bf16[32,128], index: 1, kind: input, shape index: {}]
  %s2 = inlined_call_operand.vmem [shape: f32[1,128], index: 2, kind: input, shape index: {}]
  %s3 = inlined_call_operand.<no memory space> [shape: f32[1], index: 3, kind: input, shape index: {}]
  %s4 = inlined_call_operand.vmem [shape: bf16[2,64,32], index: 4, kind: output, shape index: {0}]
  %s5 = inlined_call_operand.hbm [shape: f32[2,64,64], index: 5, kind: output, shape index: {1}]
  %6 = xla_tuple %s4, %s5
  %s7 = sld [smem:[#allocation0]]
  $region57: #{discriminator_forward.9} parent=0
    _
  %s9 = ssub.s32 1, %s7
  %s10 = scalar_select 0, %s9, %s7
  %11 = sst [smem:[#allocation2]] %s3
  $region1: #{discriminator_forward.9} parent=0
    #allocation3 [shape = 'u8[65536]{0}', space=vmem, size = 0x10000, scoped, tag = 'output window, operand 1']
    #allocation4 [shape = 's32[2]{0}', space=sflag, size = 0x8, scoped, tag = 'scoped memory for discriminator_forward.9']
    %12 = vsyncpa [#allocation4], 0
    %s13 = scalar_lea.sflag [#allocation4], 1
    %14 = vsyncpa %s13, 0
    loop: start=0, step=1, limit=4
    $region2: #{discriminator_forward.9} parent=1 // loop_pre_header
      _
    $region3: #{discriminator_forward.9} parent=1 // loop_header
      %s16 = sphi 0, %s20
      %p17 = scmp.ge.s32.totalorder %s16, 4
      %s26 = sphi 0, %s28
      %s29 = sphi 0, %s26
      %s30 = sphi 0, %s29
      %s46 = sphi 0, %s30
      %s50 = sphi 0, %s50
      %s52 = sphi 0, %s50
      %s53 = sphi 0, %s52
      %s67 = sphi 0, %s53
      %s71 = sphi 0, %s71
      %s73 = sphi 0, %s71
      %s74 = sphi 0, %s73
      %s88 = sphi 0, %s74
      %s92 = sphi 0, %s92
      %s94 = sphi 0, %s92
      %s95 = sphi 0, %s94
      %s109 = sphi 0, %s95
      %s115 = sphi 0, %s117
      %s118 = sphi 0, %s115
      %s119 = sphi 0, %s118
      %s135 = sphi 0, %s119
      %s141 = sphi 0, %s143
      %s144 = sphi 0, %s141
      %s145 = sphi 0, %s144
      %s161 = sphi 0, %s145
    $region4: #{discriminator_forward.9} parent=1 // loop_header_branch
      %19 = sbr.rel (%p17) target = $region8
    $region5: #{discriminator_forward.9} parent=1 // loop_body
      %s21 = ssub.s32 %s16, 1
      %s22 = ssub.s32 %s16, 2
      %s23 = sadd.s32 %s16, 1
      %s24 = ssub.s32 %s16, %s23
      %p25 = scmp.eq.s32.totalorder %s24, 0
      %s27 = sadd.s32 %s26, 1
      %s28 = scalar_select %p25, %s26, %s27
      %p31 = pneg %p25
      %p32 = scmp.eq.s32.totalorder %s16, 1
      %p33 = por %p31, %p32
      %p34 = scmp.ne.s32.totalorder %s26, %s29
      %p35 = scmp.eq.s32.totalorder %s16, 0
      %p36 = por %p34, %p35
      %p37 = scmp.ne.s32.totalorder %s26, %s29
      %p38 = scmp.eq.s32.totalorder %s21, 1
      %p39 = por %p37, %p38
      %p40 = scmp.ne.s32.totalorder %s29, %s30
      %p41 = scmp.eq.s32.totalorder %s21, 0
      %p42 = por %p40, %p41
      %p43 = scmp.ne.s32.totalorder %s29, %s30
      %p44 = scmp.eq.s32.totalorder %s22, 1
      %p45 = por %p43, %p44
      %p47 = scmp.ne.s32.totalorder %s30, %s46
      %p48 = scmp.eq.s32.totalorder %s22, 0
      %p49 = por %p47, %p48
      %s51 = sadd.s32 %s50, 1
      %p54 = scmp.eq.s32.totalorder %s16, 1
      %p55 = scmp.ne.s32.totalorder %s50, %s52
      %p56 = scmp.eq.s32.totalorder %s16, 0
      %p57 = por %p55, %p56
      %p58 = scmp.ne.s32.totalorder %s50, %s52
      %p59 = scmp.eq.s32.totalorder %s21, 1
      %p60 = por %p58, %p59
      %p61 = scmp.ne.s32.totalorder %s52, %s53
      %p62 = scmp.eq.s32.totalorder %s21, 0
      %p63 = por %p61, %p62
      %p64 = scmp.ne.s32.totalorder %s52, %s53
      %p65 = scmp.eq.s32.totalorder %s22, 1
      %p66 = por %p64, %p65
      %p68 = scmp.ne.s32.totalorder %s53, %s67
      %p69 = scmp.eq.s32.totalorder %s22, 0
      %p70 = por %p68, %p69
      %s72 = sadd.s32 %s71, 1
      %p75 = scmp.eq.s32.totalorder %s16, 1
      %p76 = scmp.ne.s32.totalorder %s71, %s73
      %p77 = scmp.eq.s32.totalorder %s16, 0
      %p78 = por %p76, %p77
      %p79 = scmp.ne.s32.totalorder %s71, %s73
      %p80 = scmp.eq.s32.totalorder %s21, 1
      %p81 = por %p79, %p80
      %p82 = scmp.ne.s32.totalorder %s73, %s74
      %p83 = scmp.eq.s32.totalorder %s21, 0
      %p84 = por %p82, %p83
      %p85 = scmp.ne.s32.totalorder %s73, %s74
      %p86 = scmp.eq.s32.totalorder %s22, 1
      %p87 = por %p85, %p86
      %p89 = scmp.ne.s32.totalorder %s74, %s88
      %p90 = scmp.eq.s32.totalorder %s22, 0
      %p91 = por %p89, %p90
      %s93 = sadd.s32 %s92, 1
      %p96 = scmp.eq.s32.totalorder %s16, 1
      %p97 = scmp.ne.s32.totalorder %s92, %s94
      %p98 = scmp.eq.s32.totalorder %s16, 0
      %p99 = por %p97, %p98
      %p100 = scmp.ne.s32.totalorder %s92, %s94
      %p101 = scmp.eq.s32.totalorder %s21, 1
      %p102 = por %p100, %p101
      %p103 = scmp.ne.s32.totalorder %s94, %s95
      %p104 = scmp.eq.s32.totalorder %s21, 0
      %p105 = por %p103, %p104
      %p106 = scmp.ne.s32.totalorder %s94, %s95
      %p107 = scmp.eq.s32.totalorder %s22, 1
      %p108 = por %p106, %p107
      %p110 = scmp.ne.s32.totalorder %s95, %s109
      %p111 = scmp.eq.s32.totalorder %s22, 0
      %p112 = por %p110, %p111
      %s113 = ssub.s32 %s16, %s23
      %p114 = scmp.eq.s32.totalorder %s113, 0
      %s116 = sadd.s32 %s115, 1
      %s117 = scalar_select %p114, %s115, %s116
      %p120 = pneg %p114
      %p121 = scmp.eq.s32.totalorder %s16, 1
      %p122 = por %p120, %p121
      %p123 = scmp.ne.s32.totalorder %s115, %s118
      %p124 = scmp.eq.s32.totalorder %s16, 0
      %p125 = por %p123, %p124
      %p126 = scmp.ne.s32.totalorder %s115, %s118
      %p127 = scmp.eq.s32.totalorder %s21, 1
      %p128 = por %p126, %p127
      %p129 = scmp.ne.s32.totalorder %s118, %s119
      %p130 = scmp.eq.s32.totalorder %s21, 0
      %p131 = por %p129, %p130
      %p132 = scmp.ne.s32.totalorder %s118, %s119
      %p133 = scmp.eq.s32.totalorder %s22, 1
      %p134 = por %p132, %p133
      %p136 = scmp.ne.s32.totalorder %s119, %s135
      %p137 = scmp.eq.s32.totalorder %s22, 0
      %p138 = por %p136, %p137
      %s139 = ssub.s32 %s16, %s23
      %p140 = scmp.eq.s32.totalorder %s139, 0
      %s142 = sadd.s32 %s141, 1
      %s143 = scalar_select %p140, %s141, %s142
      %p146 = pneg %p140
      %p147 = scmp.eq.s32.totalorder %s16, 1
      %p148 = por %p146, %p147
      %p149 = scmp.ne.s32.totalorder %s141, %s144
      %p150 = scmp.eq.s32.totalorder %s16, 0
      %p151 = por %p149, %p150
      %p152 = scmp.ne.s32.totalorder %s141, %s144
      %p153 = scmp.eq.s32.totalorder %s21, 1
      %p154 = por %p152, %p153
      %p155 = scmp.ne.s32.totalorder %s144, %s145
      %p156 = scmp.eq.s32.totalorder %s21, 0
      %p157 = por %p155, %p156
      %p158 = scmp.ne.s32.totalorder %s144, %s145
      %p159 = scmp.eq.s32.totalorder %s22, 1
      %p160 = por %p158, %p159
      %p162 = scmp.ne.s32.totalorder %s145, %s161
      %p163 = scmp.eq.s32.totalorder %s22, 0
      %p164 = por %p162, %p163
      %p165 = scmp.le.s32.totalorder 1, %s16
      %p166 = scmp.lt.s32.totalorder %s16, 3
      %p167 = pnand %p165, %p166
      %p168 = pneg %p167
      // Predicated region
      $region9: #{discriminator_forward.9} parent=5 // pred_check
        _
      $region10: #{discriminator_forward.9} parent=5 // pred_check_branch
        %170 = sbr.rel (%p167) target = $region12
      $region11: #{discriminator_forward.9} parent=5 // pred_region
        %s171 = ssub.s32 %s16, 1
        // Predicated region
        $region13: #{discriminator_forward.9} parent=11 // pred_check
          %p172 = pneg %p63
        $region14: #{discriminator_forward.9} parent=11 // pred_check_branch
          %174 = sbr.rel (%p172) target = $region16
        $region15: #{discriminator_forward.9} parent=11 // pred_region
          _
        $region16: #{discriminator_forward.9} parent=11 // pred_fallthru
          _
        // Predicated region
        $region17: #{discriminator_forward.9} parent=11 // pred_check
          %p175 = pneg %p84
        $region18: #{discriminator_forward.9} parent=11 // pred_check_branch
          %177 = sbr.rel (%p175) target = $region20
        $region19: #{discriminator_forward.9} parent=11 // pred_region
          _
        $region20: #{discriminator_forward.9} parent=11 // pred_fallthru
          _
        // Predicated region
        $region21: #{discriminator_forward.9} parent=11 // pred_check
          %p178 = pneg %p105
        $region22: #{discriminator_forward.9} parent=11 // pred_check_branch
          %180 = sbr.rel (%p178) target = $region24
        $region23: #{discriminator_forward.9} parent=11 // pred_region
          _
        $region24: #{discriminator_forward.9} parent=11 // pred_fallthru
          _
      $region12: #{discriminator_forward.9} parent=5 // pred_fallthru
        _
      %p181 = scmp.lt.s32.totalorder %s16, 2
      // Predicated region
      $region25: #{discriminator_forward.9} parent=5 // pred_check
        %p182 = pneg %p181
      $region26: #{discriminator_forward.9} parent=5 // pred_check_branch
        %184 = sbr.rel (%p182) target = $region28
      $region27: #{discriminator_forward.9} parent=5 // pred_region
        // Predicated region
        $region29: #{discriminator_forward.9} parent=27 // pred_check
          %p185 = pneg %p36
        $region30: #{discriminator_forward.9} parent=27 // pred_check_branch
          %187 = sbr.rel (%p185) target = $region32
        $region31: #{discriminator_forward.9} parent=27 // pred_region
          %p188 = scmp.lt.s32.totalorder %s16, 1
          %s189 = scalar_select %p188, %s16, 1
          %s190 = smul.addr %s189, 8
          %s191 = smul.addr %s190, 4
          %s192 = scalar_lea.vmem %s0, %s191
        $region32: #{discriminator_forward.9} parent=27 // pred_fallthru
          _
      $region28: #{discriminator_forward.9} parent=5 // pred_fallthru
        _
      %p193 = scmp.le.s32.totalorder 1, %s16
      %p194 = scmp.lt.s32.totalorder %s16, 3
      %p195 = pnand %p193, %p194
      %p196 = pneg %p195
      // Predicated region
      $region33: #{discriminator_forward.9} parent=5 // pred_check
        _
      $region34: #{discriminator_forward.9} parent=5 // pred_check_branch
        %198 = sbr.rel (%p195) target = $region36
      $region35: #{discriminator_forward.9} parent=5 // pred_region
        %s199 = ssub.s32 %s16, 1
        %p200 = scmp.lt.s32.totalorder %s21, 1
        %s201 = scalar_select %p200, %s21, 1
        %s202 = smul.addr %s201, 8
        %s203 = smul.addr %s202, 4
        %s204 = scalar_lea.vmem %s0, %s203
        %p205 = pneg %p42
        %p206 = pneg %p39
        %p207 = pneg %p63
        %p208 = pneg %p60
        %p209 = pneg %p84
        %p210 = pneg %p81
        %p211 = pneg %p105
        %p212 = pneg %p102
        %p213 = pneg %p131
        %p214 = pneg %p128
        %p215 = scmp.lt.s32.totalorder %s21, 1
        %s216 = scalar_select %p215, %s21, 1
        %s217 = smul.addr %s216, 8
        %s218 = smul.addr %s217, 4
        %s219 = scalar_lea.vmem %s4, %s218
        %p220 = pneg %p157
        %p221 = pneg %p154
        %s222 = sand.u32 %s144, 1
        %s223 = scalar_lea.sflag [#allocation4], %s222
        %s224 = sand.u32 %s144, 1
        %s225 = smul.addr %s224, 64
        %s226 = scalar_lea.vmem [#allocation3], %s225
        %p227 = scmp.lt.s32.totalorder %s21, 1
        %s228 = scalar_select %p227, %s21, 1
        %s229 = smul.addr %s228, 8
        %s230 = smul.addr %s229, 4
        %s231 = scalar_lea.vmem %s0, %s230
        %p232 = scmp.lt.s32.totalorder %s21, 1
        %s233 = scalar_select %p232, %s21, 1
        %s234 = smul.addr %s233, 8
        %s235 = smul.addr %s234, 4
        %s236 = scalar_lea.vmem %s4, %s235
        %v238 = vld [vmem:[%s231] sm:$0xf]
        %v239 = vld [vmem:[%s231 + $0x4] sm:$0xf]
        %v240 = vld [vmem:[%s231 + $0x8] sm:$0xf]
        %v241 = vld [vmem:[%s231 + $0xc] sm:$0xf]
        %v242 = vld [vmem:[%s231 + $0x10] sm:$0xf]
        %v243 = vld [vmem:[%s231 + $0x14] sm:$0xf]
        %v244 = vld [vmem:[%s231 + $0x18] sm:$0xf]
        %v245 = vld [vmem:[%s231 + $0x1c] sm:$0xf]
        %v246 = vld [vmem:[%s1] sm:$0xf]
        %v247 = vld [vmem:[%s1 + $0x4] sm:$0xf]
        %v248 = vld [vmem:[%s1 + $0x8] sm:$0xf]
        %v249 = vld [vmem:[%s1 + $0xc] sm:$0xf]
        %v250 = vld [vmem:[%s2] sm:$0x1]
        %v252 = vperm.slane %v250, 0
        %v262 = vunpack.c.l.b16 %v238
        %v263 = vunpack.c.l.b16 %v239
        %v264 = vunpack.c.l.b16 %v240
        %v265 = vunpack.c.l.b16 %v241
        %v266 = vunpack.c.l.b16 %v242
        %v267 = vunpack.c.l.b16 %v243
        %v268 = vunpack.c.l.b16 %v244
        %v269 = vunpack.c.l.b16 %v245
        %v270 = vpack.c.b16 %v263, %v262
        %v271 = vpack.c.b16 %v265, %v264
        %v272 = vpack.c.b16 %v267, %v266
        %v273 = vpack.c.b16 %v269, %v268
        %v278 = vunpack.c.l.b16 %v246
        %v279 = vunpack.c.l.b16 %v247
        %v280 = vunpack.c.l.b16 %v248
        %v281 = vunpack.c.l.b16 %v249
        %v282 = vpack.c.b16 %v279, %v278
        %v283 = vpack.c.b16 %v281, %v280
        %vm286 = vcmask 261120
        %v288 = vsel %vm286, %v270, 0
        %v291 = vsel %vm286, %v271, 0
        %v294 = vsel %vm286, %v272, 0
        %v297 = vsel %vm286, %v273, 0
        %299 = vmatpush.bf16.msra.mxu0 0
        %300 = vmatpush.bf16.msra.mxu0 0
        %301 = vmatpush.bf16.msra.mxu0 0
        %302 = vmatpush.bf16.msra.mxu0 0
        %303 = vmatpush.bf16.msra.mxu0 0
        %304 = vmatpush.bf16.msra.mxu0 0
        %305 = vmatpush.bf16.msra.mxu0 %v283
        %306 = vmatpush.bf16.msra.mxu0 %v282
        %307 = vmatmul.bf16.gmra.mxu0 %v288
        %v308 = vpop.f32.mrf.mxu0
        %v309 = vadd.f32 %v252, %v308
        %v310 = vpop.f32.mrf.mxu0
        %v311 = vadd.f32 %v252, %v310
        %312 = vmatmul.bf16.gmra.mxu0 %v291
        %v313 = vpop.f32.mrf.mxu0
        %v314 = vadd.f32 %v252, %v313
        %v315 = vpop.f32.mrf.mxu0
        %v316 = vadd.f32 %v252, %v315
        %317 = vmatmul.bf16.gmra.mxu0 %v294
        %v318 = vpop.f32.mrf.mxu0
        %v319 = vadd.f32 %v252, %v318
        %v320 = vpop.f32.mrf.mxu0
        %v321 = vadd.f32 %v252, %v320
        %322 = vmatmul.bf16.gmra.mxu0 %v297
        %v323 = vpop.f32.mrf.mxu0
        %v324 = vadd.f32 %v252, %v323
        %v325 = vpop.f32.mrf.mxu0
        %v326 = vadd.f32 %v252, %v325
        %327 = vdwg.mxu0
        %v328 = vpack.c.bf16 %v311, %v309
        %v329 = vpack.c.bf16 %v316, %v314
        %v330 = vpack.c.bf16 %v321, %v319
        %v331 = vpack.c.bf16 %v326, %v324
        %336 = vrot.lane.b32.xlu0 %v328, 124
        %v337 = vpop.permute.xlu0 %336
        %338 = vrot.lane.b32.xlu0 %v329, 124
        %v339 = vpop.permute.xlu0 %338
        %340 = vrot.lane.b32.xlu0 %v330, 124
        %v341 = vpop.permute.xlu0 %340
        %342 = vrot.lane.b32.xlu0 %v331, 124
        %v343 = vpop.permute.xlu0 %342
        %vm344 = vcmask 31744
        %v346 = vsel %vm344, %v337, 0
        %v349 = vsel %vm344, %v339, 0
        %v352 = vsel %vm344, %v341, 0
        %v355 = vsel %vm344, %v343, 0
        %v358 = vsel %vm344, %v328, 0
        %v361 = vsel %vm344, %v329, 0
        %v364 = vsel %vm344, %v330, 0
        %v367 = vsel %vm344, %v331, 0
        %369 = vmatpush.bf16.xpose.msra.mxu0 0
        %370 = vmatpush.bf16.xpose.msra.mxu0 0
        %371 = vmatpush.bf16.xpose.msra.mxu0 0
        %372 = vmatpush.bf16.xpose.msra.mxu0 0
        %373 = vmatpush.bf16.xpose.msra.mxu0 %v367
        %374 = vmatpush.bf16.xpose.msra.mxu0 %v364
        %375 = vmatpush.bf16.xpose.msra.mxu0 %v361
        %376 = vmatpush.bf16.xpose.msra.mxu0 %v358
        %377 = vmatmul.bf16.gmra.mxu0 %v346
        %v378 = vpop.f32.mrf.mxu0
        %v379 = vadd.f32 0.0, %v378
        %v380 = vpop.f32.mrf.mxu0
        %v381 = vadd.f32 0.0, %v380
        %382 = vmatmul.bf16.gmra.mxu0 %v349
        %v383 = vpop.f32.mrf.mxu0
        %v384 = vadd.f32 0.0, %v383
        %v385 = vpop.f32.mrf.mxu0
        %v386 = vadd.f32 0.0, %v385
        %387 = vmatmul.bf16.gmra.mxu0 %v352
        %v388 = vpop.f32.mrf.mxu0
        %v389 = vadd.f32 0.0, %v388
        %v390 = vpop.f32.mrf.mxu0
        %v391 = vadd.f32 0.0, %v390
        %392 = vmatmul.bf16.gmra.mxu0 %v355
        %v393 = vpop.f32.mrf.mxu0
        %v394 = vadd.f32 0.0, %v393
        %v395 = vpop.f32.mrf.mxu0
        %v396 = vadd.f32 0.0, %v395
        %397 = vdwg.mxu0
        %vm398 = vcmask 523264
        %v399 = vsel %vm398, %v379, -inf
        %400 = vmax.xlane.f32.xlu0 %v399
        %v401 = vpop.xlane.xlu0 %400
        %v402 = vsel %vm398, %v381, -inf
        %403 = vmax.xlane.f32.xlu0 %v402
        %v404 = vpop.xlane.xlu0 %403
        %v405 = vsel %vm398, %v384, -inf
        %406 = vmax.xlane.f32.xlu0 %v405
        %v407 = vpop.xlane.xlu0 %406
        %v408 = vsel %vm398, %v386, -inf
        %409 = vmax.xlane.f32.xlu0 %v408
        %v410 = vpop.xlane.xlu0 %409
        %v411 = vsel %vm398, %v389, -inf
        %412 = vmax.xlane.f32.xlu0 %v411
        %v413 = vpop.xlane.xlu0 %412
        %v414 = vsel %vm398, %v391, -inf
        %415 = vmax.xlane.f32.xlu0 %v414
        %v416 = vpop.xlane.xlu0 %415
        %v417 = vsel %vm398, %v394, -inf
        %418 = vmax.xlane.f32.xlu0 %v417
        %v419 = vpop.xlane.xlu0 %418
        %v420 = vsel %vm398, %v396, -inf
        %421 = vmax.xlane.f32.xlu0 %v420
        %v422 = vpop.xlane.xlu0 %421
        %v423 = vsub.f32 %v379, %v401
        %v424 = vsub.f32 %v381, %v404
        %v425 = vsub.f32 %v384, %v407
        %v426 = vsub.f32 %v386, %v410
        %v427 = vsub.f32 %v389, %v413
        %v428 = vsub.f32 %v391, %v416
        %v429 = vsub.f32 %v394, %v419
        %v430 = vsub.f32 %v396, %v422
        %v431 = vmul.f32 %v423, 1.442695
        %v432 = vpow.pop %v431
        %v433 = vmul.f32 %v424, 1.442695
        %v434 = vpow.pop %v433
        %v435 = vmul.f32 %v425, 1.442695
        %v436 = vpow.pop %v435
        %v437 = vmul.f32 %v426, 1.442695
        %v438 = vpow.pop %v437
        %v439 = vmul.f32 %v427, 1.442695
        %v440 = vpow.pop %v439
        %v441 = vmul.f32 %v428, 1.442695
        %v442 = vpow.pop %v441
        %v443 = vmul.f32 %v429, 1.442695
        %v444 = vpow.pop %v443
        %v445 = vmul.f32 %v430, 1.442695
        %v446 = vpow.pop %v445
        %v447 = vsel %vm398, %v432, 0.0
        %448 = vadd.xlane.f32.xlu0 %v447
        %v449 = vpop.xlane.xlu0 %448
        %v450 = vsel %vm398, %v434, 0.0
        %451 = vadd.xlane.f32.xlu0 %v450
        %v452 = vpop.xlane.xlu0 %451
        %v453 = vsel %vm398, %v436, 0.0
        %454 = vadd.xlane.f32.xlu0 %v453
        %v455 = vpop.xlane.xlu0 %454
        %v456 = vsel %vm398, %v438, 0.0
        %457 = vadd.xlane.f32.xlu0 %v456
        %v458 = vpop.xlane.xlu0 %457
        %v459 = vsel %vm398, %v440, 0.0
        %460 = vadd.xlane.f32.xlu0 %v459
        %v461 = vpop.xlane.xlu0 %460
        %v462 = vsel %vm398, %v442, 0.0
        %463 = vadd.xlane.f32.xlu0 %v462
        %v464 = vpop.xlane.xlu0 %463
        %v465 = vsel %vm398, %v444, 0.0
        %466 = vadd.xlane.f32.xlu0 %v465
        %v467 = vpop.xlane.xlu0 %466
        %v468 = vsel %vm398, %v446, 0.0
        %469 = vadd.xlane.f32.xlu0 %v468
        %v470 = vpop.xlane.xlu0 %469
        %v471 = vrcp.pop %v449
        %v472 = vmul.f32 %v449, %v471
        %v473 = vsub.f32 1.0, %v472
        %v474 = vmul.f32 %v471, %v473
        %v475 = vadd.f32 %v471, %v474
        %vm476 = vweird.f32 %v449
        %vm477 = vweird.f32 %v471
        %vm478 = vmor %vm476, %vm477
        %v479 = vsel %vm478, %v471, %v475
        %v480 = vand.u32 2147483647, %v449
        %vm481 = vcmp.eq.f32.partialorder %v480, 8.507059e+37
        %v482 = vand.u32 %v449, 2147483648
        %v483 = vor.u32 1.1754944e-38, %v482
        %v484 = vsel %vm481, %v483, %v479
        %v485 = vmul.f32 %v432, %v484
        %v486 = vrcp.pop %v452
        %v487 = vmul.f32 %v452, %v486
        %v488 = vsub.f32 1.0, %v487
        %v489 = vmul.f32 %v486, %v488
        %v490 = vadd.f32 %v486, %v489
        %vm491 = vweird.f32 %v452
        %vm492 = vweird.f32 %v486
        %vm493 = vmor %vm491, %vm492
        %v494 = vsel %vm493, %v486, %v490
        %v495 = vand.u32 2147483647, %v452
        %vm496 = vcmp.eq.f32.partialorder %v495, 8.507059e+37
        %v497 = vand.u32 %v452, 2147483648
        %v498 = vor.u32 1.1754944e-38, %v497
        %v499 = vsel %vm496, %v498, %v494
        %v500 = vmul.f32 %v434, %v499
        %v501 = vrcp.pop %v455
        %v502 = vmul.f32 %v455, %v501
        %v503 = vsub.f32 1.0, %v502
        %v504 = vmul.f32 %v501, %v503
        %v505 = vadd.f32 %v501, %v504
        %vm506 = vweird.f32 %v455
        %vm507 = vweird.f32 %v501
        %vm508 = vmor %vm506, %vm507
        %v509 = vsel %vm508, %v501, %v505
        %v510 = vand.u32 2147483647, %v455
        %vm511 = vcmp.eq.f32.partialorder %v510, 8.507059e+37
        %v512 = vand.u32 %v455, 2147483648
        %v513 = vor.u32 1.1754944e-38, %v512
        %v514 = vsel %vm511, %v513, %v509
        %v515 = vmul.f32 %v436, %v514
        %v516 = vrcp.pop %v458
        %v517 = vmul.f32 %v458, %v516
        %v518 = vsub.f32 1.0, %v517
        %v519 = vmul.f32 %v516, %v518
        %v520 = vadd.f32 %v516, %v519
        %vm521 = vweird.f32 %v458
        %vm522 = vweird.f32 %v516
        %vm523 = vmor %vm521, %vm522
        %v524 = vsel %vm523, %v516, %v520
        %v525 = vand.u32 2147483647, %v458
        %vm526 = vcmp.eq.f32.partialorder %v525, 8.507059e+37
        %v527 = vand.u32 %v458, 2147483648
        %v528 = vor.u32 1.1754944e-38, %v527
        %v529 = vsel %vm526, %v528, %v524
        %v530 = vmul.f32 %v438, %v529
        %v531 = vrcp.pop %v461
        %v532 = vmul.f32 %v461, %v531
        %v533 = vsub.f32 1.0, %v532
        %v534 = vmul.f32 %v531, %v533
        %v535 = vadd.f32 %v531, %v534
        %vm536 = vweird.f32 %v461
        %vm537 = vweird.f32 %v531
        %vm538 = vmor %vm536, %vm537
        %v539 = vsel %vm538, %v531, %v535
        %v540 = vand.u32 2147483647, %v461
        %vm541 = vcmp.eq.f32.partialorder %v540, 8.507059e+37
        %v542 = vand.u32 %v461, 2147483648
        %v543 = vor.u32 1.1754944e-38, %v542
        %v544 = vsel %vm541, %v543, %v539
        %v545 = vmul.f32 %v440, %v544
        %v546 = vrcp.pop %v464
        %v547 = vmul.f32 %v464, %v546
        %v548 = vsub.f32 1.0, %v547
        %v549 = vmul.f32 %v546, %v548
        %v550 = vadd.f32 %v546, %v549
        %vm551 = vweird.f32 %v464
        %vm552 = vweird.f32 %v546
        %vm553 = vmor %vm551, %vm552
        %v554 = vsel %vm553, %v546, %v550
        %v555 = vand.u32 2147483647, %v464
        %vm556 = vcmp.eq.f32.partialorder %v555, 8.507059e+37
        %v557 = vand.u32 %v464, 2147483648
        %v558 = vor.u32 1.1754944e-38, %v557
        %v559 = vsel %vm556, %v558, %v554
        %v560 = vmul.f32 %v442, %v559
        %v561 = vrcp.pop %v467
        %v562 = vmul.f32 %v467, %v561
        %v563 = vsub.f32 1.0, %v562
        %v564 = vmul.f32 %v561, %v563
        %v565 = vadd.f32 %v561, %v564
        %vm566 = vweird.f32 %v467
        %vm567 = vweird.f32 %v561
        %vm568 = vmor %vm566, %vm567
        %v569 = vsel %vm568, %v561, %v565
        %v570 = vand.u32 2147483647, %v467
        %vm571 = vcmp.eq.f32.partialorder %v570, 8.507059e+37
        %v572 = vand.u32 %v467, 2147483648
        %v573 = vor.u32 1.1754944e-38, %v572
        %v574 = vsel %vm571, %v573, %v569
        %v575 = vmul.f32 %v444, %v574
        %v576 = vrcp.pop %v470
        %v577 = vmul.f32 %v470, %v576
        %v578 = vsub.f32 1.0, %v577
        %v579 = vmul.f32 %v576, %v578
        %v580 = vadd.f32 %v576, %v579
        %vm581 = vweird.f32 %v470
        %vm582 = vweird.f32 %v576
        %vm583 = vmor %vm581, %vm582
        %v584 = vsel %vm583, %v576, %v580
        %v585 = vand.u32 2147483647, %v470
        %vm586 = vcmp.eq.f32.partialorder %v585, 8.507059e+37
        %v587 = vand.u32 %v470, 2147483648
        %v588 = vor.u32 1.1754944e-38, %v587
        %v589 = vsel %vm586, %v588, %v584
        %v590 = vmul.f32 %v446, %v589
        %v591 = vpack.c.bf16 %v500, %v485
        %v592 = vpack.c.bf16 %v530, %v515
        %v593 = vpack.c.bf16 %v560, %v545
        %v594 = vpack.c.bf16 %v590, %v575
        %595 = vrot.lane.b32.xlu0 %v328, 120
        %v596 = vpop.permute.xlu0 %595
        %597 = vrot.lane.b32.xlu0 %v329, 120
        %v598 = vpop.permute.xlu0 %597
        %599 = vrot.lane.b32.xlu0 %v330, 120
        %v600 = vpop.permute.xlu0 %599
        %601 = vrot.lane.b32.xlu0 %v331, 120
        %v602 = vpop.permute.xlu0 %601
        %v608 = vsel %vm398, %v591, 0
        %v611 = vsel %vm398, %v592, 0
        %v614 = vsel %vm398, %v593, 0
        %v617 = vsel %vm398, %v594, 0
        %619 = vmatpush.bf16.msra.mxu0 0
        %620 = vmatpush.bf16.msra.mxu0 0
        %621 = vmatpush.bf16.msra.mxu0 0
        %622 = vmatpush.bf16.msra.mxu0 0
        %623 = vmatpush.bf16.msra.mxu0 %v602
        %624 = vmatpush.bf16.msra.mxu0 %v600
        %625 = vmatpush.bf16.msra.mxu0 %v598
        %626 = vmatpush.bf16.msra.mxu0 %v596
        %627 = vmatmul.bf16.gmra.mxu0 %v608
        %v628 = vpop.f32.mrf.mxu0
        %v629 = vadd.f32 0.0, %v628
        %v630 = vpop.f32.mrf.mxu0
        %v631 = vadd.f32 0.0, %v630
        %632 = vmatmul.bf16.gmra.mxu0 %v611
        %v633 = vpop.f32.mrf.mxu0
        %v634 = vadd.f32 0.0, %v633
        %v635 = vpop.f32.mrf.mxu0
        %v636 = vadd.f32 0.0, %v635
        %637 = vmatmul.bf16.gmra.mxu0 %v614
        %v638 = vpop.f32.mrf.mxu0
        %v639 = vadd.f32 0.0, %v638
        %v640 = vpop.f32.mrf.mxu0
        %v641 = vadd.f32 0.0, %v640
        %642 = vmatmul.bf16.gmra.mxu0 %v617
        %v643 = vpop.f32.mrf.mxu0
        %v644 = vadd.f32 0.0, %v643
        %v645 = vpop.f32.mrf.mxu0
        %v646 = vadd.f32 0.0, %v645
        %647 = vdwg.mxu0
        %s648 = sld [smem:[#allocation2]]
        %v649 = vunpack.c.l.bf16 %v238
        %v650 = vunpack.c.l.bf16 %v239
        %v651 = vunpack.c.l.bf16 %v240
        %v652 = vunpack.c.l.bf16 %v241
        %v653 = vunpack.c.l.bf16 %v242
        %v654 = vunpack.c.l.bf16 %v243
        %v655 = vunpack.c.l.bf16 %v244
        %v656 = vunpack.c.l.bf16 %v245
        %v657 = vstv %s648
        %v658 = vmul.f32 %v657, %v629
        %v659 = vmul.f32 %v657, %v631
        %v660 = vmul.f32 %v657, %v634
        %v661 = vmul.f32 %v657, %v636
        %v662 = vmul.f32 %v657, %v639
        %v663 = vmul.f32 %v657, %v641
        %v664 = vmul.f32 %v657, %v644
        %v665 = vmul.f32 %v657, %v646
        %v666 = vadd.f32 %v649, %v658
        %v667 = vadd.f32 %v650, %v659
        %v668 = vadd.f32 %v651, %v660
        %v669 = vadd.f32 %v652, %v661
        %v670 = vadd.f32 %v653, %v662
        %v671 = vadd.f32 %v654, %v663
        %v672 = vadd.f32 %v655, %v664
        %v673 = vadd.f32 %v656, %v665
        %v674 = vpack.c.bf16 %v666, %v666
        %v675 = vpack.c.bf16 %v667, %v667
        %v676 = vpack.c.bf16 %v668, %v668
        %v677 = vpack.c.bf16 %v669, %v669
        %v678 = vpack.c.bf16 %v670, %v670
        %v679 = vpack.c.bf16 %v671, %v671
        %v680 = vpack.c.bf16 %v672, %v672
        %v681 = vpack.c.bf16 %v673, %v673
        %vm682 = vcmask 257024
        %683 = vst.msk [vmem:[%s236] sm:$0xf] %vm682, %v674
        %684 = vst.msk [vmem:[%s236 + $0x4] sm:$0xf] %vm682, %v675
        %685 = vst.msk [vmem:[%s236 + $0x8] sm:$0xf] %vm682, %v676
        %686 = vst.msk [vmem:[%s236 + $0xc] sm:$0xf] %vm682, %v677
        %687 = vst.msk [vmem:[%s236 + $0x10] sm:$0xf] %vm682, %v678
        %688 = vst.msk [vmem:[%s236 + $0x14] sm:$0xf] %vm682, %v679
        %689 = vst.msk [vmem:[%s236 + $0x18] sm:$0xf] %vm682, %v680
        %690 = vst.msk [vmem:[%s236 + $0x1c] sm:$0xf] %vm682, %v681
        %691 = vst.msk [vmem:[%s226] sm:$0xff] %vm398, %v485
        %692 = vst.msk [vmem:[%s226 + $0x8] sm:$0xff] %vm398, %v500
        %693 = vst.msk [vmem:[%s226 + $0x10] sm:$0xff] %vm398, %v515
        %694 = vst.msk [vmem:[%s226 + $0x18] sm:$0xff] %vm398, %v530
        %695 = vst.msk [vmem:[%s226 + $0x20] sm:$0xff] %vm398, %v545
        %696 = vst.msk [vmem:[%s226 + $0x28] sm:$0xff] %vm398, %v560
        %697 = vst.msk [vmem:[%s226 + $0x30] sm:$0xff] %vm398, %v575
        %698 = vst.msk [vmem:[%s226 + $0x38] sm:$0xff] %vm398, %v590
        %p699 = scmp.lt.s32.totalorder %s21, 1
        %s700 = scalar_select %p699, %s21, 1
        %s701 = smul.addr %s700, 8
        %s702 = smul.addr %s701, 4
        %s703 = scalar_lea.vmem %s4, %s702
        %s704 = sand.u32 %s144, 1
        %s705 = scalar_lea.sflag [#allocation4], %s704
        %s706 = sand.u32 %s144, 1
        %s707 = smul.addr %s706, 64
        %s708 = scalar_lea.vmem [#allocation3], %s707
        // Predicated region
        $region37: #{discriminator_forward.9} parent=35 // pred_check
          %p709 = pneg %p128
        $region38: #{discriminator_forward.9} parent=35 // pred_check_branch
          %711 = sbr.rel (%p709) target = $region40
        $region39: #{discriminator_forward.9} parent=35 // pred_region
          _
        $region40: #{discriminator_forward.9} parent=35 // pred_fallthru
          _
        // Predicated region
        $region41: #{discriminator_forward.9} parent=35 // pred_check
          %p712 = pneg %p154
        $region42: #{discriminator_forward.9} parent=35 // pred_check_branch
          %714 = sbr.rel (%p712) target = $region44
        $region43: #{discriminator_forward.9} parent=35 // pred_region
          %716 = vsyncadd %s705, 0
          %s717 = smul.addr %s21, 8
          %s718 = smul.addr %s717, 8
          %s719 = scalar_lea.hbm %s5, %s718
          %s720 = sshll.u32 %s708, 4
          %s721 = int_to_ptr.vmem [resolvable:$true] %s720
          %s722 = sshll.u32 %s719, 4
          %s723 = int_to_ptr.hbm [resolvable:$true] %s722
          %728 = dma.vmem_to_hbm [thread:$0]  %s721, 1024, %s723, %s705, 128, 128, 8
        $region44: #{discriminator_forward.9} parent=35 // pred_fallthru
          _
      $region36: #{discriminator_forward.9} parent=5 // pred_fallthru
        _
      %p729 = scmp.le.s32.totalorder 2, %s16
      // Predicated region
      $region45: #{discriminator_forward.9} parent=5 // pred_check
        %p730 = pneg %p729
      $region46: #{discriminator_forward.9} parent=5 // pred_check_branch
        %732 = sbr.rel (%p730) target = $region48
      $region47: #{discriminator_forward.9} parent=5 // pred_region
        %s733 = ssub.s32 %s16, 2
        // Predicated region
        $region49: #{discriminator_forward.9} parent=47 // pred_check
          %p734 = pneg %p134
        $region50: #{discriminator_forward.9} parent=47 // pred_check_branch
          %736 = sbr.rel (%p734) target = $region52
        $region51: #{discriminator_forward.9} parent=47 // pred_region
          %p737 = scmp.lt.s32.totalorder %s22, 1
          %s738 = scalar_select %p737, %s22, 1
          %s739 = smul.addr %s738, 8
          %s740 = smul.addr %s739, 4
          %s741 = scalar_lea.vmem %s4, %s740
        $region52: #{discriminator_forward.9} parent=47 // pred_fallthru
          _
        // Predicated region
        $region53: #{discriminator_forward.9} parent=47 // pred_check
          %p742 = pneg %p160
        $region54: #{discriminator_forward.9} parent=47 // pred_check_branch
          %744 = sbr.rel (%p742) target = $region56
        $region55: #{discriminator_forward.9} parent=47 // pred_region
          %s745 = sand.u32 %s145, 1
          %s746 = scalar_lea.sflag [#allocation4], %s745
          %s747 = sand.u32 %s145, 1
          %s748 = smul.addr %s747, 64
          %s749 = scalar_lea.vmem [#allocation3], %s748
          %751 = dma.done %s746, 1024
        $region56: #{discriminator_forward.9} parent=47 // pred_fallthru
          _
      $region48: #{discriminator_forward.9} parent=5 // pred_fallthru
        _
    $region6: #{discriminator_forward.9} parent=1 // loop_footer
      %s20 = sadd.s32 1, %s16
    $region7: #{discriminator_forward.9} parent=1 // loop_footer_branch
      %15 = sbr.rel target = $region3
    $region8: #{discriminator_forward.9} parent=1 // loop_exit
      _
    %752 = vsyncpa [#allocation4], 1
    %s753 = scalar_lea.sflag [#allocation4], 1
    %754 = vsyncpa %s753, 1

// kernel: discriminator_forward.10
$region0: #{discriminator_forward.10}
  #allocation0 [shape = 'u32[]', space=smem, size = 0x4, offset = 0x4, fixed_abs, tag = 'smem constant byte address 0x4 - core index']
  #allocation1 [shape = 'u32[72,128]{1,0:T(1,128)}', space=vmem, size = 0x9000, scoped, tag = 'internal scratch']
  %s0 = inlined_call_operand.vmem [shape: bf16[32,512], index: 0, kind: input, shape index: {}]
  %s1 = inlined_call_operand.vmem [shape: bf16[512,128], index: 1, kind: input, shape index: {}]
  %s2 = inlined_call_operand.vmem [shape: f32[1,128], index: 2, kind: input, shape index: {}]
  %s3 = inlined_call_operand.vmem [shape: bf16[32,128], index: 3, kind: output, shape index: {}]
  %s4 = sld [smem:[#allocation0]]
  $region22: #{discriminator_forward.10} parent=0
    _
  %s6 = ssub.s32 1, %s4
  %s7 = scalar_select 0, %s6, %s4
  // Predicated region
  $region2: #{discriminator_forward.10} parent=0 // pred_check
    _
  $region3: #{discriminator_forward.10} parent=0 // pred_check_branch
    %9 = sbr.rel (0) target = $region5
  $region4: #{discriminator_forward.10} parent=0 // pred_region
    _
  $region5: #{discriminator_forward.10} parent=0 // pred_fallthru
    _
  // Predicated region
  $region6: #{discriminator_forward.10} parent=0 // pred_check
    _
  $region7: #{discriminator_forward.10} parent=0 // pred_check_branch
    %11 = sbr.rel (0) target = $region9
  $region8: #{discriminator_forward.10} parent=0 // pred_region
    _
  $region9: #{discriminator_forward.10} parent=0 // pred_fallthru
    _
  // Predicated region
  $region10: #{discriminator_forward.10} parent=0 // pred_check
    _
  $region11: #{discriminator_forward.10} parent=0 // pred_check_branch
    %13 = sbr.rel (0) target = $region13
  $region12: #{discriminator_forward.10} parent=0 // pred_region
    _
  $region13: #{discriminator_forward.10} parent=0 // pred_fallthru
    _
  %v14 = vld [vmem:[%s0] sm:$0xff]
  %v15 = vld [vmem:[%s0 + $0x8] sm:$0xff]
  %v16 = vld [vmem:[%s0 + $0x10] sm:$0xff]
  %v17 = vld [vmem:[%s0 + $0x18] sm:$0xff]
  %v18 = vld [vmem:[%s0 + $0x20] sm:$0xff]
  %v19 = vld [vmem:[%s0 + $0x28] sm:$0xff]
  %v20 = vld [vmem:[%s0 + $0x30] sm:$0xff]
  %v21 = vld [vmem:[%s0 + $0x38] sm:$0xff]
  %v22 = vld [vmem:[%s1] sm:$0xf]
  %v23 = vld [vmem:[%s1 + $0x4] sm:$0xf]
  %v24 = vld [vmem:[%s1 + $0x8] sm:$0xf]
  %v25 = vld [vmem:[%s1 + $0xc] sm:$0xf]
  %v26 = vld [vmem:[%s1 + $0x10] sm:$0xf]
  %v27 = vld [vmem:[%s1 + $0x14] sm:$0xf]
  %v28 = vld [vmem:[%s1 + $0x18] sm:$0xf]
  %v29 = vld [vmem:[%s1 + $0x1c] sm:$0xf]
  %v30 = vld [vmem:[%s1 + $0x20] sm:$0xf]
  %v31 = vld [vmem:[%s1 + $0x24] sm:$0xf]
  %v32 = vld [vmem:[%s1 + $0x28] sm:$0xf]
  %v33 = vld [vmem:[%s1 + $0x2c] sm:$0xf]
  %v34 = vld [vmem:[%s1 + $0x30] sm:$0xf]
  %v35 = vld [vmem:[%s1 + $0x34] sm:$0xf]
  %v36 = vld [vmem:[%s1 + $0x38] sm:$0xf]
  %v37 = vld [vmem:[%s1 + $0x3c] sm:$0xf]
  %v38 = vld [vmem:[%s1 + $0x40] sm:$0xf]
  %v39 = vld [vmem:[%s1 + $0x44] sm:$0xf]
  %v40 = vld [vmem:[%s1 + $0x48] sm:$0xf]
  %v41 = vld [vmem:[%s1 + $0x4c] sm:$0xf]
  %v42 = vld [vmem:[%s1 + $0x50] sm:$0xf]
  %v43 = vld [vmem:[%s1 + $0x54] sm:$0xf]
  %v44 = vld [vmem:[%s1 + $0x58] sm:$0xf]
  %v45 = vld [vmem:[%s1 + $0x5c] sm:$0xf]
  %v46 = vld [vmem:[%s1 + $0x60] sm:$0xf]
  %v47 = vld [vmem:[%s1 + $0x64] sm:$0xf]
  %v48 = vld [vmem:[%s1 + $0x68] sm:$0xf]
  %v49 = vld [vmem:[%s1 + $0x6c] sm:$0xf]
  %v50 = vld [vmem:[%s1 + $0x70] sm:$0xf]
  %v51 = vld [vmem:[%s1 + $0x74] sm:$0xf]
  %v52 = vld [vmem:[%s1 + $0x78] sm:$0xf]
  %v53 = vld [vmem:[%s1 + $0x7c] sm:$0xf]
  %v54 = vld [vmem:[%s1 + $0x80] sm:$0xf]
  %v55 = vld [vmem:[%s1 + $0x84] sm:$0xf]
  %v56 = vld [vmem:[%s1 + $0x88] sm:$0xf]
  %v57 = vld [vmem:[%s1 + $0x8c] sm:$0xf]
  %v58 = vld [vmem:[%s1 + $0x90] sm:$0xf]
  %v59 = vld [vmem:[%s1 + $0x94] sm:$0xf]
  %v60 = vld [vmem:[%s1 + $0x98] sm:$0xf]
  %v61 = vld [vmem:[%s1 + $0x9c] sm:$0xf]
  %v62 = vld [vmem:[%s1 + $0xa0] sm:$0xf]
  %v63 = vld [vmem:[%s1 + $0xa4] sm:$0xf]
  %v64 = vld [vmem:[%s1 + $0xa8] sm:$0xf]
  %v65 = vld [vmem:[%s1 + $0xac] sm:$0xf]
  %v66 = vld [vmem:[%s1 + $0xb0] sm:$0xf]
  %v67 = vld [vmem:[%s1 + $0xb4] sm:$0xf]
  %v68 = vld [vmem:[%s1 + $0xb8] sm:$0xf]
  %v69 = vld [vmem:[%s1 + $0xbc] sm:$0xf]
  %v70 = vld [vmem:[%s1 + $0xc0] sm:$0xf]
  %v71 = vld [vmem:[%s1 + $0xc4] sm:$0xf]
  %v72 = vld [vmem:[%s1 + $0xc8] sm:$0xf]
  %v73 = vld [vmem:[%s1 + $0xcc] sm:$0xf]
  %v74 = vld [vmem:[%s1 + $0xd0] sm:$0xf]
  %v75 = vld [vmem:[%s1 + $0xd4] sm:$0xf]
  %v76 = vld [vmem:[%s1 + $0xd8] sm:$0xf]
  %v77 = vld [vmem:[%s1 + $0xdc] sm:$0xf]
  %v78 = vld [vmem:[%s1 + $0xe0] sm:$0xf]
  %v79 = vld [vmem:[%s1 + $0xe4] sm:$0xf]
  %v80 = vld [vmem:[%s1 + $0xe8] sm:$0xf]
  %v81 = vld [vmem:[%s1 + $0xec] sm:$0xf]
  %v82 = vld [vmem:[%s1 + $0xf0] sm:$0xf]
  %v83 = vld [vmem:[%s1 + $0xf4] sm:$0xf]
  %v84 = vld [vmem:[%s1 + $0xf8] sm:$0xf]
  %v85 = vld [vmem:[%s1 + $0xfc] sm:$0xf]
  %v86 = vld [vmem:[%s2] sm:$0x1]
  %v88 = vperm.slane %v86, 0
  %v98 = vunpack.c.l.b16 %v14
  %v99 = vunpack.c.h.b16 %v14
  %v100 = vunpack.c.l.b16 %v15
  %v101 = vunpack.c.h.b16 %v15
  %v102 = vunpack.c.l.b16 %v16
  %v103 = vunpack.c.h.b16 %v16
  %v104 = vunpack.c.l.b16 %v17
  %v105 = vunpack.c.h.b16 %v17
  %v106 = vunpack.c.l.b16 %v18
  %v107 = vunpack.c.h.b16 %v18
  %v108 = vunpack.c.l.b16 %v19
  %v109 = vunpack.c.h.b16 %v19
  %v110 = vunpack.c.l.b16 %v20
  %v111 = vunpack.c.h.b16 %v20
  %v112 = vunpack.c.l.b16 %v21
  %v113 = vunpack.c.h.b16 %v21
  %v114 = vpack.c.b16 %v102, %v98
  %v115 = vpack.c.b16 %v103, %v99
  %v116 = vpack.c.b16 %v104, %v100
  %v117 = vpack.c.b16 %v105, %v101
  %v118 = vpack.c.b16 %v110, %v106
  %v119 = vpack.c.b16 %v111, %v107
  %v120 = vpack.c.b16 %v112, %v108
  %v121 = vpack.c.b16 %v113, %v109
  %v194 = vunpack.c.l.b16 %v22
  %v195 = vunpack.c.l.b16 %v23
  %v196 = vunpack.c.l.b16 %v24
  %v197 = vunpack.c.l.b16 %v25
  %v198 = vunpack.c.l.b16 %v26
  %v199 = vunpack.c.l.b16 %v27
  %v200 = vunpack.c.l.b16 %v28
  %v201 = vunpack.c.l.b16 %v29
  %v202 = vunpack.c.l.b16 %v30
  %v203 = vunpack.c.l.b16 %v31
  %v204 = vunpack.c.l.b16 %v32
  %v205 = vunpack.c.l.b16 %v33
  %v206 = vunpack.c.l.b16 %v34
  %v207 = vunpack.c.l.b16 %v35
  %v208 = vunpack.c.l.b16 %v36
  %v209 = vunpack.c.l.b16 %v37
  %v210 = vunpack.c.l.b16 %v38
  %v211 = vunpack.c.l.b16 %v39
  %v212 = vunpack.c.l.b16 %v40
  %v213 = vunpack.c.l.b16 %v41
  %v214 = vunpack.c.l.b16 %v42
  %v215 = vunpack.c.l.b16 %v43
  %v216 = vunpack.c.l.b16 %v44
  %v217 = vunpack.c.l.b16 %v45
  %v218 = vunpack.c.l.b16 %v46
  %v219 = vunpack.c.l.b16 %v47
  %v220 = vunpack.c.l.b16 %v48
  %v221 = vunpack.c.l.b16 %v49
  %v222 = vunpack.c.l.b16 %v50
  %v223 = vunpack.c.l.b16 %v51
  %v224 = vunpack.c.l.b16 %v52
  %v225 = vunpack.c.l.b16 %v53
  %v226 = vunpack.c.l.b16 %v54
  %v227 = vunpack.c.l.b16 %v55
  %v228 = vunpack.c.l.b16 %v56
  %v229 = vunpack.c.l.b16 %v57
  %v230 = vunpack.c.l.b16 %v58
  %v231 = vunpack.c.l.b16 %v59
  %v232 = vunpack.c.l.b16 %v60
  %v233 = vunpack.c.l.b16 %v61
  %v234 = vunpack.c.l.b16 %v62
  %v235 = vunpack.c.l.b16 %v63
  %v236 = vunpack.c.l.b16 %v64
  %v237 = vunpack.c.l.b16 %v65
  %v238 = vunpack.c.l.b16 %v66
  %v239 = vunpack.c.l.b16 %v67
  %v240 = vunpack.c.l.b16 %v68
  %v241 = vunpack.c.l.b16 %v69
  %v242 = vunpack.c.l.b16 %v70
  %v243 = vunpack.c.l.b16 %v71
  %v244 = vunpack.c.l.b16 %v72
  %v245 = vunpack.c.l.b16 %v73
  %v246 = vunpack.c.l.b16 %v74
  %v247 = vunpack.c.l.b16 %v75
  %v248 = vunpack.c.l.b16 %v76
  %v249 = vunpack.c.l.b16 %v77
  %v250 = vunpack.c.l.b16 %v78
  %v251 = vunpack.c.l.b16 %v79
  %v252 = vunpack.c.l.b16 %v80
  %v253 = vunpack.c.l.b16 %v81
  %v254 = vunpack.c.l.b16 %v82
  %v255 = vunpack.c.l.b16 %v83
  %v256 = vunpack.c.l.b16 %v84
  %v257 = vunpack.c.l.b16 %v85
  %v258 = vpack.c.b16 %v195, %v194
  %v259 = vpack.c.b16 %v197, %v196
  %v260 = vpack.c.b16 %v199, %v198
  %v261 = vpack.c.b16 %v201, %v200
  %v262 = vpack.c.b16 %v203, %v202
  %v263 = vpack.c.b16 %v205, %v204
  %v264 = vpack.c.b16 %v207, %v206
  %v265 = vpack.c.b16 %v209, %v208
  %v266 = vpack.c.b16 %v211, %v210
  %v267 = vpack.c.b16 %v213, %v212
  %v268 = vpack.c.b16 %v215, %v214
  %v269 = vpack.c.b16 %v217, %v216
  %v270 = vpack.c.b16 %v219, %v218
  %v271 = vpack.c.b16 %v221, %v220
  %v272 = vpack.c.b16 %v223, %v222
  %v273 = vpack.c.b16 %v225, %v224
  %v274 = vpack.c.b16 %v227, %v226
  %v275 = vpack.c.b16 %v229, %v228
  %v276 = vpack.c.b16 %v231, %v230
  %v277 = vpack.c.b16 %v233, %v232
  %v278 = vpack.c.b16 %v235, %v234
  %v279 = vpack.c.b16 %v237, %v236
  %v280 = vpack.c.b16 %v239, %v238
  %v281 = vpack.c.b16 %v241, %v240
  %v282 = vpack.c.b16 %v243, %v242
  %v283 = vpack.c.b16 %v245, %v244
  %v284 = vpack.c.b16 %v247, %v246
  %v285 = vpack.c.b16 %v249, %v248
  %v286 = vpack.c.b16 %v251, %v250
  %v287 = vpack.c.b16 %v253, %v252
  %v288 = vpack.c.b16 %v255, %v254
  %v289 = vpack.c.b16 %v257, %v256
  %322 = vmatpush.bf16.msra.mxu0 %v265
  %323 = vmatpush.bf16.msra.mxu0 %v264
  %324 = vmatpush.bf16.msra.mxu0 %v263
  %325 = vmatpush.bf16.msra.mxu0 %v262
  %326 = vmatpush.bf16.msra.mxu0 %v261
  %327 = vmatpush.bf16.msra.mxu0 %v260
  %328 = vmatpush.bf16.msra.mxu0 %v259
  %329 = vmatpush.bf16.msra.mxu0 %v258
  %330 = vmatmul.bf16.gmra.mxu0 %v114
  %v331 = vpop.f32.mrf.mxu0
  %v332 = vadd.f32 %v88, %v331
  %v333 = vpop.f32.mrf.mxu0
  %v334 = vadd.f32 %v88, %v333
  %335 = vmatmul.bf16.gmra.mxu0 %v118
  %v336 = vpop.f32.mrf.mxu0
  %v337 = vadd.f32 %v88, %v336
  %v338 = vpop.f32.mrf.mxu0
  %v339 = vadd.f32 %v88, %v338
  %340 = vdwg.mxu0
  %341 = vmatpush.bf16.msra.mxu0 %v273
  %342 = vmatpush.bf16.msra.mxu0 %v272
  %343 = vmatpush.bf16.msra.mxu0 %v271
  %344 = vmatpush.bf16.msra.mxu0 %v270
  %345 = vmatpush.bf16.msra.mxu0 %v269
  %346 = vmatpush.bf16.msra.mxu0 %v268
  %347 = vmatpush.bf16.msra.mxu0 %v267
  %348 = vmatpush.bf16.msra.mxu0 %v266
  %349 = vmatmul.bf16.gmra.mxu0 %v115
  %v350 = vpop.f32.mrf.mxu0
  %v351 = vadd.f32 %v332, %v350
  %v352 = vpop.f32.mrf.mxu0
  %v353 = vadd.f32 %v334, %v352
  %354 = vmatmul.bf16.gmra.mxu0 %v119
  %v355 = vpop.f32.mrf.mxu0
  %v356 = vadd.f32 %v337, %v355
  %v357 = vpop.f32.mrf.mxu0
  %v358 = vadd.f32 %v339, %v357
  %359 = vdwg.mxu0
  %360 = vmatpush.bf16.msra.mxu0 %v281
  %361 = vmatpush.bf16.msra.mxu0 %v280
  %362 = vmatpush.bf16.msra.mxu0 %v279
  %363 = vmatpush.bf16.msra.mxu0 %v278
  %364 = vmatpush.bf16.msra.mxu0 %v277
  %365 = vmatpush.bf16.msra.mxu0 %v276
  %366 = vmatpush.bf16.msra.mxu0 %v275
  %367 = vmatpush.bf16.msra.mxu0 %v274
  %368 = vmatmul.bf16.gmra.mxu0 %v116
  %v369 = vpop.f32.mrf.mxu0
  %v370 = vadd.f32 %v351, %v369
  %v371 = vpop.f32.mrf.mxu0
  %v372 = vadd.f32 %v353, %v371
  %373 = vmatmul.bf16.gmra.mxu0 %v120
  %v374 = vpop.f32.mrf.mxu0
  %v375 = vadd.f32 %v356, %v374
  %v376 = vpop.f32.mrf.mxu0
  %v377 = vadd.f32 %v358, %v376
  %378 = vdwg.mxu0
  %379 = vmatpush.bf16.msra.mxu0 %v289
  %380 = vmatpush.bf16.msra.mxu0 %v288
  %381 = vmatpush.bf16.msra.mxu0 %v287
  %382 = vmatpush.bf16.msra.mxu0 %v286
  %383 = vmatpush.bf16.msra.mxu0 %v285
  %384 = vmatpush.bf16.msra.mxu0 %v284
  %385 = vmatpush.bf16.msra.mxu0 %v283
  %386 = vmatpush.bf16.msra.mxu0 %v282
  %387 = vmatmul.bf16.gmra.mxu0 %v117
  %v388 = vpop.f32.mrf.mxu0
  %v389 = vadd.f32 %v370, %v388
  %v390 = vpop.f32.mrf.mxu0
  %v391 = vadd.f32 %v372, %v390
  %392 = vmatmul.bf16.gmra.mxu0 %v121
  %v393 = vpop.f32.mrf.mxu0
  %v394 = vadd.f32 %v375, %v393
  %v395 = vpop.f32.mrf.mxu0
  %v396 = vadd.f32 %v377, %v395
  %397 = vdwg.mxu0
  %vm398 = vcmp.ge.f32.partialorder %v389, 0.0
  %vm399 = vcmp.ge.f32.partialorder %v391, 0.0
  %vm400 = vcmp.ge.f32.partialorder %v394, 0.0
  %vm401 = vcmp.ge.f32.partialorder %v396, 0.0
  %v402 = vmul.f32 %v389, 0.1
  %v403 = vmul.f32 %v391, 0.1
  %v404 = vmul.f32 %v394, 0.1
  %v405 = vmul.f32 %v396, 0.1
  %v406 = vsel %vm398, %v389, %v402
  %v407 = vsel %vm399, %v391, %v403
  %v408 = vsel %vm400, %v394, %v404
  %v409 = vsel %vm401, %v396, %v405
  %v410 = vpack.c.bf16 %v406, %v406
  %v411 = vpack.c.bf16 %v407, %v407
  %v412 = vpack.c.bf16 %v408, %v408
  %v413 = vpack.c.bf16 %v409, %v409
  %414 = vst [vmem:[%s3] sm:$0xf] %v410
  %415 = vst [vmem:[%s3 + $0x4] sm:$0xf] %v411
  %416 = vst [vmem:[%s3 + $0x8] sm:$0xf] %v412
  %417 = vst [vmem:[%s3 + $0xc] sm:$0xf] %v413
  // Predicated region
  $region14: #{discriminator_forward.10} parent=0 // pred_check
    _
  $region15: #{discriminator_forward.10} parent=0 // pred_check_branch
    %419 = sbr.rel (0) target = $region17
  $region16: #{discriminator_forward.10} parent=0 // pred_region
    _
  $region17: #{discriminator_forward.10} parent=0 // pred_fallthru
    _
  // Predicated region
  $region18: #{discriminator_forward.10} parent=0 // pred_check
    _
  $region19: #{discriminator_forward.10} parent=0 // pred_check_branch
    %421 = sbr.rel (0) target = $region21
  $region20: #{discriminator_forward.10} parent=0 // pred_region
    _
  $region21: #{discriminator_forward.10} parent=0 // pred_fallthru
    _

// kernel: discriminator_forward.11
$region0: #{discriminator_forward.11}
  #allocation0 [shape = 'u32[]', space=smem, size = 0x4, offset = 0x4, fixed_abs, tag = 'smem constant byte address 0x4 - core index']
  #allocation1 [shape = 'u32[72,128]{1,0:T(1,128)}', space=vmem, size = 0x9000, scoped, tag = 'internal scratch']
  #allocation2 [shape = 'f32[1]{0:T(128)S(6)}', space=smem, size = 0x200, scoped, tag = 'scoped memory for discriminator_forward.11']
  %s0 = inlined_call_operand.vmem [shape: bf16[2,16,64], index: 0, kind: input, shape index: {}]
  %s1 = inlined_call_operand.vmem [shape: bf16[64,128], index: 1, kind: input, shape index: {}]
  %s2 = inlined_call_operand.vmem [shape: f32[1,128], index: 2, kind: input, shape index: {}]
  %s3 = inlined_call_operand.<no memory space> [shape: f32[1], index: 3, kind: input, shape index: {}]
  %s4 = inlined_call_operand.vmem [shape: bf16[2,16,64], index: 4, kind: output, shape index: {0}]
  %s5 = inlined_call_operand.hbm [shape: f32[2,16,16], index: 5, kind: output, shape index: {1}]
  %6 = xla_tuple %s4, %s5
  %s7 = sld [smem:[#allocation0]]
  $region57: #{discriminator_forward.11} parent=0
    _
  %s9 = ssub.s32 1, %s7
  %s10 = scalar_select 0, %s9, %s7
  %11 = sst [smem:[#allocation2]] %s3
  $region1: #{discriminator_forward.11} parent=0
    #allocation3 [shape = 'u8[16384]{0}', space=vmem, size = 0x4000, scoped, tag = 'output window, operand 1']
    #allocation4 [shape = 's32[2]{0}', space=sflag, size = 0x8, scoped, tag = 'scoped memory for discriminator_forward.11']
    %12 = vsyncpa [#allocation4], 0
    %s13 = scalar_lea.sflag [#allocation4], 1
    %14 = vsyncpa %s13, 0
    loop: start=0, step=1, limit=4
    $region2: #{discriminator_forward.11} parent=1 // loop_pre_header
      _
    $region3: #{discriminator_forward.11} parent=1 // loop_header
      %s16 = sphi 0, %s20
      %p17 = scmp.ge.s32.totalorder %s16, 4
      %s26 = sphi 0, %s28
      %s29 = sphi 0, %s26
      %s30 = sphi 0, %s29
      %s46 = sphi 0, %s30
      %s50 = sphi 0, %s50
      %s52 = sphi 0, %s50
      %s53 = sphi 0, %s52
      %s67 = sphi 0, %s53
      %s71 = sphi 0, %s71
      %s73 = sphi 0, %s71
      %s74 = sphi 0, %s73
      %s88 = sphi 0, %s74
      %s92 = sphi 0, %s92
      %s94 = sphi 0, %s92
      %s95 = sphi 0, %s94
      %s109 = sphi 0, %s95
      %s115 = sphi 0, %s117
      %s118 = sphi 0, %s115
      %s119 = sphi 0, %s118
      %s135 = sphi 0, %s119
      %s141 = sphi 0, %s143
      %s144 = sphi 0, %s141
      %s145 = sphi 0, %s144
      %s161 = sphi 0, %s145
    $region4: #{discriminator_forward.11} parent=1 // loop_header_branch
      %19 = sbr.rel (%p17) target = $region8
    $region5: #{discriminator_forward.11} parent=1 // loop_body
      %s21 = ssub.s32 %s16, 1
      %s22 = ssub.s32 %s16, 2
      %s23 = sadd.s32 %s16, 1
      %s24 = ssub.s32 %s16, %s23
      %p25 = scmp.eq.s32.totalorder %s24, 0
      %s27 = sadd.s32 %s26, 1
      %s28 = scalar_select %p25, %s26, %s27
      %p31 = pneg %p25
      %p32 = scmp.eq.s32.totalorder %s16, 1
      %p33 = por %p31, %p32
      %p34 = scmp.ne.s32.totalorder %s26, %s29
      %p35 = scmp.eq.s32.totalorder %s16, 0
      %p36 = por %p34, %p35
      %p37 = scmp.ne.s32.totalorder %s26, %s29
      %p38 = scmp.eq.s32.totalorder %s21, 1
      %p39 = por %p37, %p38
      %p40 = scmp.ne.s32.totalorder %s29, %s30
      %p41 = scmp.eq.s32.totalorder %s21, 0
      %p42 = por %p40, %p41
      %p43 = scmp.ne.s32.totalorder %s29, %s30
      %p44 = scmp.eq.s32.totalorder %s22, 1
      %p45 = por %p43, %p44
      %p47 = scmp.ne.s32.totalorder %s30, %s46
      %p48 = scmp.eq.s32.totalorder %s22, 0
      %p49 = por %p47, %p48
      %s51 = sadd.s32 %s50, 1
      %p54 = scmp.eq.s32.totalorder %s16, 1
      %p55 = scmp.ne.s32.totalorder %s50, %s52
      %p56 = scmp.eq.s32.totalorder %s16, 0
      %p57 = por %p55, %p56
      %p58 = scmp.ne.s32.totalorder %s50, %s52
      %p59 = scmp.eq.s32.totalorder %s21, 1
      %p60 = por %p58, %p59
      %p61 = scmp.ne.s32.totalorder %s52, %s53
      %p62 = scmp.eq.s32.totalorder %s21, 0
      %p63 = por %p61, %p62
      %p64 = scmp.ne.s32.totalorder %s52, %s53
      %p65 = scmp.eq.s32.totalorder %s22, 1
      %p66 = por %p64, %p65
      %p68 = scmp.ne.s32.totalorder %s53, %s67
      %p69 = scmp.eq.s32.totalorder %s22, 0
      %p70 = por %p68, %p69
      %s72 = sadd.s32 %s71, 1
      %p75 = scmp.eq.s32.totalorder %s16, 1
      %p76 = scmp.ne.s32.totalorder %s71, %s73
      %p77 = scmp.eq.s32.totalorder %s16, 0
      %p78 = por %p76, %p77
      %p79 = scmp.ne.s32.totalorder %s71, %s73
      %p80 = scmp.eq.s32.totalorder %s21, 1
      %p81 = por %p79, %p80
      %p82 = scmp.ne.s32.totalorder %s73, %s74
      %p83 = scmp.eq.s32.totalorder %s21, 0
      %p84 = por %p82, %p83
      %p85 = scmp.ne.s32.totalorder %s73, %s74
      %p86 = scmp.eq.s32.totalorder %s22, 1
      %p87 = por %p85, %p86
      %p89 = scmp.ne.s32.totalorder %s74, %s88
      %p90 = scmp.eq.s32.totalorder %s22, 0
      %p91 = por %p89, %p90
      %s93 = sadd.s32 %s92, 1
      %p96 = scmp.eq.s32.totalorder %s16, 1
      %p97 = scmp.ne.s32.totalorder %s92, %s94
      %p98 = scmp.eq.s32.totalorder %s16, 0
      %p99 = por %p97, %p98
      %p100 = scmp.ne.s32.totalorder %s92, %s94
      %p101 = scmp.eq.s32.totalorder %s21, 1
      %p102 = por %p100, %p101
      %p103 = scmp.ne.s32.totalorder %s94, %s95
      %p104 = scmp.eq.s32.totalorder %s21, 0
      %p105 = por %p103, %p104
      %p106 = scmp.ne.s32.totalorder %s94, %s95
      %p107 = scmp.eq.s32.totalorder %s22, 1
      %p108 = por %p106, %p107
      %p110 = scmp.ne.s32.totalorder %s95, %s109
      %p111 = scmp.eq.s32.totalorder %s22, 0
      %p112 = por %p110, %p111
      %s113 = ssub.s32 %s16, %s23
      %p114 = scmp.eq.s32.totalorder %s113, 0
      %s116 = sadd.s32 %s115, 1
      %s117 = scalar_select %p114, %s115, %s116
      %p120 = pneg %p114
      %p121 = scmp.eq.s32.totalorder %s16, 1
      %p122 = por %p120, %p121
      %p123 = scmp.ne.s32.totalorder %s115, %s118
      %p124 = scmp.eq.s32.totalorder %s16, 0
      %p125 = por %p123, %p124
      %p126 = scmp.ne.s32.totalorder %s115, %s118
      %p127 = scmp.eq.s32.totalorder %s21, 1
      %p128 = por %p126, %p127
      %p129 = scmp.ne.s32.totalorder %s118, %s119
      %p130 = scmp.eq.s32.totalorder %s21, 0
      %p131 = por %p129, %p130
      %p132 = scmp.ne.s32.totalorder %s118, %s119
      %p133 = scmp.eq.s32.totalorder %s22, 1
      %p134 = por %p132, %p133
      %p136 = scmp.ne.s32.totalorder %s119, %s135
      %p137 = scmp.eq.s32.totalorder %s22, 0
      %p138 = por %p136, %p137
      %s139 = ssub.s32 %s16, %s23
      %p140 = scmp.eq.s32.totalorder %s139, 0
      %s142 = sadd.s32 %s141, 1
      %s143 = scalar_select %p140, %s141, %s142
      %p146 = pneg %p140
      %p147 = scmp.eq.s32.totalorder %s16, 1
      %p148 = por %p146, %p147
      %p149 = scmp.ne.s32.totalorder %s141, %s144
      %p150 = scmp.eq.s32.totalorder %s16, 0
      %p151 = por %p149, %p150
      %p152 = scmp.ne.s32.totalorder %s141, %s144
      %p153 = scmp.eq.s32.totalorder %s21, 1
      %p154 = por %p152, %p153
      %p155 = scmp.ne.s32.totalorder %s144, %s145
      %p156 = scmp.eq.s32.totalorder %s21, 0
      %p157 = por %p155, %p156
      %p158 = scmp.ne.s32.totalorder %s144, %s145
      %p159 = scmp.eq.s32.totalorder %s22, 1
      %p160 = por %p158, %p159
      %p162 = scmp.ne.s32.totalorder %s145, %s161
      %p163 = scmp.eq.s32.totalorder %s22, 0
      %p164 = por %p162, %p163
      %p165 = scmp.le.s32.totalorder 1, %s16
      %p166 = scmp.lt.s32.totalorder %s16, 3
      %p167 = pnand %p165, %p166
      %p168 = pneg %p167
      // Predicated region
      $region9: #{discriminator_forward.11} parent=5 // pred_check
        _
      $region10: #{discriminator_forward.11} parent=5 // pred_check_branch
        %170 = sbr.rel (%p167) target = $region12
      $region11: #{discriminator_forward.11} parent=5 // pred_region
        %s171 = ssub.s32 %s16, 1
        // Predicated region
        $region13: #{discriminator_forward.11} parent=11 // pred_check
          %p172 = pneg %p63
        $region14: #{discriminator_forward.11} parent=11 // pred_check_branch
          %174 = sbr.rel (%p172) target = $region16
        $region15: #{discriminator_forward.11} parent=11 // pred_region
          _
        $region16: #{discriminator_forward.11} parent=11 // pred_fallthru
          _
        // Predicated region
        $region17: #{discriminator_forward.11} parent=11 // pred_check
          %p175 = pneg %p84
        $region18: #{discriminator_forward.11} parent=11 // pred_check_branch
          %177 = sbr.rel (%p175) target = $region20
        $region19: #{discriminator_forward.11} parent=11 // pred_region
          _
        $region20: #{discriminator_forward.11} parent=11 // pred_fallthru
          _
        // Predicated region
        $region21: #{discriminator_forward.11} parent=11 // pred_check
          %p178 = pneg %p105
        $region22: #{discriminator_forward.11} parent=11 // pred_check_branch
          %180 = sbr.rel (%p178) target = $region24
        $region23: #{discriminator_forward.11} parent=11 // pred_region
          _
        $region24: #{discriminator_forward.11} parent=11 // pred_fallthru
          _
      $region12: #{discriminator_forward.11} parent=5 // pred_fallthru
        _
      %p181 = scmp.lt.s32.totalorder %s16, 2
      // Predicated region
      $region25: #{discriminator_forward.11} parent=5 // pred_check
        %p182 = pneg %p181
      $region26: #{discriminator_forward.11} parent=5 // pred_check_branch
        %184 = sbr.rel (%p182) target = $region28
      $region27: #{discriminator_forward.11} parent=5 // pred_region
        // Predicated region
        $region29: #{discriminator_forward.11} parent=27 // pred_check
          %p185 = pneg %p36
        $region30: #{discriminator_forward.11} parent=27 // pred_check_branch
          %187 = sbr.rel (%p185) target = $region32
        $region31: #{discriminator_forward.11} parent=27 // pred_region
          %p188 = scmp.lt.s32.totalorder %s16, 1
          %s189 = scalar_select %p188, %s16, 1
          %s190 = smul.addr %s189, 2
          %s191 = smul.addr %s190, 4
          %s192 = scalar_lea.vmem %s0, %s191
        $region32: #{discriminator_forward.11} parent=27 // pred_fallthru
          _
      $region28: #{discriminator_forward.11} parent=5 // pred_fallthru
        _
      %p193 = scmp.le.s32.totalorder 1, %s16
      %p194 = scmp.lt.s32.totalorder %s16, 3
      %p195 = pnand %p193, %p194
      %p196 = pneg %p195
      // Predicated region
      $region33: #{discriminator_forward.11} parent=5 // pred_check
        _
      $region34: #{discriminator_forward.11} parent=5 // pred_check_branch
        %198 = sbr.rel (%p195) target = $region36
      $region35: #{discriminator_forward.11} parent=5 // pred_region
        %s199 = ssub.s32 %s16, 1
        %p200 = scmp.lt.s32.totalorder %s21, 1
        %s201 = scalar_select %p200, %s21, 1
        %s202 = smul.addr %s201, 2
        %s203 = smul.addr %s202, 4
        %s204 = scalar_lea.vmem %s0, %s203
        %p205 = pneg %p42
        %p206 = pneg %p39
        %p207 = pneg %p63
        %p208 = pneg %p60
        %p209 = pneg %p84
        %p210 = pneg %p81
        %p211 = pneg %p105
        %p212 = pneg %p102
        %p213 = pneg %p131
        %p214 = pneg %p128
        %p215 = scmp.lt.s32.totalorder %s21, 1
        %s216 = scalar_select %p215, %s21, 1
        %s217 = smul.addr %s216, 2
        %s218 = smul.addr %s217, 4
        %s219 = scalar_lea.vmem %s4, %s218
        %p220 = pneg %p157
        %p221 = pneg %p154
        %s222 = sand.u32 %s144, 1
        %s223 = scalar_lea.sflag [#allocation4], %s222
        %s224 = sand.u32 %s144, 1
        %s225 = smul.addr %s224, 16
        %s226 = scalar_lea.vmem [#allocation3], %s225
        %p227 = scmp.lt.s32.totalorder %s21, 1
        %s228 = scalar_select %p227, %s21, 1
        %s229 = smul.addr %s228, 2
        %s230 = smul.addr %s229, 4
        %s231 = scalar_lea.vmem %s0, %s230
        %p232 = scmp.lt.s32.totalorder %s21, 1
        %s233 = scalar_select %p232, %s21, 1
        %s234 = smul.addr %s233, 2
        %s235 = smul.addr %s234, 4
        %s236 = scalar_lea.vmem %s4, %s235
        %v238 = vld [vmem:[%s231] sm:$0xf]
        %v239 = vld [vmem:[%s231 + $0x4] sm:$0xf]
        %v240 = vld [vmem:[%s1] sm:$0xf]
        %v241 = vld [vmem:[%s1 + $0x4] sm:$0xf]
        %v242 = vld [vmem:[%s1 + $0x8] sm:$0xf]
        %v243 = vld [vmem:[%s1 + $0xc] sm:$0xf]
        %v244 = vld [vmem:[%s1 + $0x10] sm:$0xf]
        %v245 = vld [vmem:[%s1 + $0x14] sm:$0xf]
        %v246 = vld [vmem:[%s1 + $0x18] sm:$0xf]
        %v247 = vld [vmem:[%s1 + $0x1c] sm:$0xf]
        %v248 = vld [vmem:[%s2] sm:$0x1]
        %v250 = vperm.slane %v248, 0
        %v254 = vunpack.c.l.b16 %v238
        %v255 = vunpack.c.l.b16 %v239
        %v256 = vpack.c.b16 %v255, %v254
        %v265 = vunpack.c.l.b16 %v240
        %v266 = vunpack.c.l.b16 %v241
        %v267 = vunpack.c.l.b16 %v242
        %v268 = vunpack.c.l.b16 %v243
        %v269 = vunpack.c.l.b16 %v244
        %v270 = vunpack.c.l.b16 %v245
        %v271 = vunpack.c.l.b16 %v246
        %v272 = vunpack.c.l.b16 %v247
        %v273 = vpack.c.b16 %v266, %v265
        %v274 = vpack.c.b16 %v268, %v267
        %v275 = vpack.c.b16 %v270, %v269
        %v276 = vpack.c.b16 %v272, %v271
        %vm281 = vcmask 523264
        %v283 = vsel %vm281, %v256, 0
        %285 = vmatpush.bf16.msra.mxu0 0
        %286 = vmatpush.bf16.msra.mxu0 0
        %287 = vmatpush.bf16.msra.mxu0 0
        %288 = vmatpush.bf16.msra.mxu0 0
        %289 = vmatpush.bf16.msra.mxu0 %v276
        %290 = vmatpush.bf16.msra.mxu0 %v275
        %291 = vmatpush.bf16.msra.mxu0 %v274
        %292 = vmatpush.bf16.msra.mxu0 %v273
        %293 = vmatmul.bf16.gmra.mxu0 %v283
        %v294 = vpop.f32.mrf.mxu0
        %v295 = vadd.f32 %v250, %v294
        %v296 = vpop.f32.mrf.mxu0
        %v297 = vadd.f32 %v250, %v296
        %298 = vdwg.mxu0
        %v299 = vpack.c.bf16 %v297, %v295
        %301 = vrot.lane.b32.xlu0 %v299, 120
        %v302 = vpop.permute.xlu0 %301
        %vm303 = vcmask 64512
        %v305 = vsel %vm303, %v302, 0
        %v308 = vsel %vm303, %v299, 0
        %310 = vmatpush.bf16.xpose.msra.mxu0 0
        %311 = vmatpush.bf16.xpose.msra.mxu0 0
        %312 = vmatpush.bf16.xpose.msra.mxu0 0
        %313 = vmatpush.bf16.xpose.msra.mxu0 0
        %314 = vmatpush.bf16.xpose.msra.mxu0 0
        %315 = vmatpush.bf16.xpose.msra.mxu0 0
        %316 = vmatpush.bf16.xpose.msra.mxu0 0
        %317 = vmatpush.bf16.xpose.msra.mxu0 %v308
        %318 = vmatmul.bf16.gmra.mxu0 %v305
        %v319 = vpop.f32.mrf.mxu0
        %v320 = vadd.f32 0.0, %v319
        %v321 = vpop.f32.mrf.mxu0
        %v322 = vadd.f32 0.0, %v321
        %323 = vdwg.mxu0
        %vm324 = vcmask 130048
        %v325 = vsel %vm324, %v320, -inf
        %326 = vmax.xlane.f32.xlu0 %v325
        %v327 = vpop.xlane.xlu0 %326
        %v328 = vsel %vm324, %v322, -inf
        %329 = vmax.xlane.f32.xlu0 %v328
        %v330 = vpop.xlane.xlu0 %329
        %v331 = vsub.f32 %v320, %v327
        %v332 = vsub.f32 %v322, %v330
        %v333 = vmul.f32 %v331, 1.442695
        %v334 = vpow.pop %v333
        %v335 = vmul.f32 %v332, 1.442695
        %v336 = vpow.pop %v335
        %v337 = vsel %vm324, %v334, 0.0
        %338 = vadd.xlane.f32.xlu0 %v337
        %v339 = vpop.xlane.xlu0 %338
        %v340 = vsel %vm324, %v336, 0.0
        %341 = vadd.xlane.f32.xlu0 %v340
        %v342 = vpop.xlane.xlu0 %341
        %v343 = vrcp.pop %v339
        %v344 = vmul.f32 %v339, %v343
        %v345 = vsub.f32 1.0, %v344
        %v346 = vmul.f32 %v343, %v345
        %v347 = vadd.f32 %v343, %v346
        %vm348 = vweird.f32 %v339
        %vm349 = vweird.f32 %v343
        %vm350 = vmor %vm348, %vm349
        %v351 = vsel %vm350, %v343, %v347
        %v352 = vand.u32 2147483647, %v339
        %vm353 = vcmp.eq.f32.partialorder %v352, 8.507059e+37
        %v354 = vand.u32 %v339, 2147483648
        %v355 = vor.u32 1.1754944e-38, %v354
        %v356 = vsel %vm353, %v355, %v351
        %v357 = vmul.f32 %v334, %v356
        %v358 = vrcp.pop %v342
        %v359 = vmul.f32 %v342, %v358
        %v360 = vsub.f32 1.0, %v359
        %v361 = vmul.f32 %v358, %v360
        %v362 = vadd.f32 %v358, %v361
        %vm363 = vweird.f32 %v342
        %vm364 = vweird.f32 %v358
        %vm365 = vmor %vm363, %vm364
        %v366 = vsel %vm365, %v358, %v362
        %v367 = vand.u32 2147483647, %v342
        %vm368 = vcmp.eq.f32.partialorder %v367, 8.507059e+37
        %v369 = vand.u32 %v342, 2147483648
        %v370 = vor.u32 1.1754944e-38, %v369
        %v371 = vsel %vm368, %v370, %v366
        %v372 = vmul.f32 %v336, %v371
        %v373 = vpack.c.bf16 %v372, %v357
        %374 = vrot.lane.b32.xlu0 %v299, 112
        %v375 = vpop.permute.xlu0 %374
        %v378 = vsel %vm324, %v373, 0
        %380 = vmatpush.bf16.msra.mxu0 0
        %381 = vmatpush.bf16.msra.mxu0 0
        %382 = vmatpush.bf16.msra.mxu0 0
        %383 = vmatpush.bf16.msra.mxu0 0
        %384 = vmatpush.bf16.msra.mxu0 0
        %385 = vmatpush.bf16.msra.mxu0 0
        %386 = vmatpush.bf16.msra.mxu0 0
        %387 = vmatpush.bf16.msra.mxu0 %v375
        %388 = vmatmul.bf16.gmra.mxu0 %v378
        %v389 = vpop.f32.mrf.mxu0
        %v390 = vadd.f32 0.0, %v389
        %v391 = vpop.f32.mrf.mxu0
        %v392 = vadd.f32 0.0, %v391
        %393 = vdwg.mxu0
        %s394 = sld [smem:[#allocation2]]
        %v395 = vunpack.c.l.bf16 %v238
        %v396 = vunpack.c.l.bf16 %v239
        %v397 = vstv %s394
        %v398 = vmul.f32 %v397, %v390
        %v399 = vmul.f32 %v397, %v392
        %v400 = vadd.f32 %v395, %v398
        %v401 = vadd.f32 %v396, %v399
        %v402 = vpack.c.bf16 %v400, %v400
        %v403 = vpack.c.bf16 %v401, %v401
        %vm404 = vcmask 519168
        %405 = vst.msk [vmem:[%s236] sm:$0xf] %vm404, %v402
        %406 = vst.msk [vmem:[%s236 + $0x4] sm:$0xf] %vm404, %v403
        %407 = vst.msk [vmem:[%s226] sm:$0xff] %vm324, %v357
        %408 = vst.msk [vmem:[%s226 + $0x8] sm:$0xff] %vm324, %v372
        %p409 = scmp.lt.s32.totalorder %s21, 1
        %s410 = scalar_select %p409, %s21, 1
        %s411 = smul.addr %s410, 2
        %s412 = smul.addr %s411, 4
        %s413 = scalar_lea.vmem %s4, %s412
        %s414 = sand.u32 %s144, 1
        %s415 = scalar_lea.sflag [#allocation4], %s414
        %s416 = sand.u32 %s144, 1
        %s417 = smul.addr %s416, 16
        %s418 = scalar_lea.vmem [#allocation3], %s417
        // Predicated region
        $region37: #{discriminator_forward.11} parent=35 // pred_check
          %p419 = pneg %p128
        $region38: #{discriminator_forward.11} parent=35 // pred_check_branch
          %421 = sbr.rel (%p419) target = $region40
        $region39: #{discriminator_forward.11} parent=35 // pred_region
          _
        $region40: #{discriminator_forward.11} parent=35 // pred_fallthru
          _
        // Predicated region
        $region41: #{discriminator_forward.11} parent=35 // pred_check
          %p422 = pneg %p154
        $region42: #{discriminator_forward.11} parent=35 // pred_check_branch
          %424 = sbr.rel (%p422) target = $region44
        $region43: #{discriminator_forward.11} parent=35 // pred_region
          %426 = vsyncadd %s415, 0
          %s427 = smul.addr %s21, 2
          %s428 = smul.addr %s427, 8
          %s429 = scalar_lea.hbm %s5, %s428
          %s430 = sshll.u32 %s418, 4
          %s431 = int_to_ptr.vmem [resolvable:$true] %s430
          %s432 = sshll.u32 %s429, 4
          %s433 = int_to_ptr.hbm [resolvable:$true] %s432
          %438 = dma.vmem_to_hbm [thread:$0]  %s431, 256, %s433, %s415, 128, 128, 8
        $region44: #{discriminator_forward.11} parent=35 // pred_fallthru
          _
      $region36: #{discriminator_forward.11} parent=5 // pred_fallthru
        _
      %p439 = scmp.le.s32.totalorder 2, %s16
      // Predicated region
      $region45: #{discriminator_forward.11} parent=5 // pred_check
        %p440 = pneg %p439
      $region46: #{discriminator_forward.11} parent=5 // pred_check_branch
        %442 = sbr.rel (%p440) target = $region48
      $region47: #{discriminator_forward.11} parent=5 // pred_region
        %s443 = ssub.s32 %s16, 2
        // Predicated region
        $region49: #{discriminator_forward.11} parent=47 // pred_check
          %p444 = pneg %p134
        $region50: #{discriminator_forward.11} parent=47 // pred_check_branch
          %446 = sbr.rel (%p444) target = $region52
        $region51: #{discriminator_forward.11} parent=47 // pred_region
          %p447 = scmp.lt.s32.totalorder %s22, 1
          %s448 = scalar_select %p447, %s22, 1
          %s449 = smul.addr %s448, 2
          %s450 = smul.addr %s449, 4
          %s451 = scalar_lea.vmem %s4, %s450
        $region52: #{discriminator_forward.11} parent=47 // pred_fallthru
          _
        // Predicated region
        $region53: #{discriminator_forward.11} parent=47 // pred_check
          %p452 = pneg %p160
        $region54: #{discriminator_forward.11} parent=47 // pred_check_branch
          %454 = sbr.rel (%p452) target = $region56
        $region55: #{discriminator_forward.11} parent=47 // pred_region
          %s455 = sand.u32 %s145, 1
          %s456 = scalar_lea.sflag [#allocation4], %s455
          %s457 = sand.u32 %s145, 1
          %s458 = smul.addr %s457, 16
          %s459 = scalar_lea.vmem [#allocation3], %s458
          %461 = dma.done %s456, 256
        $region56: #{discriminator_forward.11} parent=47 // pred_fallthru
          _
      $region48: #{discriminator_forward.11} parent=5 // pred_fallthru
        _
    $region6: #{discriminator_forward.11} parent=1 // loop_footer
      %s20 = sadd.s32 1, %s16
    $region7: #{discriminator_forward.11} parent=1 // loop_footer_branch
      %15 = sbr.rel target = $region3
    $region8: #{discriminator_forward.11} parent=1 // loop_exit
      _
    %462 = vsyncpa [#allocation4], 1
    %s463 = scalar_lea.sflag [#allocation4], 1
    %464 = vsyncpa %s463, 1

</llo_original>
